<compile_context>
chip_gen: v7x
topology: tpu7x:2x2x1
jax: 0.10.0
libtpu: 0.0.40
codegen_flags: <defaults>
</compile_context>

<pallas_src>
import numpy as np

import jax
import jax.numpy as jnp
from jax.experimental import pallas as pl
from jax.experimental.pallas import tpu as pltpu

# ----------------- small synthetic config (scaled-down vit_b_32) -----------------
B = 2
C_IN = 3
IMG = 32
PATCH = 8                                        # vit.patch_size (32 in vit_b_32)
N_PATCH_SIDE = IMG // PATCH
N_PATCHES = N_PATCH_SIDE * N_PATCH_SIDE          # 16
SEQ_LEN = N_PATCHES + 1                          # 17 (= vit.seq_length, incl. class token)
D_ENC = 64                                       # vit.hidden_dim (768 in vit_b_32)
ENC_LAYERS = 2                                   # (12 in vit_b_32)
ENC_HEADS = 4                                    # (12 in vit_b_32)
ENC_MLP = 4 * D_ENC
D_DEC = 32                                       # decoder_dim (512 in MAE)
DEC_LAYERS = 1
DEC_HEADS = 4                                    # (16 in MAE)
DEC_MLP = 4 * D_DEC
OUT_DIM = PATCH * PATCH * 3                      # patch_size**2 * 3 = 192
MASK_RATIO = 0.75
NUM_KEEP = int(SEQ_LEN * (1.0 - MASK_RATIO))     # 4 (same formula as lightly)
NUM_MASK = SEQ_LEN - NUM_KEEP                    # 13
CPP = C_IN * PATCH * PATCH                       # flattened patch size (Conv2d order) = 192
LN_EPS = 1e-6                                    # torchvision ViT LayerNorm eps

# hardware-tile padding (rows -> multiples of 8, output lanes -> multiples of 128)
KEEP_PAD = 8                                     # NUM_KEEP padded to sublane multiple
SEQ_PAD = ((SEQ_LEN + 7) // 8) * 8               # 24
D_DEC_PAD = 128                                  # encoder-output lanes (32 -> 128)
OUT_PAD = 256                                    # prediction-head lanes (192 -> 256)


# ----------------------------- in-kernel helpers ---------------------------------
def _layernorm(x, w, b):
    mu = jnp.mean(x, axis=-1, keepdims=True)
    var = jnp.mean(jnp.square(x - mu), axis=-1, keepdims=True)
    return (x - mu) * jax.lax.rsqrt(var + LN_EPS) * w + b


def _gelu(x):
    # TODO(synk): torch nn.GELU default is the exact erf-based GELU; the tanh
    # approximation is used here for guaranteed Mosaic lowering.
    c = 0.7978845608028654  # sqrt(2/pi)
    return 0.5 * x * (1.0 + jnp.tanh(c * (x + 0.044715 * x * x * x)))


def _mm(a, w):
    # bf16 operands, f32 MXU accumulation (weights are stored in bf16).
    return jnp.dot(a.astype(w.dtype), w, preferred_element_type=jnp.float32)


def _tblock(x, head_mask, key_bias,
            ln1w, ln1b, wqkv, bqkv, wproj, bproj, ln2w, ln2b, w1, b1, w2, b2,
            *, num_heads):
    """One pre-LN transformer encoder block (torchvision EncoderBlock) on one
    batch element.  x: (s_pad, d).  Heads are folded into the ROW dimension of
    the score / PV matmuls via a constant block-diagonal `head_mask`
    (shape (num_heads*s_pad, d)); `key_bias` ((num_heads*s_pad, s_pad)) adds
    -1e9 on padded key positions."""
    s_pad, d = x.shape
    dh = d // num_heads
    scale = 1.0 / float(dh) ** 0.5

    # --- multi-head self attention ---
    h = _layernorm(x, ln1w, ln1b)
    qkv = _mm(h, wqkv) + bqkv                              # (s_pad, 3d), f32
    q = qkv[:, 0:d] * scale
    k = qkv[:, d:2 * d]
    v = qkv[:, 2 * d:3 * d]

    # Replicate q per head along rows (8-row-aligned concat) and zero out
    # other heads' columns: one aligned (H*s_pad, d) x (d, s_pad) matmul then
    # yields every per-head score block stacked along rows, seq on lanes.
    q_big = jnp.concatenate([q] * num_heads, axis=0) * head_mask
    scores = jax.lax.dot_general(
        q_big.astype(jnp.bfloat16), k.astype(jnp.bfloat16),
        (((1,), (1,)), ((), ())), preferred_element_type=jnp.float32)
    scores = scores + key_bias                             # mask padded keys
    scores = scores - jnp.max(scores, axis=-1, keepdims=True)
    p = jnp.exp(scores)
    p = p * pl.reciprocal(jnp.sum(p, axis=-1, keepdims=True), approx=True)

    o_big = jnp.dot(p.astype(jnp.bfloat16), v.astype(jnp.bfloat16),
                    preferred_element_type=jnp.float32)    # (H*s_pad, d)
    o_big = o_big * head_mask                              # keep own head's columns
    attn = o_big[0:s_pad]
    for hh in range(1, num_heads):                         # 8-row-aligned slices
        attn = attn + o_big[hh * s_pad:(hh + 1) * s_pad]   # merge heads back to (s_pad, d)

    x = x + _mm(attn, wproj) + bproj

    # --- MLP block ---
    y = _layernorm(x, ln2w, ln2b)
    y = _gelu(_mm(y, w1) + b1)
    y = _mm(y, w2) + b2
    return x + y


# -------------------------------- Pallas kernels ---------------------------------
def _enc_kernel(ptok, add, hmask, kbias, convw,
                ln1w, ln1b, wqkv, bqkv, wproj, bproj, ln2w, ln2b, w1, b1, w2, b2,
                lnfw, lnfb, dw, db, o_ref):
    """Fused MAE encoder for ONE batch element (grid axis = batch, 'parallel').
    Patch-embed (Conv2d-as-matmul) + [cls/pos/bias pre-folded additive buffer]
    + all encoder blocks (statically unrolled) + final LayerNorm + decoder-embed
    linear (output lane-padded to 128)."""
    x = jnp.dot(ptok[0].astype(jnp.bfloat16), convw[...],
                preferred_element_type=jnp.float32) + add[0]
    hm = hmask[...]
    kb = kbias[...]
    for l in range(ENC_LAYERS):
        x = _tblock(x, hm, kb,
                    ln1w[l], ln1b[l], wqkv[l], bqkv[l], wproj[l], bproj[l],
                    ln2w[l], ln2b[l], w1[l], b1[l], w2[l], b2[l],
                    num_heads=ENC_HEADS)
    h = _layernorm(x, lnfw[...], lnfb[...])                # encoder final LN
    o_ref[0] = jnp.dot(h.astype(jnp.bfloat16), dw[...],
                       preferred_element_type=jnp.float32) + db[...]   # decoder.embed


def _dec_kernel(y0, hmask, kbias,
                ln1w, ln1b, wqkv, bqkv, wproj, bproj, ln2w, ln2b, w1, b1, w2, b2,
                lnfw, lnfb, pw, pb, o_ref):
    """Fused MAE decoder for ONE batch element: decoder blocks (unrolled) +
    final LayerNorm + prediction head (output lane-padded to 256); masked-token
    gather happens afterwards in JAX glue."""
    x = y0[0]
    hm = hmask[...]
    kb = kbias[...]
    for l in range(DEC_LAYERS):
        x = _tblock(x, hm, kb,
                    ln1w[l], ln1b[l], wqkv[l], bqkv[l], wproj[l], bproj[l],
                    ln2w[l], ln2b[l], w1[l], b1[l], w2[l], b2[l],
                    num_heads=DEC_HEADS)
    h = _layernorm(x, lnfw[...], lnfb[...])                # decoder final LN
    o_ref[0] = jnp.dot(h.astype(jnp.bfloat16), pw[...],
                       preferred_element_type=jnp.float32) + pb[...]   # prediction head


# ------------------------------ pallas_call wrappers ------------------------------
_LAYER_KEYS = ("ln1_w", "ln1_b", "w_qkv", "b_qkv", "w_proj", "b_proj",
               "ln2_w", "ln2_b", "w_mlp1", "b_mlp1", "w_mlp2", "b_mlp2")


def _whole_spec(shape):
    nd = len(shape)
    return pl.BlockSpec(shape, lambda b: (0,) * nd)


def encoder_forward(ptok, add, params):
    ep = params["enc"]
    args = ([ptok, add, params["enc_head_mask"], params["enc_key_bias"], params["conv_w"]]
            + [ep[k] for k in _LAYER_KEYS]
            + [params["enc_ln_w"], params["enc_ln_b"],
               params["dec_embed_w"], params["dec_embed_b"]])
    in_specs = ([pl.BlockSpec((1, KEEP_PAD, CPP), lambda b: (b, 0, 0)),
                 pl.BlockSpec((1, KEEP_PAD, D_ENC), lambda b: (b, 0, 0))]
                + [_whole_spec(a.shape) for a in args[2:]])
    return pl.pallas_call(
        _enc_kernel,
        grid=(B,),
        out_shape=jax.ShapeDtypeStruct((B, KEEP_PAD, D_DEC_PAD), jnp.float32),
        in_specs=in_specs,
        out_specs=pl.BlockSpec((1, KEEP_PAD, D_DEC_PAD), lambda b: (b, 0, 0)),
        compiler_params=pltpu.CompilerParams(dimension_semantics=("parallel",)),
    )(*args)


def decoder_forward(y0, params):
    dp = params["dec"]
    args = ([y0, params["dec_head_mask"], params["dec_key_bias"]]
            + [dp[k] for k in _LAYER_KEYS]
            + [params["dec_ln_w"], params["dec_ln_b"],
               params["pred_w"], params["pred_b"]])
    in_specs = ([pl.BlockSpec((1, SEQ_PAD, D_DEC), lambda b: (b, 0, 0))]
                + [_whole_spec(a.shape) for a in args[1:]])
    return pl.pallas_call(
        _dec_kernel,
        grid=(B,),
        out_shape=jax.ShapeDtypeStruct((B, SEQ_PAD, OUT_PAD), jnp.float32),
        in_specs=in_specs,
        out_specs=pl.BlockSpec((1, SEQ_PAD, OUT_PAD), lambda b: (b, 0, 0)),
        compiler_params=pltpu.CompilerParams(dimension_semantics=("parallel",)),
    )(*args)


# ----------------------------- parameter construction ----------------------------
def _attn_consts(num_heads, s_pad, d, seq_real):
    """Constant block-diagonal head mask (H*s_pad, d) and padded-key additive
    bias (H*s_pad, s_pad) built once on the host."""
    dh = d // num_heads
    head_mask = np.kron(np.eye(num_heads, dtype=np.float32),
                        np.ones((s_pad, dh), dtype=np.float32))
    key_bias = np.zeros((num_heads * s_pad, s_pad), dtype=np.float32)
    key_bias[:, seq_real:] = -1e9
    return jnp.asarray(head_mask), jnp.asarray(key_bias)


def _layer_stack(nk, num_layers, d, mlp):
    def nrm(shape):
        return 0.02 * jax.random.normal(nk(), shape, dtype=jnp.float32)
    return {
        "ln1_w": jnp.ones((num_layers, 1, d), jnp.float32),
        "ln1_b": jnp.zeros((num_layers, 1, d), jnp.float32),
        "w_qkv": nrm((num_layers, d, 3 * d)).astype(jnp.bfloat16),
        "b_qkv": jnp.zeros((num_layers, 1, 3 * d), jnp.float32),
        "w_proj": nrm((num_layers, d, d)).astype(jnp.bfloat16),
        "b_proj": jnp.zeros((num_layers, 1, d), jnp.float32),
        "ln2_w": jnp.ones((num_layers, 1, d), jnp.float32),
        "ln2_b": jnp.zeros((num_layers, 1, d), jnp.float32),
        "w_mlp1": nrm((num_layers, d, mlp)).astype(jnp.bfloat16),
        "b_mlp1": jnp.zeros((num_layers, 1, mlp), jnp.float32),
        "w_mlp2": nrm((num_layers, mlp, d)).astype(jnp.bfloat16),
        "b_mlp2": jnp.zeros((num_layers, 1, d), jnp.float32),
    }


def init_params(key):
    keys = iter(jax.random.split(key, 64))

    def nk():
        return next(keys)

    def nrm(shape):
        return 0.02 * jax.random.normal(nk(), shape, dtype=jnp.float32)

    # lane-padded (zero columns) output projections for lane-dense stores
    dec_embed_w = jnp.zeros((D_ENC, D_DEC_PAD), jnp.float32).at[:, :D_DEC].set(
        nrm((D_ENC, D_DEC)))
    pred_w = jnp.zeros((D_DEC, OUT_PAD), jnp.float32).at[:, :OUT_DIM].set(
        nrm((D_DEC, OUT_DIM)))

    enc_hm, enc_kb = _attn_consts(ENC_HEADS, KEEP_PAD, D_ENC, NUM_KEEP)
    dec_hm, dec_kb = _attn_consts(DEC_HEADS, SEQ_PAD, D_DEC, SEQ_LEN)

    return {
        # conv_proj weight stored pre-reshaped as (C*P*P, D_ENC), bf16
        "conv_w": nrm((CPP, D_ENC)).astype(jnp.bfloat16),
        "conv_b": jnp.zeros((D_ENC,), jnp.float32),
        "class_token": nrm((D_ENC,)),
        "enc_pos": nrm((SEQ_LEN, D_ENC)),
        "enc": _layer_stack(nk, ENC_LAYERS, D_ENC, ENC_MLP),
        "enc_ln_w": jnp.ones((1, D_ENC), jnp.float32),
        "enc_ln_b": jnp.zeros((1, D_ENC), jnp.float32),
        "dec_embed_w": dec_embed_w.astype(jnp.bfloat16),
        "dec_embed_b": jnp.zeros((1, D_DEC_PAD), jnp.float32),
        "mask_token": jnp.zeros((D_DEC,), jnp.float32),        # nn.Parameter(zeros)
        "dec_pos": nrm((SEQ_LEN, D_DEC)),
        "dec": _layer_stack(nk, DEC_LAYERS, D_DEC, DEC_MLP),
        "dec_ln_w": jnp.ones((1, D_DEC), jnp.float32),
        "dec_ln_b": jnp.zeros((1, D_DEC), jnp.float32),
        "pred_w": pred_w.astype(jnp.bfloat16),
        "pred_b": jnp.zeros((1, OUT_PAD), jnp.float32),
        "enc_head_mask": enc_hm, "enc_key_bias": enc_kb,
        "dec_head_mask": dec_hm, "dec_key_bias": dec_kb,
    }


# --------------------------------- forward pass ----------------------------------
def mae_forward(images, params, mask_key):
    # utils.random_token_mask (class token always kept -> idx_keep[:, 0] == 0).
    # TODO(synk): RNG stream differs from torch.rand; distributional semantics match.
    noise = jax.random.uniform(mask_key, (B, SEQ_LEN))
    noise = noise.at[:, 0].set(-1.0)
    order = jnp.argsort(noise, axis=1)
    idx_keep = order[:, :NUM_KEEP]                    # (B, NUM_KEEP)
    idx_mask = order[:, NUM_KEEP:]                    # (B, NUM_MASK)

    # utils.patchify orderings.
    x6 = images.reshape(B, C_IN, N_PATCH_SIDE, PATCH, N_PATCH_SIDE, PATCH)
    patches_target = jnp.transpose(x6, (0, 2, 4, 3, 5, 1)).reshape(
        B, N_PATCHES, PATCH * PATCH * C_IN)           # 'nchpwq->nhwpqc'
    patches_conv = jnp.transpose(x6, (0, 2, 4, 1, 3, 5)).reshape(
        B, N_PATCHES, CPP)                            # (c,p,q) flatten == Conv2d order

    # kept patch pixels; row 0 (cls) and pad rows stay zero.
    keep_patch_idx = idx_keep[:, 1:] - 1              # kept non-cls tokens -> patch ids
    kept = jnp.take_along_axis(patches_conv, keep_patch_idx[..., None], axis=1)
    ptok = jnp.zeros((B, KEEP_PAD, CPP), jnp.float32).at[:, 1:NUM_KEEP].set(kept)

    # additive buffer: class token + conv bias + positional embedding, pre-folded
    pos_keep = jnp.take(params["enc_pos"], idx_keep, axis=0)       # (B, NUM_KEEP, D_ENC)
    add = jnp.zeros((B, KEEP_PAD, D_ENC), jnp.float32).at[:, :NUM_KEEP].set(pos_keep)
    add = add.at[:, 0, :].add(params["class_token"])
    add = add.at[:, 1:NUM_KEEP, :].add(params["conv_b"])

    # fused encoder: patch-embed + cls/pos + blocks + final LN + decoder embed
    x_enc = encoder_forward(ptok, add, params)        # (B, KEEP_PAD, D_DEC_PAD)
    x_dec = x_enc[:, :NUM_KEEP, :D_DEC]

    # utils.repeat_token + utils.set_at_index + decoder positional embedding
    x_masked = jnp.broadcast_to(params["mask_token"], (B, SEQ_LEN, D_DEC))
    bidx = jnp.arange(B)[:, None]
    x_masked = x_masked.at[bidx, idx_keep].set(x_dec)
    y_full = x_masked + params["dec_pos"][None]
    y0 = jnp.zeros((B, SEQ_PAD, D_DEC), jnp.float32).at[:, :SEQ_LEN].set(y_full)

    # fused decoder: blocks + final LN + prediction head (applied to all tokens,
    # masked tokens gathered afterwards — identical math, one fewer kernel).
    y_out = decoder_forward(y0, params)               # (B, SEQ_PAD, OUT_PAD)
    y_pred_all = y_out[:, :SEQ_LEN, :OUT_DIM]
    x_pred = jnp.take_along_axis(y_pred_all, idx_mask[..., None], axis=1)

    # --- reconstruction target ---
    target = jnp.take_along_axis(patches_target, (idx_mask - 1)[..., None], axis=1)
    return x_pred, target


# ------------------------------------- main ---------------------------------------
if __name__ == "__main__":
    root = jax.random.PRNGKey(0)
    pkey, ikey, mkey = jax.random.split(root, 3)
    params = init_params(pkey)
    images = jax.random.normal(ikey, (B, C_IN, IMG, IMG), dtype=jnp.float32)

    x_pred, target = jax.jit(mae_forward)(images, params, mkey)
    jax.block_until_ready((x_pred, target))

    assert x_pred.shape == (B, NUM_MASK, OUT_DIM), x_pred.shape
    assert target.shape == (B, NUM_MASK, OUT_DIM), target.shape
    assert bool(jnp.all(jnp.isfinite(x_pred)))
    assert bool(jnp.all(jnp.isfinite(target)))
    print("KERNEL_OK")
</pallas_src>

<mosaic_0001>
module attributes {stable_mosaic.version = 11 : i64} {
  func.func @_enc_kernel(%arg0: i32, %arg1: memref<1x8x192xf32, #tpu.memory_space<vmem>>, %arg2: memref<1x8x64xf32, #tpu.memory_space<vmem>>, %arg3: memref<32x64xf32, #tpu.memory_space<vmem>>, %arg4: memref<32x8xf32, #tpu.memory_space<vmem>>, %arg5: memref<192x64xbf16, #tpu.memory_space<vmem>>, %arg6: memref<2x1x64xf32, #tpu.memory_space<vmem>>, %arg7: memref<2x1x64xf32, #tpu.memory_space<vmem>>, %arg8: memref<2x64x192xbf16, #tpu.memory_space<vmem>>, %arg9: memref<2x1x192xf32, #tpu.memory_space<vmem>>, %arg10: memref<2x64x64xbf16, #tpu.memory_space<vmem>>, %arg11: memref<2x1x64xf32, #tpu.memory_space<vmem>>, %arg12: memref<2x1x64xf32, #tpu.memory_space<vmem>>, %arg13: memref<2x1x64xf32, #tpu.memory_space<vmem>>, %arg14: memref<2x64x256xbf16, #tpu.memory_space<vmem>>, %arg15: memref<2x1x256xf32, #tpu.memory_space<vmem>>, %arg16: memref<2x256x64xbf16, #tpu.memory_space<vmem>>, %arg17: memref<2x1x64xf32, #tpu.memory_space<vmem>>, %arg18: memref<1x64xf32, #tpu.memory_space<vmem>>, %arg19: memref<1x64xf32, #tpu.memory_space<vmem>>, %arg20: memref<64x128xbf16, #tpu.memory_space<vmem>>, %arg21: memref<1x128xf32, #tpu.memory_space<vmem>>, %arg22: memref<1x8x128xf32, #tpu.memory_space<vmem>>) attributes {dimension_semantics = [#tpu.dimension_semantics<parallel>], iteration_bounds = array<i64: 2>, scalar_prefetch = 0 : i64, scratch_operands = 0 : i64, tpu.core_type = #tpu.core_type<tc>, window_params = [{transform_indices = @transform_0, window_bounds = array<i64: 1, 8, 192>}, {transform_indices = @transform_1, window_bounds = array<i64: 1, 8, 64>}, {pipeline_mode = #tpu.pipeline_mode<synchronous>, transform_indices = @transform_2, window_bounds = array<i64: 32, 64>}, {pipeline_mode = #tpu.pipeline_mode<synchronous>, transform_indices = @transform_3, window_bounds = array<i64: 32, 8>}, {pipeline_mode = #tpu.pipeline_mode<synchronous>, transform_indices = @transform_4, window_bounds = array<i64: 192, 64>}, {pipeline_mode = #tpu.pipeline_mode<synchronous>, transform_indices = @transform_5, window_bounds = array<i64: 2, 1, 64>}, {pipeline_mode = #tpu.pipeline_mode<synchronous>, transform_indices = @transform_6, window_bounds = array<i64: 2, 1, 64>}, {pipeline_mode = #tpu.pipeline_mode<synchronous>, transform_indices = @transform_7, window_bounds = array<i64: 2, 64, 192>}, {pipeline_mode = #tpu.pipeline_mode<synchronous>, transform_indices = @transform_8, window_bounds = array<i64: 2, 1, 192>}, {pipeline_mode = #tpu.pipeline_mode<synchronous>, transform_indices = @transform_9, window_bounds = array<i64: 2, 64, 64>}, {pipeline_mode = #tpu.pipeline_mode<synchronous>, transform_indices = @transform_10, window_bounds = array<i64: 2, 1, 64>}, {pipeline_mode = #tpu.pipeline_mode<synchronous>, transform_indices = @transform_11, window_bounds = array<i64: 2, 1, 64>}, {pipeline_mode = #tpu.pipeline_mode<synchronous>, transform_indices = @transform_12, window_bounds = array<i64: 2, 1, 64>}, {pipeline_mode = #tpu.pipeline_mode<synchronous>, transform_indices = @transform_13, window_bounds = array<i64: 2, 64, 256>}, {pipeline_mode = #tpu.pipeline_mode<synchronous>, transform_indices = @transform_14, window_bounds = array<i64: 2, 1, 256>}, {pipeline_mode = #tpu.pipeline_mode<synchronous>, transform_indices = @transform_15, window_bounds = array<i64: 2, 256, 64>}, {pipeline_mode = #tpu.pipeline_mode<synchronous>, transform_indices = @transform_16, window_bounds = array<i64: 2, 1, 64>}, {pipeline_mode = #tpu.pipeline_mode<synchronous>, transform_indices = @transform_17, window_bounds = array<i64: 1, 64>}, {pipeline_mode = #tpu.pipeline_mode<synchronous>, transform_indices = @transform_18, window_bounds = array<i64: 1, 64>}, {pipeline_mode = #tpu.pipeline_mode<synchronous>, transform_indices = @transform_19, window_bounds = array<i64: 64, 128>}, {pipeline_mode = #tpu.pipeline_mode<synchronous>, transform_indices = @transform_20, window_bounds = array<i64: 1, 128>}, {transform_indices = @transform_21, window_bounds = array<i64: 1, 8, 128>}]} {
    %c0 = arith.constant 0 : index
    %c0_0 = arith.constant 0 : index
    %c0_1 = arith.constant 0 : index
    %0 = vector.load %arg1[%c0, %c0_0, %c0_1] : memref<1x8x192xf32, #tpu.memory_space<vmem>>, vector<1x8x192xf32>
    %1 = vector.shape_cast %0 : vector<1x8x192xf32> to vector<8x192xf32>
    %2 = arith.truncf %1 : vector<8x192xf32> to vector<8x192xbf16>
    %c0_2 = arith.constant 0 : index
    %c0_3 = arith.constant 0 : index
    %3 = vector.load %arg5[%c0_2, %c0_3] : memref<192x64xbf16, #tpu.memory_space<vmem>>, vector<192x64xbf16>
    %cst = arith.constant dense<0.000000e+00> : vector<8x64xf32>
    %4 = tpu.matmul %2, %3, %cst {dimension_numbers = #tpu.dot_dimension_numbers<[1], [0], [0], [1], [0, 0, 1, 1], [], []>} : vector<8x192xbf16>, vector<192x64xbf16>, vector<8x64xf32> -> vector<8x64xf32>
    %c0_4 = arith.constant 0 : index
    %c0_5 = arith.constant 0 : index
    %c0_6 = arith.constant 0 : index
    %5 = vector.load %arg2[%c0_4, %c0_5, %c0_6] : memref<1x8x64xf32, #tpu.memory_space<vmem>>, vector<1x8x64xf32>
    %6 = vector.shape_cast %5 : vector<1x8x64xf32> to vector<8x64xf32>
    %7 = arith.addf %4, %6 : vector<8x64xf32>
    %c0_7 = arith.constant 0 : index
    %c0_8 = arith.constant 0 : index
    %8 = vector.load %arg3[%c0_7, %c0_8] : memref<32x64xf32, #tpu.memory_space<vmem>>, vector<32x64xf32>
    %c0_9 = arith.constant 0 : index
    %c0_10 = arith.constant 0 : index
    %9 = vector.load %arg4[%c0_9, %c0_10] : memref<32x8xf32, #tpu.memory_space<vmem>>, vector<32x8xf32>
    %c0_11 = arith.constant 0 : index
    %c0_12 = arith.constant 0 : index
    %c0_13 = arith.constant 0 : index
    %10 = vector.load %arg6[%c0_11, %c0_12, %c0_13] : memref<2x1x64xf32, #tpu.memory_space<vmem>>, vector<1x1x64xf32>
    %11 = vector.shape_cast %10 : vector<1x1x64xf32> to vector<1x64xf32>
    %c0_14 = arith.constant 0 : index
    %c0_15 = arith.constant 0 : index
    %c0_16 = arith.constant 0 : index
    %12 = vector.load %arg7[%c0_14, %c0_15, %c0_16] : memref<2x1x64xf32, #tpu.memory_space<vmem>>, vector<1x1x64xf32>
    %13 = vector.shape_cast %12 : vector<1x1x64xf32> to vector<1x64xf32>
    %c0_17 = arith.constant 0 : index
    %c0_18 = arith.constant 0 : index
    %c0_19 = arith.constant 0 : index
    %14 = vector.load %arg8[%c0_17, %c0_18, %c0_19] : memref<2x64x192xbf16, #tpu.memory_space<vmem>>, vector<1x64x192xbf16>
    %15 = vector.shape_cast %14 : vector<1x64x192xbf16> to vector<64x192xbf16>
    %c0_20 = arith.constant 0 : index
    %c0_21 = arith.constant 0 : index
    %c0_22 = arith.constant 0 : index
    %16 = vector.load %arg9[%c0_20, %c0_21, %c0_22] : memref<2x1x192xf32, #tpu.memory_space<vmem>>, vector<1x1x192xf32>
    %17 = vector.shape_cast %16 : vector<1x1x192xf32> to vector<1x192xf32>
    %c0_23 = arith.constant 0 : index
    %c0_24 = arith.constant 0 : index
    %c0_25 = arith.constant 0 : index
    %18 = vector.load %arg10[%c0_23, %c0_24, %c0_25] : memref<2x64x64xbf16, #tpu.memory_space<vmem>>, vector<1x64x64xbf16>
    %19 = vector.shape_cast %18 : vector<1x64x64xbf16> to vector<64x64xbf16>
    %c0_26 = arith.constant 0 : index
    %c0_27 = arith.constant 0 : index
    %c0_28 = arith.constant 0 : index
    %20 = vector.load %arg11[%c0_26, %c0_27, %c0_28] : memref<2x1x64xf32, #tpu.memory_space<vmem>>, vector<1x1x64xf32>
    %21 = vector.shape_cast %20 : vector<1x1x64xf32> to vector<1x64xf32>
    %c0_29 = arith.constant 0 : index
    %c0_30 = arith.constant 0 : index
    %c0_31 = arith.constant 0 : index
    %22 = vector.load %arg12[%c0_29, %c0_30, %c0_31] : memref<2x1x64xf32, #tpu.memory_space<vmem>>, vector<1x1x64xf32>
    %23 = vector.shape_cast %22 : vector<1x1x64xf32> to vector<1x64xf32>
    %c0_32 = arith.constant 0 : index
    %c0_33 = arith.constant 0 : index
    %c0_34 = arith.constant 0 : index
    %24 = vector.load %arg13[%c0_32, %c0_33, %c0_34] : memref<2x1x64xf32, #tpu.memory_space<vmem>>, vector<1x1x64xf32>
    %25 = vector.shape_cast %24 : vector<1x1x64xf32> to vector<1x64xf32>
    %c0_35 = arith.constant 0 : index
    %c0_36 = arith.constant 0 : index
    %c0_37 = arith.constant 0 : index
    %26 = vector.load %arg14[%c0_35, %c0_36, %c0_37] : memref<2x64x256xbf16, #tpu.memory_space<vmem>>, vector<1x64x256xbf16>
    %27 = vector.shape_cast %26 : vector<1x64x256xbf16> to vector<64x256xbf16>
    %c0_38 = arith.constant 0 : index
    %c0_39 = arith.constant 0 : index
    %c0_40 = arith.constant 0 : index
    %28 = vector.load %arg15[%c0_38, %c0_39, %c0_40] : memref<2x1x256xf32, #tpu.memory_space<vmem>>, vector<1x1x256xf32>
    %29 = vector.shape_cast %28 : vector<1x1x256xf32> to vector<1x256xf32>
    %c0_41 = arith.constant 0 : index
    %c0_42 = arith.constant 0 : index
    %c0_43 = arith.constant 0 : index
    %30 = vector.load %arg16[%c0_41, %c0_42, %c0_43] : memref<2x256x64xbf16, #tpu.memory_space<vmem>>, vector<1x256x64xbf16>
    %31 = vector.shape_cast %30 : vector<1x256x64xbf16> to vector<256x64xbf16>
    %c0_44 = arith.constant 0 : index
    %c0_45 = arith.constant 0 : index
    %c0_46 = arith.constant 0 : index
    %32 = vector.load %arg17[%c0_44, %c0_45, %c0_46] : memref<2x1x64xf32, #tpu.memory_space<vmem>>, vector<1x1x64xf32>
    %33 = vector.shape_cast %32 : vector<1x1x64xf32> to vector<1x64xf32>
    %cst_47 = arith.constant dense<0.000000e+00> : vector<8xf32>
    %34 = vector.multi_reduction <add>, %7, %cst_47 [1] : vector<8x64xf32> to vector<8xf32>
    %35 = vector.shape_cast %34 : vector<8xf32> to vector<8x1xf32>
    %cst_48 = arith.constant 6.400000e+01 : f32
    %36 = vector.broadcast %cst_48 : f32 to vector<8x1xf32>
    %37 = arith.divf %35, %36 : vector<8x1xf32>
    %38 = vector.broadcast %37 : vector<8x1xf32> to vector<8x64xf32>
    %39 = arith.subf %7, %38 : vector<8x64xf32>
    %40 = arith.mulf %39, %39 : vector<8x64xf32>
    %cst_49 = arith.constant dense<0.000000e+00> : vector<8xf32>
    %41 = vector.multi_reduction <add>, %40, %cst_49 [1] : vector<8x64xf32> to vector<8xf32>
    %42 = vector.shape_cast %41 : vector<8xf32> to vector<8x1xf32>
    %cst_50 = arith.constant 6.400000e+01 : f32
    %43 = vector.broadcast %cst_50 : f32 to vector<8x1xf32>
    %44 = arith.divf %42, %43 : vector<8x1xf32>
    %45 = vector.broadcast %37 : vector<8x1xf32> to vector<8x64xf32>
    %46 = arith.subf %7, %45 : vector<8x64xf32>
    %cst_51 = arith.constant 9.99999997E-7 : f32
    %47 = vector.broadcast %cst_51 : f32 to vector<8x1xf32>
    %48 = arith.addf %44, %47 : vector<8x1xf32>
    %49 = math.rsqrt %48 : vector<8x1xf32>
    %50 = vector.broadcast %49 : vector<8x1xf32> to vector<8x64xf32>
    %51 = arith.mulf %46, %50 : vector<8x64xf32>
    %52 = vector.broadcast %11 : vector<1x64xf32> to vector<8x64xf32>
    %53 = arith.mulf %51, %52 : vector<8x64xf32>
    %54 = vector.broadcast %13 : vector<1x64xf32> to vector<8x64xf32>
    %55 = arith.addf %53, %54 : vector<8x64xf32>
    %56 = arith.truncf %55 : vector<8x64xf32> to vector<8x64xbf16>
    %cst_52 = arith.constant dense<0.000000e+00> : vector<8x192xf32>
    %57 = tpu.matmul %56, %15, %cst_52 {dimension_numbers = #tpu.dot_dimension_numbers<[1], [0], [0], [1], [0, 0, 1, 1], [], []>} : vector<8x64xbf16>, vector<64x192xbf16>, vector<8x192xf32> -> vector<8x192xf32>
    %58 = vector.broadcast %17 : vector<1x192xf32> to vector<8x192xf32>
    %59 = arith.addf %57, %58 : vector<8x192xf32>
    %60 = vector.extract_strided_slice %59 {offsets = [0, 0], sizes = [8, 64], strides = [1, 1]} : vector<8x192xf32> to vector<8x64xf32>
    %cst_53 = arith.constant 2.500000e-01 : f32
    %61 = vector.broadcast %cst_53 : f32 to vector<8x64xf32>
    %62 = arith.mulf %60, %61 : vector<8x64xf32>
    %63 = vector.extract_strided_slice %59 {offsets = [0, 64], sizes = [8, 64], strides = [1, 1]} : vector<8x192xf32> to vector<8x64xf32>
    %64 = vector.extract_strided_slice %59 {offsets = [0, 128], sizes = [8, 64], strides = [1, 1]} : vector<8x192xf32> to vector<8x64xf32>
    %65 = tpu.concatenate %62, %62, %62, %62 in 0 : vector<8x64xf32>, vector<8x64xf32>, vector<8x64xf32>, vector<8x64xf32> -> vector<32x64xf32>
    %66 = arith.mulf %65, %8 : vector<32x64xf32>
    %67 = arith.truncf %66 : vector<32x64xf32> to vector<32x64xbf16>
    %68 = arith.truncf %63 : vector<8x64xf32> to vector<8x64xbf16>
    %cst_54 = arith.constant dense<0.000000e+00> : vector<32x8xf32>
    %69 = tpu.matmul %67, %68, %cst_54 {dimension_numbers = #tpu.dot_dimension_numbers<[1], [1], [0], [0], [0, 0, 1, 0], [], []>} : vector<32x64xbf16>, vector<8x64xbf16>, vector<32x8xf32> -> vector<32x8xf32>
    %70 = arith.addf %69, %9 : vector<32x8xf32>
    %cst_55 = arith.constant dense<0xFF800000> : vector<32xf32>
    %71 = vector.multi_reduction <maximumf>, %70, %cst_55 [1] : vector<32x8xf32> to vector<32xf32>
    %72 = vector.shape_cast %71 : vector<32xf32> to vector<32x1xf32>
    %73 = vector.broadcast %72 : vector<32x1xf32> to vector<32x8xf32>
    %74 = arith.subf %70, %73 : vector<32x8xf32>
    %75 = math.exp %74 : vector<32x8xf32>
    %cst_56 = arith.constant dense<0.000000e+00> : vector<32xf32>
    %76 = vector.multi_reduction <add>, %75, %cst_56 [1] : vector<32x8xf32> to vector<32xf32>
    %77 = vector.shape_cast %76 : vector<32xf32> to vector<32x1xf32>
    %78 = tpu.reciprocal %77 {approx = true} : vector<32x1xf32> -> vector<32x1xf32>
    %79 = vector.broadcast %78 : vector<32x1xf32> to vector<32x8xf32>
    %80 = arith.mulf %75, %79 : vector<32x8xf32>
    %81 = arith.truncf %80 : vector<32x8xf32> to vector<32x8xbf16>
    %82 = arith.truncf %64 : vector<8x64xf32> to vector<8x64xbf16>
    %cst_57 = arith.constant dense<0.000000e+00> : vector<32x64xf32>
    %83 = tpu.matmul %81, %82, %cst_57 {dimension_numbers = #tpu.dot_dimension_numbers<[1], [0], [0], [1], [0, 0, 1, 1], [], []>} : vector<32x8xbf16>, vector<8x64xbf16>, vector<32x64xf32> -> vector<32x64xf32>
    %84 = arith.mulf %83, %8 : vector<32x64xf32>
    %85 = vector.extract_strided_slice %84 {offsets = [0, 0], sizes = [8, 64], strides = [1, 1]} : vector<32x64xf32> to vector<8x64xf32>
    %86 = vector.extract_strided_slice %84 {offsets = [8, 0], sizes = [8, 64], strides = [1, 1]} : vector<32x64xf32> to vector<8x64xf32>
    %87 = arith.addf %85, %86 : vector<8x64xf32>
    %88 = vector.extract_strided_slice %84 {offsets = [16, 0], sizes = [8, 64], strides = [1, 1]} : vector<32x64xf32> to vector<8x64xf32>
    %89 = arith.addf %87, %88 : vector<8x64xf32>
    %90 = vector.extract_strided_slice %84 {offsets = [24, 0], sizes = [8, 64], strides = [1, 1]} : vector<32x64xf32> to vector<8x64xf32>
    %91 = arith.addf %89, %90 : vector<8x64xf32>
    %92 = arith.truncf %91 : vector<8x64xf32> to vector<8x64xbf16>
    %cst_58 = arith.constant dense<0.000000e+00> : vector<8x64xf32>
    %93 = tpu.matmul %92, %19, %cst_58 {dimension_numbers = #tpu.dot_dimension_numbers<[1], [0], [0], [1], [0, 0, 1, 1], [], []>} : vector<8x64xbf16>, vector<64x64xbf16>, vector<8x64xf32> -> vector<8x64xf32>
    %94 = arith.addf %7, %93 : vector<8x64xf32>
    %95 = vector.broadcast %21 : vector<1x64xf32> to vector<8x64xf32>
    %96 = arith.addf %94, %95 : vector<8x64xf32>
    %cst_59 = arith.constant dense<0.000000e+00> : vector<8xf32>
    %97 = vector.multi_reduction <add>, %96, %cst_59 [1] : vector<8x64xf32> to vector<8xf32>
    %98 = vector.shape_cast %97 : vector<8xf32> to vector<8x1xf32>
    %cst_60 = arith.constant 6.400000e+01 : f32
    %99 = vector.broadcast %cst_60 : f32 to vector<8x1xf32>
    %100 = arith.divf %98, %99 : vector<8x1xf32>
    %101 = vector.broadcast %100 : vector<8x1xf32> to vector<8x64xf32>
    %102 = arith.subf %96, %101 : vector<8x64xf32>
    %103 = arith.mulf %102, %102 : vector<8x64xf32>
    %cst_61 = arith.constant dense<0.000000e+00> : vector<8xf32>
    %104 = vector.multi_reduction <add>, %103, %cst_61 [1] : vector<8x64xf32> to vector<8xf32>
    %105 = vector.shape_cast %104 : vector<8xf32> to vector<8x1xf32>
    %cst_62 = arith.constant 6.400000e+01 : f32
    %106 = vector.broadcast %cst_62 : f32 to vector<8x1xf32>
    %107 = arith.divf %105, %106 : vector<8x1xf32>
    %108 = vector.broadcast %100 : vector<8x1xf32> to vector<8x64xf32>
    %109 = arith.subf %96, %108 : vector<8x64xf32>
    %cst_63 = arith.constant 9.99999997E-7 : f32
    %110 = vector.broadcast %cst_63 : f32 to vector<8x1xf32>
    %111 = arith.addf %107, %110 : vector<8x1xf32>
    %112 = math.rsqrt %111 : vector<8x1xf32>
    %113 = vector.broadcast %112 : vector<8x1xf32> to vector<8x64xf32>
    %114 = arith.mulf %109, %113 : vector<8x64xf32>
    %115 = vector.broadcast %23 : vector<1x64xf32> to vector<8x64xf32>
    %116 = arith.mulf %114, %115 : vector<8x64xf32>
    %117 = vector.broadcast %25 : vector<1x64xf32> to vector<8x64xf32>
    %118 = arith.addf %116, %117 : vector<8x64xf32>
    %119 = arith.truncf %118 : vector<8x64xf32> to vector<8x64xbf16>
    %cst_64 = arith.constant dense<0.000000e+00> : vector<8x256xf32>
    %120 = tpu.matmul %119, %27, %cst_64 {dimension_numbers = #tpu.dot_dimension_numbers<[1], [0], [0], [1], [0, 0, 1, 1], [], []>} : vector<8x64xbf16>, vector<64x256xbf16>, vector<8x256xf32> -> vector<8x256xf32>
    %121 = vector.broadcast %29 : vector<1x256xf32> to vector<8x256xf32>
    %122 = arith.addf %120, %121 : vector<8x256xf32>
    %cst_65 = arith.constant 5.000000e-01 : f32
    %123 = vector.broadcast %cst_65 : f32 to vector<8x256xf32>
    %124 = arith.mulf %123, %122 : vector<8x256xf32>
    %cst_66 = arith.constant 4.471500e-02 : f32
    %125 = vector.broadcast %cst_66 : f32 to vector<8x256xf32>
    %126 = arith.mulf %125, %122 : vector<8x256xf32>
    %127 = arith.mulf %126, %122 : vector<8x256xf32>
    %128 = arith.mulf %127, %122 : vector<8x256xf32>
    %129 = arith.addf %122, %128 : vector<8x256xf32>
    %cst_67 = arith.constant 0.797884583 : f32
    %130 = vector.broadcast %cst_67 : f32 to vector<8x256xf32>
    %131 = arith.mulf %130, %129 : vector<8x256xf32>
    %132 = math.tanh %131 : vector<8x256xf32>
    %cst_68 = arith.constant 1.000000e+00 : f32
    %133 = vector.broadcast %cst_68 : f32 to vector<8x256xf32>
    %134 = arith.addf %133, %132 : vector<8x256xf32>
    %135 = arith.mulf %124, %134 : vector<8x256xf32>
    %136 = arith.truncf %135 : vector<8x256xf32> to vector<8x256xbf16>
    %cst_69 = arith.constant dense<0.000000e+00> : vector<8x64xf32>
    %137 = tpu.matmul %136, %31, %cst_69 {dimension_numbers = #tpu.dot_dimension_numbers<[1], [0], [0], [1], [0, 0, 1, 1], [], []>} : vector<8x256xbf16>, vector<256x64xbf16>, vector<8x64xf32> -> vector<8x64xf32>
    %138 = vector.broadcast %33 : vector<1x64xf32> to vector<8x64xf32>
    %139 = arith.addf %137, %138 : vector<8x64xf32>
    %140 = arith.addf %96, %139 : vector<8x64xf32>
    %c1 = arith.constant 1 : index
    %c0_70 = arith.constant 0 : index
    %c0_71 = arith.constant 0 : index
    %141 = vector.load %arg6[%c1, %c0_70, %c0_71] : memref<2x1x64xf32, #tpu.memory_space<vmem>>, vector<1x1x64xf32>
    %142 = vector.shape_cast %141 : vector<1x1x64xf32> to vector<1x64xf32>
    %c1_72 = arith.constant 1 : index
    %c0_73 = arith.constant 0 : index
    %c0_74 = arith.constant 0 : index
    %143 = vector.load %arg7[%c1_72, %c0_73, %c0_74] : memref<2x1x64xf32, #tpu.memory_space<vmem>>, vector<1x1x64xf32>
    %144 = vector.shape_cast %143 : vector<1x1x64xf32> to vector<1x64xf32>
    %c1_75 = arith.constant 1 : index
    %c0_76 = arith.constant 0 : index
    %c0_77 = arith.constant 0 : index
    %145 = vector.load %arg8[%c1_75, %c0_76, %c0_77] : memref<2x64x192xbf16, #tpu.memory_space<vmem>>, vector<1x64x192xbf16>
    %146 = vector.shape_cast %145 : vector<1x64x192xbf16> to vector<64x192xbf16>
    %c1_78 = arith.constant 1 : index
    %c0_79 = arith.constant 0 : index
    %c0_80 = arith.constant 0 : index
    %147 = vector.load %arg9[%c1_78, %c0_79, %c0_80] : memref<2x1x192xf32, #tpu.memory_space<vmem>>, vector<1x1x192xf32>
    %148 = vector.shape_cast %147 : vector<1x1x192xf32> to vector<1x192xf32>
    %c1_81 = arith.constant 1 : index
    %c0_82 = arith.constant 0 : index
    %c0_83 = arith.constant 0 : index
    %149 = vector.load %arg10[%c1_81, %c0_82, %c0_83] : memref<2x64x64xbf16, #tpu.memory_space<vmem>>, vector<1x64x64xbf16>
    %150 = vector.shape_cast %149 : vector<1x64x64xbf16> to vector<64x64xbf16>
    %c1_84 = arith.constant 1 : index
    %c0_85 = arith.constant 0 : index
    %c0_86 = arith.constant 0 : index
    %151 = vector.load %arg11[%c1_84, %c0_85, %c0_86] : memref<2x1x64xf32, #tpu.memory_space<vmem>>, vector<1x1x64xf32>
    %152 = vector.shape_cast %151 : vector<1x1x64xf32> to vector<1x64xf32>
    %c1_87 = arith.constant 1 : index
    %c0_88 = arith.constant 0 : index
    %c0_89 = arith.constant 0 : index
    %153 = vector.load %arg12[%c1_87, %c0_88, %c0_89] : memref<2x1x64xf32, #tpu.memory_space<vmem>>, vector<1x1x64xf32>
    %154 = vector.shape_cast %153 : vector<1x1x64xf32> to vector<1x64xf32>
    %c1_90 = arith.constant 1 : index
    %c0_91 = arith.constant 0 : index
    %c0_92 = arith.constant 0 : index
    %155 = vector.load %arg13[%c1_90, %c0_91, %c0_92] : memref<2x1x64xf32, #tpu.memory_space<vmem>>, vector<1x1x64xf32>
    %156 = vector.shape_cast %155 : vector<1x1x64xf32> to vector<1x64xf32>
    %c1_93 = arith.constant 1 : index
    %c0_94 = arith.constant 0 : index
    %c0_95 = arith.constant 0 : index
    %157 = vector.load %arg14[%c1_93, %c0_94, %c0_95] : memref<2x64x256xbf16, #tpu.memory_space<vmem>>, vector<1x64x256xbf16>
    %158 = vector.shape_cast %157 : vector<1x64x256xbf16> to vector<64x256xbf16>
    %c1_96 = arith.constant 1 : index
    %c0_97 = arith.constant 0 : index
    %c0_98 = arith.constant 0 : index
    %159 = vector.load %arg15[%c1_96, %c0_97, %c0_98] : memref<2x1x256xf32, #tpu.memory_space<vmem>>, vector<1x1x256xf32>
    %160 = vector.shape_cast %159 : vector<1x1x256xf32> to vector<1x256xf32>
    %c1_99 = arith.constant 1 : index
    %c0_100 = arith.constant 0 : index
    %c0_101 = arith.constant 0 : index
    %161 = vector.load %arg16[%c1_99, %c0_100, %c0_101] : memref<2x256x64xbf16, #tpu.memory_space<vmem>>, vector<1x256x64xbf16>
    %162 = vector.shape_cast %161 : vector<1x256x64xbf16> to vector<256x64xbf16>
    %c1_102 = arith.constant 1 : index
    %c0_103 = arith.constant 0 : index
    %c0_104 = arith.constant 0 : index
    %163 = vector.load %arg17[%c1_102, %c0_103, %c0_104] : memref<2x1x64xf32, #tpu.memory_space<vmem>>, vector<1x1x64xf32>
    %164 = vector.shape_cast %163 : vector<1x1x64xf32> to vector<1x64xf32>
    %cst_105 = arith.constant dense<0.000000e+00> : vector<8xf32>
    %165 = vector.multi_reduction <add>, %140, %cst_105 [1] : vector<8x64xf32> to vector<8xf32>
    %166 = vector.shape_cast %165 : vector<8xf32> to vector<8x1xf32>
    %cst_106 = arith.constant 6.400000e+01 : f32
    %167 = vector.broadcast %cst_106 : f32 to vector<8x1xf32>
    %168 = arith.divf %166, %167 : vector<8x1xf32>
    %169 = vector.broadcast %168 : vector<8x1xf32> to vector<8x64xf32>
    %170 = arith.subf %140, %169 : vector<8x64xf32>
    %171 = arith.mulf %170, %170 : vector<8x64xf32>
    %cst_107 = arith.constant dense<0.000000e+00> : vector<8xf32>
    %172 = vector.multi_reduction <add>, %171, %cst_107 [1] : vector<8x64xf32> to vector<8xf32>
    %173 = vector.shape_cast %172 : vector<8xf32> to vector<8x1xf32>
    %cst_108 = arith.constant 6.400000e+01 : f32
    %174 = vector.broadcast %cst_108 : f32 to vector<8x1xf32>
    %175 = arith.divf %173, %174 : vector<8x1xf32>
    %176 = vector.broadcast %168 : vector<8x1xf32> to vector<8x64xf32>
    %177 = arith.subf %140, %176 : vector<8x64xf32>
    %cst_109 = arith.constant 9.99999997E-7 : f32
    %178 = vector.broadcast %cst_109 : f32 to vector<8x1xf32>
    %179 = arith.addf %175, %178 : vector<8x1xf32>
    %180 = math.rsqrt %179 : vector<8x1xf32>
    %181 = vector.broadcast %180 : vector<8x1xf32> to vector<8x64xf32>
    %182 = arith.mulf %177, %181 : vector<8x64xf32>
    %183 = vector.broadcast %142 : vector<1x64xf32> to vector<8x64xf32>
    %184 = arith.mulf %182, %183 : vector<8x64xf32>
    %185 = vector.broadcast %144 : vector<1x64xf32> to vector<8x64xf32>
    %186 = arith.addf %184, %185 : vector<8x64xf32>
    %187 = arith.truncf %186 : vector<8x64xf32> to vector<8x64xbf16>
    %cst_110 = arith.constant dense<0.000000e+00> : vector<8x192xf32>
    %188 = tpu.matmul %187, %146, %cst_110 {dimension_numbers = #tpu.dot_dimension_numbers<[1], [0], [0], [1], [0, 0, 1, 1], [], []>} : vector<8x64xbf16>, vector<64x192xbf16>, vector<8x192xf32> -> vector<8x192xf32>
    %189 = vector.broadcast %148 : vector<1x192xf32> to vector<8x192xf32>
    %190 = arith.addf %188, %189 : vector<8x192xf32>
    %191 = vector.extract_strided_slice %190 {offsets = [0, 0], sizes = [8, 64], strides = [1, 1]} : vector<8x192xf32> to vector<8x64xf32>
    %cst_111 = arith.constant 2.500000e-01 : f32
    %192 = vector.broadcast %cst_111 : f32 to vector<8x64xf32>
    %193 = arith.mulf %191, %192 : vector<8x64xf32>
    %194 = vector.extract_strided_slice %190 {offsets = [0, 64], sizes = [8, 64], strides = [1, 1]} : vector<8x192xf32> to vector<8x64xf32>
    %195 = vector.extract_strided_slice %190 {offsets = [0, 128], sizes = [8, 64], strides = [1, 1]} : vector<8x192xf32> to vector<8x64xf32>
    %196 = tpu.concatenate %193, %193, %193, %193 in 0 : vector<8x64xf32>, vector<8x64xf32>, vector<8x64xf32>, vector<8x64xf32> -> vector<32x64xf32>
    %197 = arith.mulf %196, %8 : vector<32x64xf32>
    %198 = arith.truncf %197 : vector<32x64xf32> to vector<32x64xbf16>
    %199 = arith.truncf %194 : vector<8x64xf32> to vector<8x64xbf16>
    %cst_112 = arith.constant dense<0.000000e+00> : vector<32x8xf32>
    %200 = tpu.matmul %198, %199, %cst_112 {dimension_numbers = #tpu.dot_dimension_numbers<[1], [1], [0], [0], [0, 0, 1, 0], [], []>} : vector<32x64xbf16>, vector<8x64xbf16>, vector<32x8xf32> -> vector<32x8xf32>
    %201 = arith.addf %200, %9 : vector<32x8xf32>
    %cst_113 = arith.constant dense<0xFF800000> : vector<32xf32>
    %202 = vector.multi_reduction <maximumf>, %201, %cst_113 [1] : vector<32x8xf32> to vector<32xf32>
    %203 = vector.shape_cast %202 : vector<32xf32> to vector<32x1xf32>
    %204 = vector.broadcast %203 : vector<32x1xf32> to vector<32x8xf32>
    %205 = arith.subf %201, %204 : vector<32x8xf32>
    %206 = math.exp %205 : vector<32x8xf32>
    %cst_114 = arith.constant dense<0.000000e+00> : vector<32xf32>
    %207 = vector.multi_reduction <add>, %206, %cst_114 [1] : vector<32x8xf32> to vector<32xf32>
    %208 = vector.shape_cast %207 : vector<32xf32> to vector<32x1xf32>
    %209 = tpu.reciprocal %208 {approx = true} : vector<32x1xf32> -> vector<32x1xf32>
    %210 = vector.broadcast %209 : vector<32x1xf32> to vector<32x8xf32>
    %211 = arith.mulf %206, %210 : vector<32x8xf32>
    %212 = arith.truncf %211 : vector<32x8xf32> to vector<32x8xbf16>
    %213 = arith.truncf %195 : vector<8x64xf32> to vector<8x64xbf16>
    %cst_115 = arith.constant dense<0.000000e+00> : vector<32x64xf32>
    %214 = tpu.matmul %212, %213, %cst_115 {dimension_numbers = #tpu.dot_dimension_numbers<[1], [0], [0], [1], [0, 0, 1, 1], [], []>} : vector<32x8xbf16>, vector<8x64xbf16>, vector<32x64xf32> -> vector<32x64xf32>
    %215 = arith.mulf %214, %8 : vector<32x64xf32>
    %216 = vector.extract_strided_slice %215 {offsets = [0, 0], sizes = [8, 64], strides = [1, 1]} : vector<32x64xf32> to vector<8x64xf32>
    %217 = vector.extract_strided_slice %215 {offsets = [8, 0], sizes = [8, 64], strides = [1, 1]} : vector<32x64xf32> to vector<8x64xf32>
    %218 = arith.addf %216, %217 : vector<8x64xf32>
    %219 = vector.extract_strided_slice %215 {offsets = [16, 0], sizes = [8, 64], strides = [1, 1]} : vector<32x64xf32> to vector<8x64xf32>
    %220 = arith.addf %218, %219 : vector<8x64xf32>
    %221 = vector.extract_strided_slice %215 {offsets = [24, 0], sizes = [8, 64], strides = [1, 1]} : vector<32x64xf32> to vector<8x64xf32>
    %222 = arith.addf %220, %221 : vector<8x64xf32>
    %223 = arith.truncf %222 : vector<8x64xf32> to vector<8x64xbf16>
    %cst_116 = arith.constant dense<0.000000e+00> : vector<8x64xf32>
    %224 = tpu.matmul %223, %150, %cst_116 {dimension_numbers = #tpu.dot_dimension_numbers<[1], [0], [0], [1], [0, 0, 1, 1], [], []>} : vector<8x64xbf16>, vector<64x64xbf16>, vector<8x64xf32> -> vector<8x64xf32>
    %225 = arith.addf %140, %224 : vector<8x64xf32>
    %226 = vector.broadcast %152 : vector<1x64xf32> to vector<8x64xf32>
    %227 = arith.addf %225, %226 : vector<8x64xf32>
    %cst_117 = arith.constant dense<0.000000e+00> : vector<8xf32>
    %228 = vector.multi_reduction <add>, %227, %cst_117 [1] : vector<8x64xf32> to vector<8xf32>
    %229 = vector.shape_cast %228 : vector<8xf32> to vector<8x1xf32>
    %cst_118 = arith.constant 6.400000e+01 : f32
    %230 = vector.broadcast %cst_118 : f32 to vector<8x1xf32>
    %231 = arith.divf %229, %230 : vector<8x1xf32>
    %232 = vector.broadcast %231 : vector<8x1xf32> to vector<8x64xf32>
    %233 = arith.subf %227, %232 : vector<8x64xf32>
    %234 = arith.mulf %233, %233 : vector<8x64xf32>
    %cst_119 = arith.constant dense<0.000000e+00> : vector<8xf32>
    %235 = vector.multi_reduction <add>, %234, %cst_119 [1] : vector<8x64xf32> to vector<8xf32>
    %236 = vector.shape_cast %235 : vector<8xf32> to vector<8x1xf32>
    %cst_120 = arith.constant 6.400000e+01 : f32
    %237 = vector.broadcast %cst_120 : f32 to vector<8x1xf32>
    %238 = arith.divf %236, %237 : vector<8x1xf32>
    %239 = vector.broadcast %231 : vector<8x1xf32> to vector<8x64xf32>
    %240 = arith.subf %227, %239 : vector<8x64xf32>
    %cst_121 = arith.constant 9.99999997E-7 : f32
    %241 = vector.broadcast %cst_121 : f32 to vector<8x1xf32>
    %242 = arith.addf %238, %241 : vector<8x1xf32>
    %243 = math.rsqrt %242 : vector<8x1xf32>
    %244 = vector.broadcast %243 : vector<8x1xf32> to vector<8x64xf32>
    %245 = arith.mulf %240, %244 : vector<8x64xf32>
    %246 = vector.broadcast %154 : vector<1x64xf32> to vector<8x64xf32>
    %247 = arith.mulf %245, %246 : vector<8x64xf32>
    %248 = vector.broadcast %156 : vector<1x64xf32> to vector<8x64xf32>
    %249 = arith.addf %247, %248 : vector<8x64xf32>
    %250 = arith.truncf %249 : vector<8x64xf32> to vector<8x64xbf16>
    %cst_122 = arith.constant dense<0.000000e+00> : vector<8x256xf32>
    %251 = tpu.matmul %250, %158, %cst_122 {dimension_numbers = #tpu.dot_dimension_numbers<[1], [0], [0], [1], [0, 0, 1, 1], [], []>} : vector<8x64xbf16>, vector<64x256xbf16>, vector<8x256xf32> -> vector<8x256xf32>
    %252 = vector.broadcast %160 : vector<1x256xf32> to vector<8x256xf32>
    %253 = arith.addf %251, %252 : vector<8x256xf32>
    %cst_123 = arith.constant 5.000000e-01 : f32
    %254 = vector.broadcast %cst_123 : f32 to vector<8x256xf32>
    %255 = arith.mulf %254, %253 : vector<8x256xf32>
    %cst_124 = arith.constant 4.471500e-02 : f32
    %256 = vector.broadcast %cst_124 : f32 to vector<8x256xf32>
    %257 = arith.mulf %256, %253 : vector<8x256xf32>
    %258 = arith.mulf %257, %253 : vector<8x256xf32>
    %259 = arith.mulf %258, %253 : vector<8x256xf32>
    %260 = arith.addf %253, %259 : vector<8x256xf32>
    %cst_125 = arith.constant 0.797884583 : f32
    %261 = vector.broadcast %cst_125 : f32 to vector<8x256xf32>
    %262 = arith.mulf %261, %260 : vector<8x256xf32>
    %263 = math.tanh %262 : vector<8x256xf32>
    %cst_126 = arith.constant 1.000000e+00 : f32
    %264 = vector.broadcast %cst_126 : f32 to vector<8x256xf32>
    %265 = arith.addf %264, %263 : vector<8x256xf32>
    %266 = arith.mulf %255, %265 : vector<8x256xf32>
    %267 = arith.truncf %266 : vector<8x256xf32> to vector<8x256xbf16>
    %cst_127 = arith.constant dense<0.000000e+00> : vector<8x64xf32>
    %268 = tpu.matmul %267, %162, %cst_127 {dimension_numbers = #tpu.dot_dimension_numbers<[1], [0], [0], [1], [0, 0, 1, 1], [], []>} : vector<8x256xbf16>, vector<256x64xbf16>, vector<8x64xf32> -> vector<8x64xf32>
    %269 = vector.broadcast %164 : vector<1x64xf32> to vector<8x64xf32>
    %270 = arith.addf %268, %269 : vector<8x64xf32>
    %271 = arith.addf %227, %270 : vector<8x64xf32>
    %c0_128 = arith.constant 0 : index
    %c0_129 = arith.constant 0 : index
    %272 = vector.load %arg18[%c0_128, %c0_129] : memref<1x64xf32, #tpu.memory_space<vmem>>, vector<1x64xf32>
    %c0_130 = arith.constant 0 : index
    %c0_131 = arith.constant 0 : index
    %273 = vector.load %arg19[%c0_130, %c0_131] : memref<1x64xf32, #tpu.memory_space<vmem>>, vector<1x64xf32>
    %cst_132 = arith.constant dense<0.000000e+00> : vector<8xf32>
    %274 = vector.multi_reduction <add>, %271, %cst_132 [1] : vector<8x64xf32> to vector<8xf32>
    %275 = vector.shape_cast %274 : vector<8xf32> to vector<8x1xf32>
    %cst_133 = arith.constant 6.400000e+01 : f32
    %276 = vector.broadcast %cst_133 : f32 to vector<8x1xf32>
    %277 = arith.divf %275, %276 : vector<8x1xf32>
    %278 = vector.broadcast %277 : vector<8x1xf32> to vector<8x64xf32>
    %279 = arith.subf %271, %278 : vector<8x64xf32>
    %280 = arith.mulf %279, %279 : vector<8x64xf32>
    %cst_134 = arith.constant dense<0.000000e+00> : vector<8xf32>
    %281 = vector.multi_reduction <add>, %280, %cst_134 [1] : vector<8x64xf32> to vector<8xf32>
    %282 = vector.shape_cast %281 : vector<8xf32> to vector<8x1xf32>
    %cst_135 = arith.constant 6.400000e+01 : f32
    %283 = vector.broadcast %cst_135 : f32 to vector<8x1xf32>
    %284 = arith.divf %282, %283 : vector<8x1xf32>
    %285 = vector.broadcast %277 : vector<8x1xf32> to vector<8x64xf32>
    %286 = arith.subf %271, %285 : vector<8x64xf32>
    %cst_136 = arith.constant 9.99999997E-7 : f32
    %287 = vector.broadcast %cst_136 : f32 to vector<8x1xf32>
    %288 = arith.addf %284, %287 : vector<8x1xf32>
    %289 = math.rsqrt %288 : vector<8x1xf32>
    %290 = vector.broadcast %289 : vector<8x1xf32> to vector<8x64xf32>
    %291 = arith.mulf %286, %290 : vector<8x64xf32>
    %292 = vector.broadcast %272 : vector<1x64xf32> to vector<8x64xf32>
    %293 = arith.mulf %291, %292 : vector<8x64xf32>
    %294 = vector.broadcast %273 : vector<1x64xf32> to vector<8x64xf32>
    %295 = arith.addf %293, %294 : vector<8x64xf32>
    %296 = arith.truncf %295 : vector<8x64xf32> to vector<8x64xbf16>
    %c0_137 = arith.constant 0 : index
    %c0_138 = arith.constant 0 : index
    %297 = vector.load %arg20[%c0_137, %c0_138] : memref<64x128xbf16, #tpu.memory_space<vmem>>, vector<64x128xbf16>
    %cst_139 = arith.constant dense<0.000000e+00> : vector<8x128xf32>
    %298 = tpu.matmul %296, %297, %cst_139 {dimension_numbers = #tpu.dot_dimension_numbers<[1], [0], [0], [1], [0, 0, 1, 1], [], []>} : vector<8x64xbf16>, vector<64x128xbf16>, vector<8x128xf32> -> vector<8x128xf32>
    %c0_140 = arith.constant 0 : index
    %c0_141 = arith.constant 0 : index
    %299 = vector.load %arg21[%c0_140, %c0_141] : memref<1x128xf32, #tpu.memory_space<vmem>>, vector<1x128xf32>
    %300 = vector.broadcast %299 : vector<1x128xf32> to vector<8x128xf32>
    %301 = arith.addf %298, %300 : vector<8x128xf32>
    %c0_142 = arith.constant 0 : index
    %c0_143 = arith.constant 0 : index
    %c0_144 = arith.constant 0 : index
    %302 = vector.load %arg22[%c0_142, %c0_143, %c0_144] : memref<1x8x128xf32, #tpu.memory_space<vmem>>, vector<1x8x128xf32>
    %303 = vector.shape_cast %302 : vector<1x8x128xf32> to vector<8x128xf32>
    %304 = vector.shape_cast %301 : vector<8x128xf32> to vector<1x8x128xf32>
    tpu.vector_store %arg22[%c0_142, %c0_143, %c0_144], %304 {strides = array<i32>} : memref<1x8x128xf32, #tpu.memory_space<vmem>>, vector<1x8x128xf32>,
    return
  }
  func.func @transform_0(%arg0: i32) -> (i32, i32, i32) {
    %c0_i32 = arith.constant 0 : i32
    %c0_i32_0 = arith.constant 0 : i32
    %c0_i32_1 = arith.constant 0 : i32
    return %arg0, %c0_i32, %c0_i32_0 : i32, i32, i32
  }
  func.func @transform_1(%arg0: i32) -> (i32, i32, i32) {
    %c0_i32 = arith.constant 0 : i32
    %c0_i32_0 = arith.constant 0 : i32
    %c0_i32_1 = arith.constant 0 : i32
    return %arg0, %c0_i32, %c0_i32_0 : i32, i32, i32
  }
  func.func @transform_2(%arg0: i32) -> (i32, i32) {
    %c0_i32 = arith.constant 0 : i32
    %c0_i32_0 = arith.constant 0 : i32
    %c0_i32_1 = arith.constant 0 : i32
    return %c0_i32, %c0_i32_0 : i32, i32
  }
  func.func @transform_3(%arg0: i32) -> (i32, i32) {
    %c0_i32 = arith.constant 0 : i32
    %c0_i32_0 = arith.constant 0 : i32
    %c0_i32_1 = arith.constant 0 : i32
    return %c0_i32, %c0_i32_0 : i32, i32
  }
  func.func @transform_4(%arg0: i32) -> (i32, i32) {
    %c0_i32 = arith.constant 0 : i32
    %c0_i32_0 = arith.constant 0 : i32
    %c0_i32_1 = arith.constant 0 : i32
    return %c0_i32, %c0_i32_0 : i32, i32
  }
  func.func @transform_5(%arg0: i32) -> (i32, i32, i32) {
    %c0_i32 = arith.constant 0 : i32
    %c0_i32_0 = arith.constant 0 : i32
    %c0_i32_1 = arith.constant 0 : i32
    %c0_i32_2 = arith.constant 0 : i32
    return %c0_i32, %c0_i32_0, %c0_i32_1 : i32, i32, i32
  }
  func.func @transform_6(%arg0: i32) -> (i32, i32, i32) {
    %c0_i32 = arith.constant 0 : i32
    %c0_i32_0 = arith.constant 0 : i32
    %c0_i32_1 = arith.constant 0 : i32
    %c0_i32_2 = arith.constant 0 : i32
    return %c0_i32, %c0_i32_0, %c0_i32_1 : i32, i32, i32
  }
  func.func @transform_7(%arg0: i32) -> (i32, i32, i32) {
    %c0_i32 = arith.constant 0 : i32
    %c0_i32_0 = arith.constant 0 : i32
    %c0_i32_1 = arith.constant 0 : i32
    %c0_i32_2 = arith.constant 0 : i32
    return %c0_i32, %c0_i32_0, %c0_i32_1 : i32, i32, i32
  }
  func.func @transform_8(%arg0: i32) -> (i32, i32, i32) {
    %c0_i32 = arith.constant 0 : i32
    %c0_i32_0 = arith.constant 0 : i32
    %c0_i32_1 = arith.constant 0 : i32
    %c0_i32_2 = arith.constant 0 : i32
    return %c0_i32, %c0_i32_0, %c0_i32_1 : i32, i32, i32
  }
  func.func @transform_9(%arg0: i32) -> (i32, i32, i32) {
    %c0_i32 = arith.constant 0 : i32
    %c0_i32_0 = arith.constant 0 : i32
    %c0_i32_1 = arith.constant 0 : i32
    %c0_i32_2 = arith.constant 0 : i32
    return %c0_i32, %c0_i32_0, %c0_i32_1 : i32, i32, i32
  }
  func.func @transform_10(%arg0: i32) -> (i32, i32, i32) {
    %c0_i32 = arith.constant 0 : i32
    %c0_i32_0 = arith.constant 0 : i32
    %c0_i32_1 = arith.constant 0 : i32
    %c0_i32_2 = arith.constant 0 : i32
    return %c0_i32, %c0_i32_0, %c0_i32_1 : i32, i32, i32
  }
  func.func @transform_11(%arg0: i32) -> (i32, i32, i32) {
    %c0_i32 = arith.constant 0 : i32
    %c0_i32_0 = arith.constant 0 : i32
    %c0_i32_1 = arith.constant 0 : i32
    %c0_i32_2 = arith.constant 0 : i32
    return %c0_i32, %c0_i32_0, %c0_i32_1 : i32, i32, i32
  }
  func.func @transform_12(%arg0: i32) -> (i32, i32, i32) {
    %c0_i32 = arith.constant 0 : i32
    %c0_i32_0 = arith.constant 0 : i32
    %c0_i32_1 = arith.constant 0 : i32
    %c0_i32_2 = arith.constant 0 : i32
    return %c0_i32, %c0_i32_0, %c0_i32_1 : i32, i32, i32
  }
  func.func @transform_13(%arg0: i32) -> (i32, i32, i32) {
    %c0_i32 = arith.constant 0 : i32
    %c0_i32_0 = arith.constant 0 : i32
    %c0_i32_1 = arith.constant 0 : i32
    %c0_i32_2 = arith.constant 0 : i32
    return %c0_i32, %c0_i32_0, %c0_i32_1 : i32, i32, i32
  }
  func.func @transform_14(%arg0: i32) -> (i32, i32, i32) {
    %c0_i32 = arith.constant 0 : i32
    %c0_i32_0 = arith.constant 0 : i32
    %c0_i32_1 = arith.constant 0 : i32
    %c0_i32_2 = arith.constant 0 : i32
    return %c0_i32, %c0_i32_0, %c0_i32_1 : i32, i32, i32
  }
  func.func @transform_15(%arg0: i32) -> (i32, i32, i32) {
    %c0_i32 = arith.constant 0 : i32
    %c0_i32_0 = arith.constant 0 : i32
    %c0_i32_1 = arith.constant 0 : i32
    %c0_i32_2 = arith.constant 0 : i32
    return %c0_i32, %c0_i32_0, %c0_i32_1 : i32, i32, i32
  }
  func.func @transform_16(%arg0: i32) -> (i32, i32, i32) {
    %c0_i32 = arith.constant 0 : i32
    %c0_i32_0 = arith.constant 0 : i32
    %c0_i32_1 = arith.constant 0 : i32
    %c0_i32_2 = arith.constant 0 : i32
    return %c0_i32, %c0_i32_0, %c0_i32_1 : i32, i32, i32
  }
  func.func @transform_17(%arg0: i32) -> (i32, i32) {
    %c0_i32 = arith.constant 0 : i32
    %c0_i32_0 = arith.constant 0 : i32
    %c0_i32_1 = arith.constant 0 : i32
    return %c0_i32, %c0_i32_0 : i32, i32
  }
  func.func @transform_18(%arg0: i32) -> (i32, i32) {
    %c0_i32 = arith.constant 0 : i32
    %c0_i32_0 = arith.constant 0 : i32
    %c0_i32_1 = arith.constant 0 : i32
    return %c0_i32, %c0_i32_0 : i32, i32
  }
  func.func @transform_19(%arg0: i32) -> (i32, i32) {
    %c0_i32 = arith.constant 0 : i32
    %c0_i32_0 = arith.constant 0 : i32
    %c0_i32_1 = arith.constant 0 : i32
    return %c0_i32, %c0_i32_0 : i32, i32
  }
  func.func @transform_20(%arg0: i32) -> (i32, i32) {
    %c0_i32 = arith.constant 0 : i32
    %c0_i32_0 = arith.constant 0 : i32
    %c0_i32_1 = arith.constant 0 : i32
    return %c0_i32, %c0_i32_0 : i32, i32
  }
  func.func @transform_21(%arg0: i32) -> (i32, i32, i32) {
    %c0_i32 = arith.constant 0 : i32
    %c0_i32_0 = arith.constant 0 : i32
    %c0_i32_1 = arith.constant 0 : i32
    return %arg0, %c0_i32, %c0_i32_0 : i32, i32, i32
  }
}

module attributes {stable_mosaic.version = 11 : i64} {
  func.func @_dec_kernel(%arg0: i32, %arg1: memref<1x24x32xf32, #tpu.memory_space<vmem>>, %arg2: memref<96x32xf32, #tpu.memory_space<vmem>>, %arg3: memref<96x24xf32, #tpu.memory_space<vmem>>, %arg4: memref<1x1x32xf32, #tpu.memory_space<vmem>>, %arg5: memref<1x1x32xf32, #tpu.memory_space<vmem>>, %arg6: memref<1x32x96xbf16, #tpu.memory_space<vmem>>, %arg7: memref<1x1x96xf32, #tpu.memory_space<vmem>>, %arg8: memref<1x32x32xbf16, #tpu.memory_space<vmem>>, %arg9: memref<1x1x32xf32, #tpu.memory_space<vmem>>, %arg10: memref<1x1x32xf32, #tpu.memory_space<vmem>>, %arg11: memref<1x1x32xf32, #tpu.memory_space<vmem>>, %arg12: memref<1x32x128xbf16, #tpu.memory_space<vmem>>, %arg13: memref<1x1x128xf32, #tpu.memory_space<vmem>>, %arg14: memref<1x128x32xbf16, #tpu.memory_space<vmem>>, %arg15: memref<1x1x32xf32, #tpu.memory_space<vmem>>, %arg16: memref<1x32xf32, #tpu.memory_space<vmem>>, %arg17: memref<1x32xf32, #tpu.memory_space<vmem>>, %arg18: memref<32x256xbf16, #tpu.memory_space<vmem>>, %arg19: memref<1x256xf32, #tpu.memory_space<vmem>>, %arg20: memref<1x24x256xf32, #tpu.memory_space<vmem>>) attributes {dimension_semantics = [#tpu.dimension_semantics<parallel>], iteration_bounds = array<i64: 2>, scalar_prefetch = 0 : i64, scratch_operands = 0 : i64, tpu.core_type = #tpu.core_type<tc>, window_params = [{transform_indices = @transform_0, window_bounds = array<i64: 1, 24, 32>}, {pipeline_mode = #tpu.pipeline_mode<synchronous>, transform_indices = @transform_1, window_bounds = array<i64: 96, 32>}, {pipeline_mode = #tpu.pipeline_mode<synchronous>, transform_indices = @transform_2, window_bounds = array<i64: 96, 24>}, {pipeline_mode = #tpu.pipeline_mode<synchronous>, transform_indices = @transform_3, window_bounds = array<i64: 1, 1, 32>}, {pipeline_mode = #tpu.pipeline_mode<synchronous>, transform_indices = @transform_4, window_bounds = array<i64: 1, 1, 32>}, {pipeline_mode = #tpu.pipeline_mode<synchronous>, transform_indices = @transform_5, window_bounds = array<i64: 1, 32, 96>}, {pipeline_mode = #tpu.pipeline_mode<synchronous>, transform_indices = @transform_6, window_bounds = array<i64: 1, 1, 96>}, {pipeline_mode = #tpu.pipeline_mode<synchronous>, transform_indices = @transform_7, window_bounds = array<i64: 1, 32, 32>}, {pipeline_mode = #tpu.pipeline_mode<synchronous>, transform_indices = @transform_8, window_bounds = array<i64: 1, 1, 32>}, {pipeline_mode = #tpu.pipeline_mode<synchronous>, transform_indices = @transform_9, window_bounds = array<i64: 1, 1, 32>}, {pipeline_mode = #tpu.pipeline_mode<synchronous>, transform_indices = @transform_10, window_bounds = array<i64: 1, 1, 32>}, {pipeline_mode = #tpu.pipeline_mode<synchronous>, transform_indices = @transform_11, window_bounds = array<i64: 1, 32, 128>}, {pipeline_mode = #tpu.pipeline_mode<synchronous>, transform_indices = @transform_12, window_bounds = array<i64: 1, 1, 128>}, {pipeline_mode = #tpu.pipeline_mode<synchronous>, transform_indices = @transform_13, window_bounds = array<i64: 1, 128, 32>}, {pipeline_mode = #tpu.pipeline_mode<synchronous>, transform_indices = @transform_14, window_bounds = array<i64: 1, 1, 32>}, {pipeline_mode = #tpu.pipeline_mode<synchronous>, transform_indices = @transform_15, window_bounds = array<i64: 1, 32>}, {pipeline_mode = #tpu.pipeline_mode<synchronous>, transform_indices = @transform_16, window_bounds = array<i64: 1, 32>}, {pipeline_mode = #tpu.pipeline_mode<synchronous>, transform_indices = @transform_17, window_bounds = array<i64: 32, 256>}, {pipeline_mode = #tpu.pipeline_mode<synchronous>, transform_indices = @transform_18, window_bounds = array<i64: 1, 256>}, {transform_indices = @transform_19, window_bounds = array<i64: 1, 24, 256>}]} {
    %c0 = arith.constant 0 : index
    %c0_0 = arith.constant 0 : index
    %c0_1 = arith.constant 0 : index
    %0 = vector.load %arg1[%c0, %c0_0, %c0_1] : memref<1x24x32xf32, #tpu.memory_space<vmem>>, vector<1x24x32xf32>
    %1 = vector.shape_cast %0 : vector<1x24x32xf32> to vector<24x32xf32>
    %c0_2 = arith.constant 0 : index
    %c0_3 = arith.constant 0 : index
    %2 = vector.load %arg2[%c0_2, %c0_3] : memref<96x32xf32, #tpu.memory_space<vmem>>, vector<96x32xf32>
    %c0_4 = arith.constant 0 : index
    %c0_5 = arith.constant 0 : index
    %3 = vector.load %arg3[%c0_4, %c0_5] : memref<96x24xf32, #tpu.memory_space<vmem>>, vector<96x24xf32>
    %c0_6 = arith.constant 0 : index
    %c0_7 = arith.constant 0 : index
    %c0_8 = arith.constant 0 : index
    %4 = vector.load %arg4[%c0_6, %c0_7, %c0_8] : memref<1x1x32xf32, #tpu.memory_space<vmem>>, vector<1x1x32xf32>
    %5 = vector.shape_cast %4 : vector<1x1x32xf32> to vector<1x32xf32>
    %c0_9 = arith.constant 0 : index
    %c0_10 = arith.constant 0 : index
    %c0_11 = arith.constant 0 : index
    %6 = vector.load %arg5[%c0_9, %c0_10, %c0_11] : memref<1x1x32xf32, #tpu.memory_space<vmem>>, vector<1x1x32xf32>
    %7 = vector.shape_cast %6 : vector<1x1x32xf32> to vector<1x32xf32>
    %c0_12 = arith.constant 0 : index
    %c0_13 = arith.constant 0 : index
    %c0_14 = arith.constant 0 : index
    %8 = vector.load %arg6[%c0_12, %c0_13, %c0_14] : memref<1x32x96xbf16, #tpu.memory_space<vmem>>, vector<1x32x96xbf16>
    %9 = vector.shape_cast %8 : vector<1x32x96xbf16> to vector<32x96xbf16>
    %c0_15 = arith.constant 0 : index
    %c0_16 = arith.constant 0 : index
    %c0_17 = arith.constant 0 : index
    %10 = vector.load %arg7[%c0_15, %c0_16, %c0_17] : memref<1x1x96xf32, #tpu.memory_space<vmem>>, vector<1x1x96xf32>
    %11 = vector.shape_cast %10 : vector<1x1x96xf32> to vector<1x96xf32>
    %c0_18 = arith.constant 0 : index
    %c0_19 = arith.constant 0 : index
    %c0_20 = arith.constant 0 : index
    %12 = vector.load %arg8[%c0_18, %c0_19, %c0_20] : memref<1x32x32xbf16, #tpu.memory_space<vmem>>, vector<1x32x32xbf16>
    %13 = vector.shape_cast %12 : vector<1x32x32xbf16> to vector<32x32xbf16>
    %c0_21 = arith.constant 0 : index
    %c0_22 = arith.constant 0 : index
    %c0_23 = arith.constant 0 : index
    %14 = vector.load %arg9[%c0_21, %c0_22, %c0_23] : memref<1x1x32xf32, #tpu.memory_space<vmem>>, vector<1x1x32xf32>
    %15 = vector.shape_cast %14 : vector<1x1x32xf32> to vector<1x32xf32>
    %c0_24 = arith.constant 0 : index
    %c0_25 = arith.constant 0 : index
    %c0_26 = arith.constant 0 : index
    %16 = vector.load %arg10[%c0_24, %c0_25, %c0_26] : memref<1x1x32xf32, #tpu.memory_space<vmem>>, vector<1x1x32xf32>
    %17 = vector.shape_cast %16 : vector<1x1x32xf32> to vector<1x32xf32>
    %c0_27 = arith.constant 0 : index
    %c0_28 = arith.constant 0 : index
    %c0_29 = arith.constant 0 : index
    %18 = vector.load %arg11[%c0_27, %c0_28, %c0_29] : memref<1x1x32xf32, #tpu.memory_space<vmem>>, vector<1x1x32xf32>
    %19 = vector.shape_cast %18 : vector<1x1x32xf32> to vector<1x32xf32>
    %c0_30 = arith.constant 0 : index
    %c0_31 = arith.constant 0 : index
    %c0_32 = arith.constant 0 : index
    %20 = vector.load %arg12[%c0_30, %c0_31, %c0_32] : memref<1x32x128xbf16, #tpu.memory_space<vmem>>, vector<1x32x128xbf16>
    %21 = vector.shape_cast %20 : vector<1x32x128xbf16> to vector<32x128xbf16>
    %c0_33 = arith.constant 0 : index
    %c0_34 = arith.constant 0 : index
    %c0_35 = arith.constant 0 : index
    %22 = vector.load %arg13[%c0_33, %c0_34, %c0_35] : memref<1x1x128xf32, #tpu.memory_space<vmem>>, vector<1x1x128xf32>
    %23 = vector.shape_cast %22 : vector<1x1x128xf32> to vector<1x128xf32>
    %c0_36 = arith.constant 0 : index
    %c0_37 = arith.constant 0 : index
    %c0_38 = arith.constant 0 : index
    %24 = vector.load %arg14[%c0_36, %c0_37, %c0_38] : memref<1x128x32xbf16, #tpu.memory_space<vmem>>, vector<1x128x32xbf16>
    %25 = vector.shape_cast %24 : vector<1x128x32xbf16> to vector<128x32xbf16>
    %c0_39 = arith.constant 0 : index
    %c0_40 = arith.constant 0 : index
    %c0_41 = arith.constant 0 : index
    %26 = vector.load %arg15[%c0_39, %c0_40, %c0_41] : memref<1x1x32xf32, #tpu.memory_space<vmem>>, vector<1x1x32xf32>
    %27 = vector.shape_cast %26 : vector<1x1x32xf32> to vector<1x32xf32>
    %cst = arith.constant dense<0.000000e+00> : vector<24xf32>
    %28 = vector.multi_reduction <add>, %1, %cst [1] : vector<24x32xf32> to vector<24xf32>
    %29 = vector.shape_cast %28 : vector<24xf32> to vector<24x1xf32>
    %cst_42 = arith.constant 3.200000e+01 : f32
    %30 = vector.broadcast %cst_42 : f32 to vector<24x1xf32>
    %31 = arith.divf %29, %30 : vector<24x1xf32>
    %32 = vector.broadcast %31 : vector<24x1xf32> to vector<24x32xf32>
    %33 = arith.subf %1, %32 : vector<24x32xf32>
    %34 = arith.mulf %33, %33 : vector<24x32xf32>
    %cst_43 = arith.constant dense<0.000000e+00> : vector<24xf32>
    %35 = vector.multi_reduction <add>, %34, %cst_43 [1] : vector<24x32xf32> to vector<24xf32>
    %36 = vector.shape_cast %35 : vector<24xf32> to vector<24x1xf32>
    %cst_44 = arith.constant 3.200000e+01 : f32
    %37 = vector.broadcast %cst_44 : f32 to vector<24x1xf32>
    %38 = arith.divf %36, %37 : vector<24x1xf32>
    %39 = vector.broadcast %31 : vector<24x1xf32> to vector<24x32xf32>
    %40 = arith.subf %1, %39 : vector<24x32xf32>
    %cst_45 = arith.constant 9.99999997E-7 : f32
    %41 = vector.broadcast %cst_45 : f32 to vector<24x1xf32>
    %42 = arith.addf %38, %41 : vector<24x1xf32>
    %43 = math.rsqrt %42 : vector<24x1xf32>
    %44 = vector.broadcast %43 : vector<24x1xf32> to vector<24x32xf32>
    %45 = arith.mulf %40, %44 : vector<24x32xf32>
    %46 = vector.broadcast %5 : vector<1x32xf32> to vector<24x32xf32>
    %47 = arith.mulf %45, %46 : vector<24x32xf32>
    %48 = vector.broadcast %7 : vector<1x32xf32> to vector<24x32xf32>
    %49 = arith.addf %47, %48 : vector<24x32xf32>
    %50 = arith.truncf %49 : vector<24x32xf32> to vector<24x32xbf16>
    %cst_46 = arith.constant dense<0.000000e+00> : vector<24x96xf32>
    %51 = tpu.matmul %50, %9, %cst_46 {dimension_numbers = #tpu.dot_dimension_numbers<[1], [0], [0], [1], [0, 0, 1, 1], [], []>} : vector<24x32xbf16>, vector<32x96xbf16>, vector<24x96xf32> -> vector<24x96xf32>
    %52 = vector.broadcast %11 : vector<1x96xf32> to vector<24x96xf32>
    %53 = arith.addf %51, %52 : vector<24x96xf32>
    %54 = vector.extract_strided_slice %53 {offsets = [0, 0], sizes = [24, 32], strides = [1, 1]} : vector<24x96xf32> to vector<24x32xf32>
    %cst_47 = arith.constant 0.353553385 : f32
    %55 = vector.broadcast %cst_47 : f32 to vector<24x32xf32>
    %56 = arith.mulf %54, %55 : vector<24x32xf32>
    %57 = vector.extract_strided_slice %53 {offsets = [0, 32], sizes = [24, 32], strides = [1, 1]} : vector<24x96xf32> to vector<24x32xf32>
    %58 = vector.extract_strided_slice %53 {offsets = [0, 64], sizes = [24, 32], strides = [1, 1]} : vector<24x96xf32> to vector<24x32xf32>
    %59 = tpu.concatenate %56, %56, %56, %56 in 0 : vector<24x32xf32>, vector<24x32xf32>, vector<24x32xf32>, vector<24x32xf32> -> vector<96x32xf32>
    %60 = arith.mulf %59, %2 : vector<96x32xf32>
    %61 = arith.truncf %60 : vector<96x32xf32> to vector<96x32xbf16>
    %62 = arith.truncf %57 : vector<24x32xf32> to vector<24x32xbf16>
    %cst_48 = arith.constant dense<0.000000e+00> : vector<96x24xf32>
    %63 = tpu.matmul %61, %62, %cst_48 {dimension_numbers = #tpu.dot_dimension_numbers<[1], [1], [0], [0], [0, 0, 1, 0], [], []>} : vector<96x32xbf16>, vector<24x32xbf16>, vector<96x24xf32> -> vector<96x24xf32>
    %64 = arith.addf %63, %3 : vector<96x24xf32>
    %cst_49 = arith.constant dense<0xFF800000> : vector<96xf32>
    %65 = vector.multi_reduction <maximumf>, %64, %cst_49 [1] : vector<96x24xf32> to vector<96xf32>
    %66 = vector.shape_cast %65 : vector<96xf32> to vector<96x1xf32>
    %67 = vector.broadcast %66 : vector<96x1xf32> to vector<96x24xf32>
    %68 = arith.subf %64, %67 : vector<96x24xf32>
    %69 = math.exp %68 : vector<96x24xf32>
    %cst_50 = arith.constant dense<0.000000e+00> : vector<96xf32>
    %70 = vector.multi_reduction <add>, %69, %cst_50 [1] : vector<96x24xf32> to vector<96xf32>
    %71 = vector.shape_cast %70 : vector<96xf32> to vector<96x1xf32>
    %72 = tpu.reciprocal %71 {approx = true} : vector<96x1xf32> -> vector<96x1xf32>
    %73 = vector.broadcast %72 : vector<96x1xf32> to vector<96x24xf32>
    %74 = arith.mulf %69, %73 : vector<96x24xf32>
    %75 = arith.truncf %74 : vector<96x24xf32> to vector<96x24xbf16>
    %76 = arith.truncf %58 : vector<24x32xf32> to vector<24x32xbf16>
    %cst_51 = arith.constant dense<0.000000e+00> : vector<96x32xf32>
    %77 = tpu.matmul %75, %76, %cst_51 {dimension_numbers = #tpu.dot_dimension_numbers<[1], [0], [0], [1], [0, 0, 1, 1], [], []>} : vector<96x24xbf16>, vector<24x32xbf16>, vector<96x32xf32> -> vector<96x32xf32>
    %78 = arith.mulf %77, %2 : vector<96x32xf32>
    %79 = vector.extract_strided_slice %78 {offsets = [0, 0], sizes = [24, 32], strides = [1, 1]} : vector<96x32xf32> to vector<24x32xf32>
    %80 = vector.extract_strided_slice %78 {offsets = [24, 0], sizes = [24, 32], strides = [1, 1]} : vector<96x32xf32> to vector<24x32xf32>
    %81 = arith.addf %79, %80 : vector<24x32xf32>
    %82 = vector.extract_strided_slice %78 {offsets = [48, 0], sizes = [24, 32], strides = [1, 1]} : vector<96x32xf32> to vector<24x32xf32>
    %83 = arith.addf %81, %82 : vector<24x32xf32>
    %84 = vector.extract_strided_slice %78 {offsets = [72, 0], sizes = [24, 32], strides = [1, 1]} : vector<96x32xf32> to vector<24x32xf32>
    %85 = arith.addf %83, %84 : vector<24x32xf32>
    %86 = arith.truncf %85 : vector<24x32xf32> to vector<24x32xbf16>
    %cst_52 = arith.constant dense<0.000000e+00> : vector<24x32xf32>
    %87 = tpu.matmul %86, %13, %cst_52 {dimension_numbers = #tpu.dot_dimension_numbers<[1], [0], [0], [1], [0, 0, 1, 1], [], []>} : vector<24x32xbf16>, vector<32x32xbf16>, vector<24x32xf32> -> vector<24x32xf32>
    %88 = arith.addf %1, %87 : vector<24x32xf32>
    %89 = vector.broadcast %15 : vector<1x32xf32> to vector<24x32xf32>
    %90 = arith.addf %88, %89 : vector<24x32xf32>
    %cst_53 = arith.constant dense<0.000000e+00> : vector<24xf32>
    %91 = vector.multi_reduction <add>, %90, %cst_53 [1] : vector<24x32xf32> to vector<24xf32>
    %92 = vector.shape_cast %91 : vector<24xf32> to vector<24x1xf32>
    %cst_54 = arith.constant 3.200000e+01 : f32
    %93 = vector.broadcast %cst_54 : f32 to vector<24x1xf32>
    %94 = arith.divf %92, %93 : vector<24x1xf32>
    %95 = vector.broadcast %94 : vector<24x1xf32> to vector<24x32xf32>
    %96 = arith.subf %90, %95 : vector<24x32xf32>
    %97 = arith.mulf %96, %96 : vector<24x32xf32>
    %cst_55 = arith.constant dense<0.000000e+00> : vector<24xf32>
    %98 = vector.multi_reduction <add>, %97, %cst_55 [1] : vector<24x32xf32> to vector<24xf32>
    %99 = vector.shape_cast %98 : vector<24xf32> to vector<24x1xf32>
    %cst_56 = arith.constant 3.200000e+01 : f32
    %100 = vector.broadcast %cst_56 : f32 to vector<24x1xf32>
    %101 = arith.divf %99, %100 : vector<24x1xf32>
    %102 = vector.broadcast %94 : vector<24x1xf32> to vector<24x32xf32>
    %103 = arith.subf %90, %102 : vector<24x32xf32>
    %cst_57 = arith.constant 9.99999997E-7 : f32
    %104 = vector.broadcast %cst_57 : f32 to vector<24x1xf32>
    %105 = arith.addf %101, %104 : vector<24x1xf32>
    %106 = math.rsqrt %105 : vector<24x1xf32>
    %107 = vector.broadcast %106 : vector<24x1xf32> to vector<24x32xf32>
    %108 = arith.mulf %103, %107 : vector<24x32xf32>
    %109 = vector.broadcast %17 : vector<1x32xf32> to vector<24x32xf32>
    %110 = arith.mulf %108, %109 : vector<24x32xf32>
    %111 = vector.broadcast %19 : vector<1x32xf32> to vector<24x32xf32>
    %112 = arith.addf %110, %111 : vector<24x32xf32>
    %113 = arith.truncf %112 : vector<24x32xf32> to vector<24x32xbf16>
    %cst_58 = arith.constant dense<0.000000e+00> : vector<24x128xf32>
    %114 = tpu.matmul %113, %21, %cst_58 {dimension_numbers = #tpu.dot_dimension_numbers<[1], [0], [0], [1], [0, 0, 1, 1], [], []>} : vector<24x32xbf16>, vector<32x128xbf16>, vector<24x128xf32> -> vector<24x128xf32>
    %115 = vector.broadcast %23 : vector<1x128xf32> to vector<24x128xf32>
    %116 = arith.addf %114, %115 : vector<24x128xf32>
    %cst_59 = arith.constant 5.000000e-01 : f32
    %117 = vector.broadcast %cst_59 : f32 to vector<24x128xf32>
    %118 = arith.mulf %117, %116 : vector<24x128xf32>
    %cst_60 = arith.constant 4.471500e-02 : f32
    %119 = vector.broadcast %cst_60 : f32 to vector<24x128xf32>
    %120 = arith.mulf %119, %116 : vector<24x128xf32>
    %121 = arith.mulf %120, %116 : vector<24x128xf32>
    %122 = arith.mulf %121, %116 : vector<24x128xf32>
    %123 = arith.addf %116, %122 : vector<24x128xf32>
    %cst_61 = arith.constant 0.797884583 : f32
    %124 = vector.broadcast %cst_61 : f32 to vector<24x128xf32>
    %125 = arith.mulf %124, %123 : vector<24x128xf32>
    %126 = math.tanh %125 : vector<24x128xf32>
    %cst_62 = arith.constant 1.000000e+00 : f32
    %127 = vector.broadcast %cst_62 : f32 to vector<24x128xf32>
    %128 = arith.addf %127, %126 : vector<24x128xf32>
    %129 = arith.mulf %118, %128 : vector<24x128xf32>
    %130 = arith.truncf %129 : vector<24x128xf32> to vector<24x128xbf16>
    %cst_63 = arith.constant dense<0.000000e+00> : vector<24x32xf32>
    %131 = tpu.matmul %130, %25, %cst_63 {dimension_numbers = #tpu.dot_dimension_numbers<[1], [0], [0], [1], [0, 0, 1, 1], [], []>} : vector<24x128xbf16>, vector<128x32xbf16>, vector<24x32xf32> -> vector<24x32xf32>
    %132 = vector.broadcast %27 : vector<1x32xf32> to vector<24x32xf32>
    %133 = arith.addf %131, %132 : vector<24x32xf32>
    %134 = arith.addf %90, %133 : vector<24x32xf32>
    %c0_64 = arith.constant 0 : index
    %c0_65 = arith.constant 0 : index
    %135 = vector.load %arg16[%c0_64, %c0_65] : memref<1x32xf32, #tpu.memory_space<vmem>>, vector<1x32xf32>
    %c0_66 = arith.constant 0 : index
    %c0_67 = arith.constant 0 : index
    %136 = vector.load %arg17[%c0_66, %c0_67] : memref<1x32xf32, #tpu.memory_space<vmem>>, vector<1x32xf32>
    %cst_68 = arith.constant dense<0.000000e+00> : vector<24xf32>
    %137 = vector.multi_reduction <add>, %134, %cst_68 [1] : vector<24x32xf32> to vector<24xf32>
    %138 = vector.shape_cast %137 : vector<24xf32> to vector<24x1xf32>
    %cst_69 = arith.constant 3.200000e+01 : f32
    %139 = vector.broadcast %cst_69 : f32 to vector<24x1xf32>
    %140 = arith.divf %138, %139 : vector<24x1xf32>
    %141 = vector.broadcast %140 : vector<24x1xf32> to vector<24x32xf32>
    %142 = arith.subf %134, %141 : vector<24x32xf32>
    %143 = arith.mulf %142, %142 : vector<24x32xf32>
    %cst_70 = arith.constant dense<0.000000e+00> : vector<24xf32>
    %144 = vector.multi_reduction <add>, %143, %cst_70 [1] : vector<24x32xf32> to vector<24xf32>
    %145 = vector.shape_cast %144 : vector<24xf32> to vector<24x1xf32>
    %cst_71 = arith.constant 3.200000e+01 : f32
    %146 = vector.broadcast %cst_71 : f32 to vector<24x1xf32>
    %147 = arith.divf %145, %146 : vector<24x1xf32>
    %148 = vector.broadcast %140 : vector<24x1xf32> to vector<24x32xf32>
    %149 = arith.subf %134, %148 : vector<24x32xf32>
    %cst_72 = arith.constant 9.99999997E-7 : f32
    %150 = vector.broadcast %cst_72 : f32 to vector<24x1xf32>
    %151 = arith.addf %147, %150 : vector<24x1xf32>
    %152 = math.rsqrt %151 : vector<24x1xf32>
    %153 = vector.broadcast %152 : vector<24x1xf32> to vector<24x32xf32>
    %154 = arith.mulf %149, %153 : vector<24x32xf32>
    %155 = vector.broadcast %135 : vector<1x32xf32> to vector<24x32xf32>
    %156 = arith.mulf %154, %155 : vector<24x32xf32>
    %157 = vector.broadcast %136 : vector<1x32xf32> to vector<24x32xf32>
    %158 = arith.addf %156, %157 : vector<24x32xf32>
    %159 = arith.truncf %158 : vector<24x32xf32> to vector<24x32xbf16>
    %c0_73 = arith.constant 0 : index
    %c0_74 = arith.constant 0 : index
    %160 = vector.load %arg18[%c0_73, %c0_74] : memref<32x256xbf16, #tpu.memory_space<vmem>>, vector<32x256xbf16>
    %cst_75 = arith.constant dense<0.000000e+00> : vector<24x256xf32>
    %161 = tpu.matmul %159, %160, %cst_75 {dimension_numbers = #tpu.dot_dimension_numbers<[1], [0], [0], [1], [0, 0, 1, 1], [], []>} : vector<24x32xbf16>, vector<32x256xbf16>, vector<24x256xf32> -> vector<24x256xf32>
    %c0_76 = arith.constant 0 : index
    %c0_77 = arith.constant 0 : index
    %162 = vector.load %arg19[%c0_76, %c0_77] : memref<1x256xf32, #tpu.memory_space<vmem>>, vector<1x256xf32>
    %163 = vector.broadcast %162 : vector<1x256xf32> to vector<24x256xf32>
    %164 = arith.addf %161, %163 : vector<24x256xf32>
    %c0_78 = arith.constant 0 : index
    %c0_79 = arith.constant 0 : index
    %c0_80 = arith.constant 0 : index
    %165 = vector.load %arg20[%c0_78, %c0_79, %c0_80] : memref<1x24x256xf32, #tpu.memory_space<vmem>>, vector<1x24x256xf32>
    %166 = vector.shape_cast %165 : vector<1x24x256xf32> to vector<24x256xf32>
    %167 = vector.shape_cast %164 : vector<24x256xf32> to vector<1x24x256xf32>
    tpu.vector_store %arg20[%c0_78, %c0_79, %c0_80], %167 {strides = array<i32>} : memref<1x24x256xf32, #tpu.memory_space<vmem>>, vector<1x24x256xf32>,
    return
  }
  func.func @transform_0(%arg0: i32) -> (i32, i32, i32) {
    %c0_i32 = arith.constant 0 : i32
    %c0_i32_0 = arith.constant 0 : i32
    %c0_i32_1 = arith.constant 0 : i32
    return %arg0, %c0_i32, %c0_i32_0 : i32, i32, i32
  }
  func.func @transform_1(%arg0: i32) -> (i32, i32) {
    %c0_i32 = arith.constant 0 : i32
    %c0_i32_0 = arith.constant 0 : i32
    %c0_i32_1 = arith.constant 0 : i32
    return %c0_i32, %c0_i32_0 : i32, i32
  }
  func.func @transform_2(%arg0: i32) -> (i32, i32) {
    %c0_i32 = arith.constant 0 : i32
    %c0_i32_0 = arith.constant 0 : i32
    %c0_i32_1 = arith.constant 0 : i32
    return %c0_i32, %c0_i32_0 : i32, i32
  }
  func.func @transform_3(%arg0: i32) -> (i32, i32, i32) {
    %c0_i32 = arith.constant 0 : i32
    %c0_i32_0 = arith.constant 0 : i32
    %c0_i32_1 = arith.constant 0 : i32
    %c0_i32_2 = arith.constant 0 : i32
    return %c0_i32, %c0_i32_0, %c0_i32_1 : i32, i32, i32
  }
  func.func @transform_4(%arg0: i32) -> (i32, i32, i32) {
    %c0_i32 = arith.constant 0 : i32
    %c0_i32_0 = arith.constant 0 : i32
    %c0_i32_1 = arith.constant 0 : i32
    %c0_i32_2 = arith.constant 0 : i32
    return %c0_i32, %c0_i32_0, %c0_i32_1 : i32, i32, i32
  }
  func.func @transform_5(%arg0: i32) -> (i32, i32, i32) {
    %c0_i32 = arith.constant 0 : i32
    %c0_i32_0 = arith.constant 0 : i32
    %c0_i32_1 = arith.constant 0 : i32
    %c0_i32_2 = arith.constant 0 : i32
    return %c0_i32, %c0_i32_0, %c0_i32_1 : i32, i32, i32
  }
  func.func @transform_6(%arg0: i32) -> (i32, i32, i32) {
    %c0_i32 = arith.constant 0 : i32
    %c0_i32_0 = arith.constant 0 : i32
    %c0_i32_1 = arith.constant 0 : i32
    %c0_i32_2 = arith.constant 0 : i32
    return %c0_i32, %c0_i32_0, %c0_i32_1 : i32, i32, i32
  }
  func.func @transform_7(%arg0: i32) -> (i32, i32, i32) {
    %c0_i32 = arith.constant 0 : i32
    %c0_i32_0 = arith.constant 0 : i32
    %c0_i32_1 = arith.constant 0 : i32
    %c0_i32_2 = arith.constant 0 : i32
    return %c0_i32, %c0_i32_0, %c0_i32_1 : i32, i32, i32
  }
  func.func @transform_8(%arg0: i32) -> (i32, i32, i32) {
    %c0_i32 = arith.constant 0 : i32
    %c0_i32_0 = arith.constant 0 : i32
    %c0_i32_1 = arith.constant 0 : i32
    %c0_i32_2 = arith.constant 0 : i32
    return %c0_i32, %c0_i32_0, %c0_i32_1 : i32, i32, i32
  }
  func.func @transform_9(%arg0: i32) -> (i32, i32, i32) {
    %c0_i32 = arith.constant 0 : i32
    %c0_i32_0 = arith.constant 0 : i32
    %c0_i32_1 = arith.constant 0 : i32
    %c0_i32_2 = arith.constant 0 : i32
    return %c0_i32, %c0_i32_0, %c0_i32_1 : i32, i32, i32
  }
  func.func @transform_10(%arg0: i32) -> (i32, i32, i32) {
    %c0_i32 = arith.constant 0 : i32
    %c0_i32_0 = arith.constant 0 : i32
    %c0_i32_1 = arith.constant 0 : i32
    %c0_i32_2 = arith.constant 0 : i32
    return %c0_i32, %c0_i32_0, %c0_i32_1 : i32, i32, i32
  }
  func.func @transform_11(%arg0: i32) -> (i32, i32, i32) {
    %c0_i32 = arith.constant 0 : i32
    %c0_i32_0 = arith.constant 0 : i32
    %c0_i32_1 = arith.constant 0 : i32
    %c0_i32_2 = arith.constant 0 : i32
    return %c0_i32, %c0_i32_0, %c0_i32_1 : i32, i32, i32
  }
  func.func @transform_12(%arg0: i32) -> (i32, i32, i32) {
    %c0_i32 = arith.constant 0 : i32
    %c0_i32_0 = arith.constant 0 : i32
    %c0_i32_1 = arith.constant 0 : i32
    %c0_i32_2 = arith.constant 0 : i32
    return %c0_i32, %c0_i32_0, %c0_i32_1 : i32, i32, i32
  }
  func.func @transform_13(%arg0: i32) -> (i32, i32, i32) {
    %c0_i32 = arith.constant 0 : i32
    %c0_i32_0 = arith.constant 0 : i32
    %c0_i32_1 = arith.constant 0 : i32
    %c0_i32_2 = arith.constant 0 : i32
    return %c0_i32, %c0_i32_0, %c0_i32_1 : i32, i32, i32
  }
  func.func @transform_14(%arg0: i32) -> (i32, i32, i32) {
    %c0_i32 = arith.constant 0 : i32
    %c0_i32_0 = arith.constant 0 : i32
    %c0_i32_1 = arith.constant 0 : i32
    %c0_i32_2 = arith.constant 0 : i32
    return %c0_i32, %c0_i32_0, %c0_i32_1 : i32, i32, i32
  }
  func.func @transform_15(%arg0: i32) -> (i32, i32) {
    %c0_i32 = arith.constant 0 : i32
    %c0_i32_0 = arith.constant 0 : i32
    %c0_i32_1 = arith.constant 0 : i32
    return %c0_i32, %c0_i32_0 : i32, i32
  }
  func.func @transform_16(%arg0: i32) -> (i32, i32) {
    %c0_i32 = arith.constant 0 : i32
    %c0_i32_0 = arith.constant 0 : i32
    %c0_i32_1 = arith.constant 0 : i32
    return %c0_i32, %c0_i32_0 : i32, i32
  }
  func.func @transform_17(%arg0: i32) -> (i32, i32) {
    %c0_i32 = arith.constant 0 : i32
    %c0_i32_0 = arith.constant 0 : i32
    %c0_i32_1 = arith.constant 0 : i32
    return %c0_i32, %c0_i32_0 : i32, i32
  }
  func.func @transform_18(%arg0: i32) -> (i32, i32) {
    %c0_i32 = arith.constant 0 : i32
    %c0_i32_0 = arith.constant 0 : i32
    %c0_i32_1 = arith.constant 0 : i32
    return %c0_i32, %c0_i32_0 : i32, i32
  }
  func.func @transform_19(%arg0: i32) -> (i32, i32, i32) {
    %c0_i32 = arith.constant 0 : i32
    %c0_i32_0 = arith.constant 0 : i32
    %c0_i32_1 = arith.constant 0 : i32
    return %arg0, %c0_i32, %c0_i32_0 : i32, i32, i32
  }
}

</mosaic_0001>

<llo_original>
// kernel: mae_forward.3
$region0: #{mae_forward.3}
  #allocation0 [shape = 'u32[]', space=smem, size = 0x4, offset = 0x4, fixed_abs, tag = 'smem constant byte address 0x4 - core index']
  #allocation1 [shape = 'u32[144,128]{1,0:T(1,128)}', space=vmem, size = 0x12000, scoped, tag = 'internal scratch']
  %s0 = inlined_call_operand.vmem [shape: f32[2,24,32], index: 0, kind: input, shape index: {}]
  %s1 = inlined_call_operand.vmem [shape: f32[96,32], index: 1, kind: input, shape index: {}]
  %s2 = inlined_call_operand.vmem [shape: f32[96,24], index: 2, kind: input, shape index: {}]
  %s3 = inlined_call_operand.vmem [shape: f32[1,1,32], index: 3, kind: input, shape index: {}]
  %s4 = inlined_call_operand.vmem [shape: f32[1,1,32], index: 4, kind: input, shape index: {}]
  %s5 = inlined_call_operand.vmem [shape: bf16[1,32,96], index: 5, kind: input, shape index: {}]
  %s6 = inlined_call_operand.vmem [shape: f32[1,1,96], index: 6, kind: input, shape index: {}]
  %s7 = inlined_call_operand.vmem [shape: bf16[1,32,32], index: 7, kind: input, shape index: {}]
  %s8 = inlined_call_operand.vmem [shape: f32[1,1,32], index: 8, kind: input, shape index: {}]
  %s9 = inlined_call_operand.vmem [shape: f32[1,1,32], index: 9, kind: input, shape index: {}]
  %s10 = inlined_call_operand.vmem [shape: f32[1,1,32], index: 10, kind: input, shape index: {}]
  %s11 = inlined_call_operand.vmem [shape: bf16[1,32,128], index: 11, kind: input, shape index: {}]
  %s12 = inlined_call_operand.vmem [shape: f32[1,1,128], index: 12, kind: input, shape index: {}]
  %s13 = inlined_call_operand.vmem [shape: bf16[1,128,32], index: 13, kind: input, shape index: {}]
  %s14 = inlined_call_operand.vmem [shape: f32[1,1,32], index: 14, kind: input, shape index: {}]
  %s15 = inlined_call_operand.vmem [shape: f32[1,32], index: 15, kind: input, shape index: {}]
  %s16 = inlined_call_operand.vmem [shape: f32[1,32], index: 16, kind: input, shape index: {}]
  %s17 = inlined_call_operand.vmem [shape: bf16[32,256], index: 17, kind: input, shape index: {}]
  %s18 = inlined_call_operand.vmem [shape: f32[1,256], index: 18, kind: input, shape index: {}]
  %s19 = inlined_call_operand.vmem [shape: f32[2,24,256], index: 19, kind: output, shape index: {}]
  %s20 = sld [smem:[#allocation0]]
  $region109: #{mae_forward.3} parent=0
    _
  %s22 = ssub.s32 1, %s20
  %s23 = scalar_select 0, %s22, %s20
  loop: start=0, step=1, limit=4
  $region2: #{mae_forward.3} parent=0 // loop_pre_header
    _
  $region3: #{mae_forward.3} parent=0 // loop_header
    %s25 = sphi 0, %s29
    %p26 = scmp.ge.s32.totalorder %s25, 4
    %s35 = sphi 0, %s37
    %s38 = sphi 0, %s35
    %s39 = sphi 0, %s38
    %s55 = sphi 0, %s39
    %s59 = sphi 0, %s59
    %s61 = sphi 0, %s59
    %s62 = sphi 0, %s61
    %s76 = sphi 0, %s62
    %s80 = sphi 0, %s80
    %s82 = sphi 0, %s80
    %s83 = sphi 0, %s82
    %s97 = sphi 0, %s83
    %s101 = sphi 0, %s101
    %s103 = sphi 0, %s101
    %s104 = sphi 0, %s103
    %s118 = sphi 0, %s104
    %s122 = sphi 0, %s122
    %s124 = sphi 0, %s122
    %s125 = sphi 0, %s124
    %s139 = sphi 0, %s125
    %s143 = sphi 0, %s143
    %s145 = sphi 0, %s143
    %s146 = sphi 0, %s145
    %s160 = sphi 0, %s146
    %s164 = sphi 0, %s164
    %s166 = sphi 0, %s164
    %s167 = sphi 0, %s166
    %s181 = sphi 0, %s167
    %s185 = sphi 0, %s185
    %s187 = sphi 0, %s185
    %s188 = sphi 0, %s187
    %s202 = sphi 0, %s188
    %s206 = sphi 0, %s206
    %s208 = sphi 0, %s206
    %s209 = sphi 0, %s208
    %s223 = sphi 0, %s209
    %s227 = sphi 0, %s227
    %s229 = sphi 0, %s227
    %s230 = sphi 0, %s229
    %s244 = sphi 0, %s230
    %s248 = sphi 0, %s248
    %s250 = sphi 0, %s248
    %s251 = sphi 0, %s250
    %s265 = sphi 0, %s251
    %s269 = sphi 0, %s269
    %s271 = sphi 0, %s269
    %s272 = sphi 0, %s271
    %s286 = sphi 0, %s272
    %s290 = sphi 0, %s290
    %s292 = sphi 0, %s290
    %s293 = sphi 0, %s292
    %s307 = sphi 0, %s293
    %s311 = sphi 0, %s311
    %s313 = sphi 0, %s311
    %s314 = sphi 0, %s313
    %s328 = sphi 0, %s314
    %s332 = sphi 0, %s332
    %s334 = sphi 0, %s332
    %s335 = sphi 0, %s334
    %s349 = sphi 0, %s335
    %s353 = sphi 0, %s353
    %s355 = sphi 0, %s353
    %s356 = sphi 0, %s355
    %s370 = sphi 0, %s356
    %s374 = sphi 0, %s374
    %s376 = sphi 0, %s374
    %s377 = sphi 0, %s376
    %s391 = sphi 0, %s377
    %s395 = sphi 0, %s395
    %s397 = sphi 0, %s395
    %s398 = sphi 0, %s397
    %s412 = sphi 0, %s398
    %s416 = sphi 0, %s416
    %s418 = sphi 0, %s416
    %s419 = sphi 0, %s418
    %s433 = sphi 0, %s419
    %s439 = sphi 0, %s441
    %s442 = sphi 0, %s439
    %s443 = sphi 0, %s442
    %s459 = sphi 0, %s443
  $region4: #{mae_forward.3} parent=0 // loop_header_branch
    %28 = sbr.rel (%p26) target = $region8
  $region5: #{mae_forward.3} parent=0 // loop_body
    %s30 = ssub.s32 %s25, 1
    %s31 = ssub.s32 %s25, 2
    %s32 = sadd.s32 %s25, 1
    %s33 = ssub.s32 %s25, %s32
    %p34 = scmp.eq.s32.totalorder %s33, 0
    %s36 = sadd.s32 %s35, 1
    %s37 = scalar_select %p34, %s35, %s36
    %p40 = pneg %p34
    %p41 = scmp.eq.s32.totalorder %s25, 1
    %p42 = por %p40, %p41
    %p43 = scmp.ne.s32.totalorder %s35, %s38
    %p44 = scmp.eq.s32.totalorder %s25, 0
    %p45 = por %p43, %p44
    %p46 = scmp.ne.s32.totalorder %s35, %s38
    %p47 = scmp.eq.s32.totalorder %s30, 1
    %p48 = por %p46, %p47
    %p49 = scmp.ne.s32.totalorder %s38, %s39
    %p50 = scmp.eq.s32.totalorder %s30, 0
    %p51 = por %p49, %p50
    %p52 = scmp.ne.s32.totalorder %s38, %s39
    %p53 = scmp.eq.s32.totalorder %s31, 1
    %p54 = por %p52, %p53
    %p56 = scmp.ne.s32.totalorder %s39, %s55
    %p57 = scmp.eq.s32.totalorder %s31, 0
    %p58 = por %p56, %p57
    %s60 = sadd.s32 %s59, 1
    %p63 = scmp.eq.s32.totalorder %s25, 1
    %p64 = scmp.ne.s32.totalorder %s59, %s61
    %p65 = scmp.eq.s32.totalorder %s25, 0
    %p66 = por %p64, %p65
    %p67 = scmp.ne.s32.totalorder %s59, %s61
    %p68 = scmp.eq.s32.totalorder %s30, 1
    %p69 = por %p67, %p68
    %p70 = scmp.ne.s32.totalorder %s61, %s62
    %p71 = scmp.eq.s32.totalorder %s30, 0
    %p72 = por %p70, %p71
    %p73 = scmp.ne.s32.totalorder %s61, %s62
    %p74 = scmp.eq.s32.totalorder %s31, 1
    %p75 = por %p73, %p74
    %p77 = scmp.ne.s32.totalorder %s62, %s76
    %p78 = scmp.eq.s32.totalorder %s31, 0
    %p79 = por %p77, %p78
    %s81 = sadd.s32 %s80, 1
    %p84 = scmp.eq.s32.totalorder %s25, 1
    %p85 = scmp.ne.s32.totalorder %s80, %s82
    %p86 = scmp.eq.s32.totalorder %s25, 0
    %p87 = por %p85, %p86
    %p88 = scmp.ne.s32.totalorder %s80, %s82
    %p89 = scmp.eq.s32.totalorder %s30, 1
    %p90 = por %p88, %p89
    %p91 = scmp.ne.s32.totalorder %s82, %s83
    %p92 = scmp.eq.s32.totalorder %s30, 0
    %p93 = por %p91, %p92
    %p94 = scmp.ne.s32.totalorder %s82, %s83
    %p95 = scmp.eq.s32.totalorder %s31, 1
    %p96 = por %p94, %p95
    %p98 = scmp.ne.s32.totalorder %s83, %s97
    %p99 = scmp.eq.s32.totalorder %s31, 0
    %p100 = por %p98, %p99
    %s102 = sadd.s32 %s101, 1
    %p105 = scmp.eq.s32.totalorder %s25, 1
    %p106 = scmp.ne.s32.totalorder %s101, %s103
    %p107 = scmp.eq.s32.totalorder %s25, 0
    %p108 = por %p106, %p107
    %p109 = scmp.ne.s32.totalorder %s101, %s103
    %p110 = scmp.eq.s32.totalorder %s30, 1
    %p111 = por %p109, %p110
    %p112 = scmp.ne.s32.totalorder %s103, %s104
    %p113 = scmp.eq.s32.totalorder %s30, 0
    %p114 = por %p112, %p113
    %p115 = scmp.ne.s32.totalorder %s103, %s104
    %p116 = scmp.eq.s32.totalorder %s31, 1
    %p117 = por %p115, %p116
    %p119 = scmp.ne.s32.totalorder %s104, %s118
    %p120 = scmp.eq.s32.totalorder %s31, 0
    %p121 = por %p119, %p120
    %s123 = sadd.s32 %s122, 1
    %p126 = scmp.eq.s32.totalorder %s25, 1
    %p127 = scmp.ne.s32.totalorder %s122, %s124
    %p128 = scmp.eq.s32.totalorder %s25, 0
    %p129 = por %p127, %p128
    %p130 = scmp.ne.s32.totalorder %s122, %s124
    %p131 = scmp.eq.s32.totalorder %s30, 1
    %p132 = por %p130, %p131
    %p133 = scmp.ne.s32.totalorder %s124, %s125
    %p134 = scmp.eq.s32.totalorder %s30, 0
    %p135 = por %p133, %p134
    %p136 = scmp.ne.s32.totalorder %s124, %s125
    %p137 = scmp.eq.s32.totalorder %s31, 1
    %p138 = por %p136, %p137
    %p140 = scmp.ne.s32.totalorder %s125, %s139
    %p141 = scmp.eq.s32.totalorder %s31, 0
    %p142 = por %p140, %p141
    %s144 = sadd.s32 %s143, 1
    %p147 = scmp.eq.s32.totalorder %s25, 1
    %p148 = scmp.ne.s32.totalorder %s143, %s145
    %p149 = scmp.eq.s32.totalorder %s25, 0
    %p150 = por %p148, %p149
    %p151 = scmp.ne.s32.totalorder %s143, %s145
    %p152 = scmp.eq.s32.totalorder %s30, 1
    %p153 = por %p151, %p152
    %p154 = scmp.ne.s32.totalorder %s145, %s146
    %p155 = scmp.eq.s32.totalorder %s30, 0
    %p156 = por %p154, %p155
    %p157 = scmp.ne.s32.totalorder %s145, %s146
    %p158 = scmp.eq.s32.totalorder %s31, 1
    %p159 = por %p157, %p158
    %p161 = scmp.ne.s32.totalorder %s146, %s160
    %p162 = scmp.eq.s32.totalorder %s31, 0
    %p163 = por %p161, %p162
    %s165 = sadd.s32 %s164, 1
    %p168 = scmp.eq.s32.totalorder %s25, 1
    %p169 = scmp.ne.s32.totalorder %s164, %s166
    %p170 = scmp.eq.s32.totalorder %s25, 0
    %p171 = por %p169, %p170
    %p172 = scmp.ne.s32.totalorder %s164, %s166
    %p173 = scmp.eq.s32.totalorder %s30, 1
    %p174 = por %p172, %p173
    %p175 = scmp.ne.s32.totalorder %s166, %s167
    %p176 = scmp.eq.s32.totalorder %s30, 0
    %p177 = por %p175, %p176
    %p178 = scmp.ne.s32.totalorder %s166, %s167
    %p179 = scmp.eq.s32.totalorder %s31, 1
    %p180 = por %p178, %p179
    %p182 = scmp.ne.s32.totalorder %s167, %s181
    %p183 = scmp.eq.s32.totalorder %s31, 0
    %p184 = por %p182, %p183
    %s186 = sadd.s32 %s185, 1
    %p189 = scmp.eq.s32.totalorder %s25, 1
    %p190 = scmp.ne.s32.totalorder %s185, %s187
    %p191 = scmp.eq.s32.totalorder %s25, 0
    %p192 = por %p190, %p191
    %p193 = scmp.ne.s32.totalorder %s185, %s187
    %p194 = scmp.eq.s32.totalorder %s30, 1
    %p195 = por %p193, %p194
    %p196 = scmp.ne.s32.totalorder %s187, %s188
    %p197 = scmp.eq.s32.totalorder %s30, 0
    %p198 = por %p196, %p197
    %p199 = scmp.ne.s32.totalorder %s187, %s188
    %p200 = scmp.eq.s32.totalorder %s31, 1
    %p201 = por %p199, %p200
    %p203 = scmp.ne.s32.totalorder %s188, %s202
    %p204 = scmp.eq.s32.totalorder %s31, 0
    %p205 = por %p203, %p204
    %s207 = sadd.s32 %s206, 1
    %p210 = scmp.eq.s32.totalorder %s25, 1
    %p211 = scmp.ne.s32.totalorder %s206, %s208
    %p212 = scmp.eq.s32.totalorder %s25, 0
    %p213 = por %p211, %p212
    %p214 = scmp.ne.s32.totalorder %s206, %s208
    %p215 = scmp.eq.s32.totalorder %s30, 1
    %p216 = por %p214, %p215
    %p217 = scmp.ne.s32.totalorder %s208, %s209
    %p218 = scmp.eq.s32.totalorder %s30, 0
    %p219 = por %p217, %p218
    %p220 = scmp.ne.s32.totalorder %s208, %s209
    %p221 = scmp.eq.s32.totalorder %s31, 1
    %p222 = por %p220, %p221
    %p224 = scmp.ne.s32.totalorder %s209, %s223
    %p225 = scmp.eq.s32.totalorder %s31, 0
    %p226 = por %p224, %p225
    %s228 = sadd.s32 %s227, 1
    %p231 = scmp.eq.s32.totalorder %s25, 1
    %p232 = scmp.ne.s32.totalorder %s227, %s229
    %p233 = scmp.eq.s32.totalorder %s25, 0
    %p234 = por %p232, %p233
    %p235 = scmp.ne.s32.totalorder %s227, %s229
    %p236 = scmp.eq.s32.totalorder %s30, 1
    %p237 = por %p235, %p236
    %p238 = scmp.ne.s32.totalorder %s229, %s230
    %p239 = scmp.eq.s32.totalorder %s30, 0
    %p240 = por %p238, %p239
    %p241 = scmp.ne.s32.totalorder %s229, %s230
    %p242 = scmp.eq.s32.totalorder %s31, 1
    %p243 = por %p241, %p242
    %p245 = scmp.ne.s32.totalorder %s230, %s244
    %p246 = scmp.eq.s32.totalorder %s31, 0
    %p247 = por %p245, %p246
    %s249 = sadd.s32 %s248, 1
    %p252 = scmp.eq.s32.totalorder %s25, 1
    %p253 = scmp.ne.s32.totalorder %s248, %s250
    %p254 = scmp.eq.s32.totalorder %s25, 0
    %p255 = por %p253, %p254
    %p256 = scmp.ne.s32.totalorder %s248, %s250
    %p257 = scmp.eq.s32.totalorder %s30, 1
    %p258 = por %p256, %p257
    %p259 = scmp.ne.s32.totalorder %s250, %s251
    %p260 = scmp.eq.s32.totalorder %s30, 0
    %p261 = por %p259, %p260
    %p262 = scmp.ne.s32.totalorder %s250, %s251
    %p263 = scmp.eq.s32.totalorder %s31, 1
    %p264 = por %p262, %p263
    %p266 = scmp.ne.s32.totalorder %s251, %s265
    %p267 = scmp.eq.s32.totalorder %s31, 0
    %p268 = por %p266, %p267
    %s270 = sadd.s32 %s269, 1
    %p273 = scmp.eq.s32.totalorder %s25, 1
    %p274 = scmp.ne.s32.totalorder %s269, %s271
    %p275 = scmp.eq.s32.totalorder %s25, 0
    %p276 = por %p274, %p275
    %p277 = scmp.ne.s32.totalorder %s269, %s271
    %p278 = scmp.eq.s32.totalorder %s30, 1
    %p279 = por %p277, %p278
    %p280 = scmp.ne.s32.totalorder %s271, %s272
    %p281 = scmp.eq.s32.totalorder %s30, 0
    %p282 = por %p280, %p281
    %p283 = scmp.ne.s32.totalorder %s271, %s272
    %p284 = scmp.eq.s32.totalorder %s31, 1
    %p285 = por %p283, %p284
    %p287 = scmp.ne.s32.totalorder %s272, %s286
    %p288 = scmp.eq.s32.totalorder %s31, 0
    %p289 = por %p287, %p288
    %s291 = sadd.s32 %s290, 1
    %p294 = scmp.eq.s32.totalorder %s25, 1
    %p295 = scmp.ne.s32.totalorder %s290, %s292
    %p296 = scmp.eq.s32.totalorder %s25, 0
    %p297 = por %p295, %p296
    %p298 = scmp.ne.s32.totalorder %s290, %s292
    %p299 = scmp.eq.s32.totalorder %s30, 1
    %p300 = por %p298, %p299
    %p301 = scmp.ne.s32.totalorder %s292, %s293
    %p302 = scmp.eq.s32.totalorder %s30, 0
    %p303 = por %p301, %p302
    %p304 = scmp.ne.s32.totalorder %s292, %s293
    %p305 = scmp.eq.s32.totalorder %s31, 1
    %p306 = por %p304, %p305
    %p308 = scmp.ne.s32.totalorder %s293, %s307
    %p309 = scmp.eq.s32.totalorder %s31, 0
    %p310 = por %p308, %p309
    %s312 = sadd.s32 %s311, 1
    %p315 = scmp.eq.s32.totalorder %s25, 1
    %p316 = scmp.ne.s32.totalorder %s311, %s313
    %p317 = scmp.eq.s32.totalorder %s25, 0
    %p318 = por %p316, %p317
    %p319 = scmp.ne.s32.totalorder %s311, %s313
    %p320 = scmp.eq.s32.totalorder %s30, 1
    %p321 = por %p319, %p320
    %p322 = scmp.ne.s32.totalorder %s313, %s314
    %p323 = scmp.eq.s32.totalorder %s30, 0
    %p324 = por %p322, %p323
    %p325 = scmp.ne.s32.totalorder %s313, %s314
    %p326 = scmp.eq.s32.totalorder %s31, 1
    %p327 = por %p325, %p326
    %p329 = scmp.ne.s32.totalorder %s314, %s328
    %p330 = scmp.eq.s32.totalorder %s31, 0
    %p331 = por %p329, %p330
    %s333 = sadd.s32 %s332, 1
    %p336 = scmp.eq.s32.totalorder %s25, 1
    %p337 = scmp.ne.s32.totalorder %s332, %s334
    %p338 = scmp.eq.s32.totalorder %s25, 0
    %p339 = por %p337, %p338
    %p340 = scmp.ne.s32.totalorder %s332, %s334
    %p341 = scmp.eq.s32.totalorder %s30, 1
    %p342 = por %p340, %p341
    %p343 = scmp.ne.s32.totalorder %s334, %s335
    %p344 = scmp.eq.s32.totalorder %s30, 0
    %p345 = por %p343, %p344
    %p346 = scmp.ne.s32.totalorder %s334, %s335
    %p347 = scmp.eq.s32.totalorder %s31, 1
    %p348 = por %p346, %p347
    %p350 = scmp.ne.s32.totalorder %s335, %s349
    %p351 = scmp.eq.s32.totalorder %s31, 0
    %p352 = por %p350, %p351
    %s354 = sadd.s32 %s353, 1
    %p357 = scmp.eq.s32.totalorder %s25, 1
    %p358 = scmp.ne.s32.totalorder %s353, %s355
    %p359 = scmp.eq.s32.totalorder %s25, 0
    %p360 = por %p358, %p359
    %p361 = scmp.ne.s32.totalorder %s353, %s355
    %p362 = scmp.eq.s32.totalorder %s30, 1
    %p363 = por %p361, %p362
    %p364 = scmp.ne.s32.totalorder %s355, %s356
    %p365 = scmp.eq.s32.totalorder %s30, 0
    %p366 = por %p364, %p365
    %p367 = scmp.ne.s32.totalorder %s355, %s356
    %p368 = scmp.eq.s32.totalorder %s31, 1
    %p369 = por %p367, %p368
    %p371 = scmp.ne.s32.totalorder %s356, %s370
    %p372 = scmp.eq.s32.totalorder %s31, 0
    %p373 = por %p371, %p372
    %s375 = sadd.s32 %s374, 1
    %p378 = scmp.eq.s32.totalorder %s25, 1
    %p379 = scmp.ne.s32.totalorder %s374, %s376
    %p380 = scmp.eq.s32.totalorder %s25, 0
    %p381 = por %p379, %p380
    %p382 = scmp.ne.s32.totalorder %s374, %s376
    %p383 = scmp.eq.s32.totalorder %s30, 1
    %p384 = por %p382, %p383
    %p385 = scmp.ne.s32.totalorder %s376, %s377
    %p386 = scmp.eq.s32.totalorder %s30, 0
    %p387 = por %p385, %p386
    %p388 = scmp.ne.s32.totalorder %s376, %s377
    %p389 = scmp.eq.s32.totalorder %s31, 1
    %p390 = por %p388, %p389
    %p392 = scmp.ne.s32.totalorder %s377, %s391
    %p393 = scmp.eq.s32.totalorder %s31, 0
    %p394 = por %p392, %p393
    %s396 = sadd.s32 %s395, 1
    %p399 = scmp.eq.s32.totalorder %s25, 1
    %p400 = scmp.ne.s32.totalorder %s395, %s397
    %p401 = scmp.eq.s32.totalorder %s25, 0
    %p402 = por %p400, %p401
    %p403 = scmp.ne.s32.totalorder %s395, %s397
    %p404 = scmp.eq.s32.totalorder %s30, 1
    %p405 = por %p403, %p404
    %p406 = scmp.ne.s32.totalorder %s397, %s398
    %p407 = scmp.eq.s32.totalorder %s30, 0
    %p408 = por %p406, %p407
    %p409 = scmp.ne.s32.totalorder %s397, %s398
    %p410 = scmp.eq.s32.totalorder %s31, 1
    %p411 = por %p409, %p410
    %p413 = scmp.ne.s32.totalorder %s398, %s412
    %p414 = scmp.eq.s32.totalorder %s31, 0
    %p415 = por %p413, %p414
    %s417 = sadd.s32 %s416, 1
    %p420 = scmp.eq.s32.totalorder %s25, 1
    %p421 = scmp.ne.s32.totalorder %s416, %s418
    %p422 = scmp.eq.s32.totalorder %s25, 0
    %p423 = por %p421, %p422
    %p424 = scmp.ne.s32.totalorder %s416, %s418
    %p425 = scmp.eq.s32.totalorder %s30, 1
    %p426 = por %p424, %p425
    %p427 = scmp.ne.s32.totalorder %s418, %s419
    %p428 = scmp.eq.s32.totalorder %s30, 0
    %p429 = por %p427, %p428
    %p430 = scmp.ne.s32.totalorder %s418, %s419
    %p431 = scmp.eq.s32.totalorder %s31, 1
    %p432 = por %p430, %p431
    %p434 = scmp.ne.s32.totalorder %s419, %s433
    %p435 = scmp.eq.s32.totalorder %s31, 0
    %p436 = por %p434, %p435
    %s437 = ssub.s32 %s25, %s32
    %p438 = scmp.eq.s32.totalorder %s437, 0
    %s440 = sadd.s32 %s439, 1
    %s441 = scalar_select %p438, %s439, %s440
    %p444 = pneg %p438
    %p445 = scmp.eq.s32.totalorder %s25, 1
    %p446 = por %p444, %p445
    %p447 = scmp.ne.s32.totalorder %s439, %s442
    %p448 = scmp.eq.s32.totalorder %s25, 0
    %p449 = por %p447, %p448
    %p450 = scmp.ne.s32.totalorder %s439, %s442
    %p451 = scmp.eq.s32.totalorder %s30, 1
    %p452 = por %p450, %p451
    %p453 = scmp.ne.s32.totalorder %s442, %s443
    %p454 = scmp.eq.s32.totalorder %s30, 0
    %p455 = por %p453, %p454
    %p456 = scmp.ne.s32.totalorder %s442, %s443
    %p457 = scmp.eq.s32.totalorder %s31, 1
    %p458 = por %p456, %p457
    %p460 = scmp.ne.s32.totalorder %s443, %s459
    %p461 = scmp.eq.s32.totalorder %s31, 0
    %p462 = por %p460, %p461
    %p463 = scmp.le.s32.totalorder 1, %s25
    %p464 = scmp.lt.s32.totalorder %s25, 3
    %p465 = pnand %p463, %p464
    %p466 = pneg %p465
    // Predicated region
    $region9: #{mae_forward.3} parent=5 // pred_check
      _
    $region10: #{mae_forward.3} parent=5 // pred_check_branch
      %468 = sbr.rel (%p465) target = $region12
    $region11: #{mae_forward.3} parent=5 // pred_region
      %s469 = ssub.s32 %s25, 1
      // Predicated region
      $region13: #{mae_forward.3} parent=11 // pred_check
        %p470 = pneg %p72
      $region14: #{mae_forward.3} parent=11 // pred_check_branch
        %472 = sbr.rel (%p470) target = $region16
      $region15: #{mae_forward.3} parent=11 // pred_region
        _
      $region16: #{mae_forward.3} parent=11 // pred_fallthru
        _
      // Predicated region
      $region17: #{mae_forward.3} parent=11 // pred_check
        %p473 = pneg %p93
      $region18: #{mae_forward.3} parent=11 // pred_check_branch
        %475 = sbr.rel (%p473) target = $region20
      $region19: #{mae_forward.3} parent=11 // pred_region
        _
      $region20: #{mae_forward.3} parent=11 // pred_fallthru
        _
      // Predicated region
      $region21: #{mae_forward.3} parent=11 // pred_check
        %p476 = pneg %p114
      $region22: #{mae_forward.3} parent=11 // pred_check_branch
        %478 = sbr.rel (%p476) target = $region24
      $region23: #{mae_forward.3} parent=11 // pred_region
        _
      $region24: #{mae_forward.3} parent=11 // pred_fallthru
        _
      // Predicated region
      $region25: #{mae_forward.3} parent=11 // pred_check
        %p479 = pneg %p135
      $region26: #{mae_forward.3} parent=11 // pred_check_branch
        %481 = sbr.rel (%p479) target = $region28
      $region27: #{mae_forward.3} parent=11 // pred_region
        _
      $region28: #{mae_forward.3} parent=11 // pred_fallthru
        _
      // Predicated region
      $region29: #{mae_forward.3} parent=11 // pred_check
        %p482 = pneg %p156
      $region30: #{mae_forward.3} parent=11 // pred_check_branch
        %484 = sbr.rel (%p482) target = $region32
      $region31: #{mae_forward.3} parent=11 // pred_region
        _
      $region32: #{mae_forward.3} parent=11 // pred_fallthru
        _
      // Predicated region
      $region33: #{mae_forward.3} parent=11 // pred_check
        %p485 = pneg %p177
      $region34: #{mae_forward.3} parent=11 // pred_check_branch
        %487 = sbr.rel (%p485) target = $region36
      $region35: #{mae_forward.3} parent=11 // pred_region
        _
      $region36: #{mae_forward.3} parent=11 // pred_fallthru
        _
      // Predicated region
      $region37: #{mae_forward.3} parent=11 // pred_check
        %p488 = pneg %p198
      $region38: #{mae_forward.3} parent=11 // pred_check_branch
        %490 = sbr.rel (%p488) target = $region40
      $region39: #{mae_forward.3} parent=11 // pred_region
        _
      $region40: #{mae_forward.3} parent=11 // pred_fallthru
        _
      // Predicated region
      $region41: #{mae_forward.3} parent=11 // pred_check
        %p491 = pneg %p219
      $region42: #{mae_forward.3} parent=11 // pred_check_branch
        %493 = sbr.rel (%p491) target = $region44
      $region43: #{mae_forward.3} parent=11 // pred_region
        _
      $region44: #{mae_forward.3} parent=11 // pred_fallthru
        _
      // Predicated region
      $region45: #{mae_forward.3} parent=11 // pred_check
        %p494 = pneg %p240
      $region46: #{mae_forward.3} parent=11 // pred_check_branch
        %496 = sbr.rel (%p494) target = $region48
      $region47: #{mae_forward.3} parent=11 // pred_region
        _
      $region48: #{mae_forward.3} parent=11 // pred_fallthru
        _
      // Predicated region
      $region49: #{mae_forward.3} parent=11 // pred_check
        %p497 = pneg %p261
      $region50: #{mae_forward.3} parent=11 // pred_check_branch
        %499 = sbr.rel (%p497) target = $region52
      $region51: #{mae_forward.3} parent=11 // pred_region
        _
      $region52: #{mae_forward.3} parent=11 // pred_fallthru
        _
      // Predicated region
      $region53: #{mae_forward.3} parent=11 // pred_check
        %p500 = pneg %p282
      $region54: #{mae_forward.3} parent=11 // pred_check_branch
        %502 = sbr.rel (%p500) target = $region56
      $region55: #{mae_forward.3} parent=11 // pred_region
        _
      $region56: #{mae_forward.3} parent=11 // pred_fallthru
        _
      // Predicated region
      $region57: #{mae_forward.3} parent=11 // pred_check
        %p503 = pneg %p303
      $region58: #{mae_forward.3} parent=11 // pred_check_branch
        %505 = sbr.rel (%p503) target = $region60
      $region59: #{mae_forward.3} parent=11 // pred_region
        _
      $region60: #{mae_forward.3} parent=11 // pred_fallthru
        _
      // Predicated region
      $region61: #{mae_forward.3} parent=11 // pred_check
        %p506 = pneg %p324
      $region62: #{mae_forward.3} parent=11 // pred_check_branch
        %508 = sbr.rel (%p506) target = $region64
      $region63: #{mae_forward.3} parent=11 // pred_region
        _
      $region64: #{mae_forward.3} parent=11 // pred_fallthru
        _
      // Predicated region
      $region65: #{mae_forward.3} parent=11 // pred_check
        %p509 = pneg %p345
      $region66: #{mae_forward.3} parent=11 // pred_check_branch
        %511 = sbr.rel (%p509) target = $region68
      $region67: #{mae_forward.3} parent=11 // pred_region
        _
      $region68: #{mae_forward.3} parent=11 // pred_fallthru
        _
      // Predicated region
      $region69: #{mae_forward.3} parent=11 // pred_check
        %p512 = pneg %p366
      $region70: #{mae_forward.3} parent=11 // pred_check_branch
        %514 = sbr.rel (%p512) target = $region72
      $region71: #{mae_forward.3} parent=11 // pred_region
        _
      $region72: #{mae_forward.3} parent=11 // pred_fallthru
        _
      // Predicated region
      $region73: #{mae_forward.3} parent=11 // pred_check
        %p515 = pneg %p387
      $region74: #{mae_forward.3} parent=11 // pred_check_branch
        %517 = sbr.rel (%p515) target = $region76
      $region75: #{mae_forward.3} parent=11 // pred_region
        _
      $region76: #{mae_forward.3} parent=11 // pred_fallthru
        _
      // Predicated region
      $region77: #{mae_forward.3} parent=11 // pred_check
        %p518 = pneg %p408
      $region78: #{mae_forward.3} parent=11 // pred_check_branch
        %520 = sbr.rel (%p518) target = $region80
      $region79: #{mae_forward.3} parent=11 // pred_region
        _
      $region80: #{mae_forward.3} parent=11 // pred_fallthru
        _
      // Predicated region
      $region81: #{mae_forward.3} parent=11 // pred_check
        %p521 = pneg %p429
      $region82: #{mae_forward.3} parent=11 // pred_check_branch
        %523 = sbr.rel (%p521) target = $region84
      $region83: #{mae_forward.3} parent=11 // pred_region
        _
      $region84: #{mae_forward.3} parent=11 // pred_fallthru
        _
    $region12: #{mae_forward.3} parent=5 // pred_fallthru
      _
    %p524 = scmp.lt.s32.totalorder %s25, 2
    // Predicated region
    $region85: #{mae_forward.3} parent=5 // pred_check
      %p525 = pneg %p524
    $region86: #{mae_forward.3} parent=5 // pred_check_branch
      %527 = sbr.rel (%p525) target = $region88
    $region87: #{mae_forward.3} parent=5 // pred_region
      // Predicated region
      $region89: #{mae_forward.3} parent=87 // pred_check
        %p528 = pneg %p45
      $region90: #{mae_forward.3} parent=87 // pred_check_branch
        %530 = sbr.rel (%p528) target = $region92
      $region91: #{mae_forward.3} parent=87 // pred_region
        %p531 = scmp.lt.s32.totalorder %s25, 1
        %s532 = scalar_select %p531, %s25, 1
        %s533 = smul.addr %s532, 3
        %s534 = smul.addr %s533, 8
        %s535 = scalar_lea.vmem %s0, %s534
      $region92: #{mae_forward.3} parent=87 // pred_fallthru
        _
    $region88: #{mae_forward.3} parent=5 // pred_fallthru
      _
    %p536 = scmp.le.s32.totalorder 1, %s25
    %p537 = scmp.lt.s32.totalorder %s25, 3
    %p538 = pnand %p536, %p537
    %p539 = pneg %p538
    // Predicated region
    $region93: #{mae_forward.3} parent=5 // pred_check
      _
    $region94: #{mae_forward.3} parent=5 // pred_check_branch
      %541 = sbr.rel (%p538) target = $region96
    $region95: #{mae_forward.3} parent=5 // pred_region
      %s542 = ssub.s32 %s25, 1
      %p543 = scmp.lt.s32.totalorder %s30, 1
      %s544 = scalar_select %p543, %s30, 1
      %s545 = smul.addr %s544, 3
      %s546 = smul.addr %s545, 8
      %s547 = scalar_lea.vmem %s0, %s546
      %p548 = pneg %p51
      %p549 = pneg %p48
      %p550 = pneg %p72
      %p551 = pneg %p69
      %p552 = pneg %p93
      %p553 = pneg %p90
      %p554 = pneg %p114
      %p555 = pneg %p111
      %p556 = pneg %p135
      %p557 = pneg %p132
      %p558 = pneg %p156
      %p559 = pneg %p153
      %p560 = pneg %p177
      %p561 = pneg %p174
      %p562 = pneg %p198
      %p563 = pneg %p195
      %p564 = pneg %p219
      %p565 = pneg %p216
      %p566 = pneg %p240
      %p567 = pneg %p237
      %p568 = pneg %p261
      %p569 = pneg %p258
      %p570 = pneg %p282
      %p571 = pneg %p279
      %p572 = pneg %p303
      %p573 = pneg %p300
      %p574 = pneg %p324
      %p575 = pneg %p321
      %p576 = pneg %p345
      %p577 = pneg %p342
      %p578 = pneg %p366
      %p579 = pneg %p363
      %p580 = pneg %p387
      %p581 = pneg %p384
      %p582 = pneg %p408
      %p583 = pneg %p405
      %p584 = pneg %p429
      %p585 = pneg %p426
      %p586 = pneg %p455
      %p587 = pneg %p452
      %p588 = scmp.lt.s32.totalorder %s30, 1
      %s589 = scalar_select %p588, %s30, 1
      %s590 = smul.addr %s589, 6
      %s591 = smul.addr %s590, 8
      %s592 = scalar_lea.vmem %s19, %s591
      %p593 = scmp.lt.s32.totalorder %s30, 1
      %s594 = scalar_select %p593, %s30, 1
      %s595 = smul.addr %s594, 3
      %s596 = smul.addr %s595, 8
      %s597 = scalar_lea.vmem %s0, %s596
      %p598 = scmp.lt.s32.totalorder %s30, 1
      %s599 = scalar_select %p598, %s30, 1
      %s600 = smul.addr %s599, 6
      %s601 = smul.addr %s600, 8
      %s602 = scalar_lea.vmem %s19, %s601
      %v604 = vld [vmem:[%s597] sm:$0xff]
      %v605 = vld [vmem:[%s597 + $0x8] sm:$0xff]
      %v606 = vld [vmem:[%s597 + $0x10] sm:$0xff]
      %v607 = vld [vmem:[%s1] sm:$0xff]
      %v608 = vld [vmem:[%s1 + $0x8] sm:$0xff]
      %v609 = vld [vmem:[%s1 + $0x10] sm:$0xff]
      %v610 = vld [vmem:[%s1 + $0x18] sm:$0xff]
      %v611 = vld [vmem:[%s1 + $0x20] sm:$0xff]
      %v612 = vld [vmem:[%s1 + $0x28] sm:$0xff]
      %v613 = vld [vmem:[%s1 + $0x30] sm:$0xff]
      %v614 = vld [vmem:[%s1 + $0x38] sm:$0xff]
      %v615 = vld [vmem:[%s1 + $0x40] sm:$0xff]
      %v616 = vld [vmem:[%s1 + $0x48] sm:$0xff]
      %v617 = vld [vmem:[%s1 + $0x50] sm:$0xff]
      %v618 = vld [vmem:[%s1 + $0x58] sm:$0xff]
      %v619 = vld [vmem:[%s2] sm:$0xff]
      %v620 = vld [vmem:[%s2 + $0x8] sm:$0xff]
      %v621 = vld [vmem:[%s2 + $0x10] sm:$0xff]
      %v622 = vld [vmem:[%s2 + $0x18] sm:$0xff]
      %v623 = vld [vmem:[%s2 + $0x20] sm:$0xff]
      %v624 = vld [vmem:[%s2 + $0x28] sm:$0xff]
      %v625 = vld [vmem:[%s2 + $0x30] sm:$0xff]
      %v626 = vld [vmem:[%s2 + $0x38] sm:$0xff]
      %v627 = vld [vmem:[%s2 + $0x40] sm:$0xff]
      %v628 = vld [vmem:[%s2 + $0x48] sm:$0xff]
      %v629 = vld [vmem:[%s2 + $0x50] sm:$0xff]
      %v630 = vld [vmem:[%s2 + $0x58] sm:$0xff]
      %v631 = vld [vmem:[%s3] sm:$0x1]
      %v632 = vld [vmem:[%s4] sm:$0x1]
      %v633 = vld [vmem:[%s5] sm:$0xf]
      %v634 = vld [vmem:[%s5 + $0x4] sm:$0xf]
      %v635 = vld [vmem:[%s5 + $0x8] sm:$0xf]
      %v636 = vld [vmem:[%s5 + $0xc] sm:$0xf]
      %v637 = vld [vmem:[%s6] sm:$0x1]
      %v638 = vld [vmem:[%s7] sm:$0xf]
      %v639 = vld [vmem:[%s7 + $0x4] sm:$0xf]
      %v640 = vld [vmem:[%s7 + $0x8] sm:$0xf]
      %v641 = vld [vmem:[%s7 + $0xc] sm:$0xf]
      %v642 = vld [vmem:[%s8] sm:$0x1]
      %v643 = vld [vmem:[%s9] sm:$0x1]
      %v644 = vld [vmem:[%s10] sm:$0x1]
      %v645 = vld [vmem:[%s11] sm:$0xf]
      %v646 = vld [vmem:[%s11 + $0x4] sm:$0xf]
      %v647 = vld [vmem:[%s11 + $0x8] sm:$0xf]
      %v648 = vld [vmem:[%s11 + $0xc] sm:$0xf]
      %v649 = vld [vmem:[%s12] sm:$0x1]
      %v650 = vld [vmem:[%s13] sm:$0xf]
      %v651 = vld [vmem:[%s13 + $0x4] sm:$0xf]
      %v652 = vld [vmem:[%s13 + $0x8] sm:$0xf]
      %v653 = vld [vmem:[%s13 + $0xc] sm:$0xf]
      %v654 = vld [vmem:[%s13 + $0x10] sm:$0xf]
      %v655 = vld [vmem:[%s13 + $0x14] sm:$0xf]
      %v656 = vld [vmem:[%s13 + $0x18] sm:$0xf]
      %v657 = vld [vmem:[%s13 + $0x1c] sm:$0xf]
      %v658 = vld [vmem:[%s13 + $0x20] sm:$0xf]
      %v659 = vld [vmem:[%s13 + $0x24] sm:$0xf]
      %v660 = vld [vmem:[%s13 + $0x28] sm:$0xf]
      %v661 = vld [vmem:[%s13 + $0x2c] sm:$0xf]
      %v662 = vld [vmem:[%s13 + $0x30] sm:$0xf]
      %v663 = vld [vmem:[%s13 + $0x34] sm:$0xf]
      %v664 = vld [vmem:[%s13 + $0x38] sm:$0xf]
      %v665 = vld [vmem:[%s13 + $0x3c] sm:$0xf]
      %v666 = vld [vmem:[%s14] sm:$0x1]
      %vm667 = vcmask 261120
      %v668 = vsel %vm667, %v604, 0.0
      %669 = vadd.xlane.f32.xlu0 %v668
      %v670 = vpop.xlane.xlu0 %669
      %v671 = vsel %vm667, %v605, 0.0
      %672 = vadd.xlane.f32.xlu0 %v671
      %v673 = vpop.xlane.xlu0 %672
      %v674 = vsel %vm667, %v606, 0.0
      %675 = vadd.xlane.f32.xlu0 %v674
      %v676 = vpop.xlane.xlu0 %675
      %v677 = vrcp.pop 32.0
      %v678 = vmul.f32 %v670, %v677
      %v679 = vmul.f32 %v673, %v677
      %v680 = vmul.f32 %v676, %v677
      %v681 = vsub.f32 %v604, %v678
      %v682 = vsub.f32 %v605, %v679
      %v683 = vsub.f32 %v606, %v680
      %v684 = vmul.f32 %v681, %v681
      %v685 = vmul.f32 %v682, %v682
      %v686 = vmul.f32 %v683, %v683
      %v687 = vsel %vm667, %v684, 0.0
      %688 = vadd.xlane.f32.xlu0 %v687
      %v689 = vpop.xlane.xlu0 %688
      %v690 = vsel %vm667, %v685, 0.0
      %691 = vadd.xlane.f32.xlu0 %v690
      %v692 = vpop.xlane.xlu0 %691
      %v693 = vsel %vm667, %v686, 0.0
      %694 = vadd.xlane.f32.xlu0 %v693
      %v695 = vpop.xlane.xlu0 %694
      %v696 = vmul.f32 %v689, %v677
      %v697 = vmul.f32 %v692, %v677
      %v698 = vmul.f32 %v695, %v677
      %v699 = vadd.f32 %v696, 1e-06
      %v700 = vadd.f32 %v697, 1e-06
      %v701 = vadd.f32 %v698, 1e-06
      %v702 = vrsqrt.pop %v699
      %v703 = vrsqrt.pop %v700
      %v704 = vrsqrt.pop %v701
      %v705 = vmul.f32 %v681, %v702
      %v706 = vmul.f32 %v682, %v703
      %v707 = vmul.f32 %v683, %v704
      %v709 = vlaneseq
      %v710 = vshrl.u32 %v709, 7
      %v711 = vsub.s32 0, %v710
      %v712 = vrot.slane %v631, %v711
      %v714 = vmul.f32 %v705, %v712
      %v715 = vmul.f32 %v706, %v712
      %v716 = vmul.f32 %v707, %v712
      %v718 = vlaneseq
      %v719 = vshrl.u32 %v718, 7
      %v720 = vsub.s32 0, %v719
      %v721 = vrot.slane %v632, %v720
      %v723 = vadd.f32 %v714, %v721
      %v724 = vadd.f32 %v715, %v721
      %v725 = vadd.f32 %v716, %v721
      %v726 = vpack.c.bf16 %v724, %v723
      %v727 = vpack.c.bf16 %v725, %v725
      %v729 = vlaneseq
      %v730 = vshrl.u32 %v729, 7
      %v731 = vsub.s32 0, %v730
      %v732 = vrot.slane %v637, %v731
      %v738 = vunpack.c.l.b16 %v633
      %v739 = vunpack.c.l.b16 %v634
      %v740 = vunpack.c.l.b16 %v635
      %v741 = vunpack.c.l.b16 %v636
      %v742 = vpack.c.b16 %v739, %v738
      %v743 = vpack.c.b16 %v741, %v740
      %v747 = vsel %vm667, %v726, 0
      %v750 = vsel %vm667, %v727, 0
      %752 = vmatprep.subr.bf16.mxu0 0
      %753 = vmatpush1.bf16.msra.mxu0 %v742
      %754 = vmatprep.subr.bf16.mxu0 0
      %755 = vmatpush1.bf16.msra.mxu0 %v743
      %756 = vmatprep.subr.bf16.mxu0 0
      %757 = vmatpush1.bf16.msra.mxu0 0
      %758 = vmatprep.subr.bf16.mxu0 0
      %759 = vmatpush1.bf16.msra.mxu0 0
      %760 = vmatprep.subr.bf16.mxu0 0
      %761 = vmatpush1.bf16.msra.mxu0 0
      %762 = vmatprep.subr.bf16.mxu0 0
      %763 = vmatpush1.bf16.msra.mxu0 0
      %764 = vmatprep.subr.bf16.mxu0 0
      %765 = vmatpush1.bf16.msra.mxu0 0
      %766 = vmatprep.subr.bf16.mxu0 0
      %767 = vmatpush1.bf16.msra.mxu0 0
      %768 = vmatprep.subr.bf16.mxu0 0
      %769 = vmatpush1.bf16.msra.mxu0 0
      %770 = vmatprep.subr.bf16.mxu0 0
      %771 = vmatpush1.bf16.msra.mxu0 0
      %772 = vmatprep.subr.bf16.mxu0 0
      %773 = vmatpush1.bf16.msra.mxu0 0
      %774 = vmatprep.subr.bf16.mxu0 0
      %775 = vmatpush1.bf16.msra.mxu0 0
      %776 = vmatprep.subr.bf16.mxu0 0
      %777 = vmatpush1.bf16.msra.mxu0 0
      %778 = vmatprep.subr.bf16.mxu0 0
      %779 = vmatpush1.bf16.msra.mxu0 0
      %780 = vmatprep.subr.bf16.mxu0 0
      %781 = vmatpush1.bf16.msra.mxu0 0
      %782 = vmatprep.subr.bf16.mxu0 0
      %783 = vmatpush1.bf16.msra.mxu0 0
      %784 = vmatprep.mubr.bf16.mxu0 0
      %785 = vmatmul.mubr.bf16.gmra.mrb[0].mxu0 %v747
      %v786 = vpop.f32.mrb[0].mxu0
      %v787 = vadd.f32 %v732, %v786
      %v788 = vpop.f32.mrb[0].mxu0
      %v789 = vpop.f32.mrb[0].mxu0
      %v790 = vadd.f32 %v732, %v789
      %v791 = vpop.f32.mrb[0].mxu0
      %792 = vmatprep.mubr.bf16.mxu0 0
      %793 = vmatmul.mubr.bf16.gmra.mrb[0].mxu0 %v750
      %v794 = vpop.f32.mrb[0].mxu0
      %v795 = vadd.f32 %v732, %v794
      %v796 = vpop.f32.mrb[0].mxu0
      %v797 = vpop.f32.mrb[0].mxu0
      %v798 = vpop.f32.mrb[0].mxu0
      %799 = vdwg.mxu0
      %v800 = vmul.f32 %v787, 0.35355338
      %v801 = vmul.f32 %v790, 0.35355338
      %v802 = vmul.f32 %v795, 0.35355338
      %v803 = vmul.f32 %v800, %v607
      %v804 = vmul.f32 %v801, %v608
      %v805 = vmul.f32 %v802, %v609
      %v806 = vmul.f32 %v800, %v610
      %v807 = vmul.f32 %v801, %v611
      %v808 = vmul.f32 %v802, %v612
      %v809 = vmul.f32 %v800, %v613
      %v810 = vmul.f32 %v801, %v614
      %v811 = vmul.f32 %v802, %v615
      %v812 = vmul.f32 %v800, %v616
      %v813 = vmul.f32 %v801, %v617
      %v814 = vmul.f32 %v802, %v618
      %v815 = vpack.c.bf16 %v804, %v803
      %v816 = vpack.c.bf16 %v806, %v805
      %v817 = vpack.c.bf16 %v808, %v807
      %v818 = vpack.c.bf16 %v810, %v809
      %v819 = vpack.c.bf16 %v812, %v811
      %v820 = vpack.c.bf16 %v814, %v813
      %v821 = vpack.c.bf16 %v790, %v787
      %v822 = vpack.c.bf16 %v795, %v795
      %825 = vrot.lane.b32.xlu0 %v821, 96
      %v826 = vpop.permute.xlu0 %825
      %827 = vrot.lane.b32.xlu0 %v822, 96
      %v828 = vpop.permute.xlu0 %827
      %v830 = vsel %vm667, %v815, 0
      %v833 = vsel %vm667, %v816, 0
      %v836 = vsel %vm667, %v817, 0
      %v839 = vsel %vm667, %v818, 0
      %v842 = vsel %vm667, %v819, 0
      %v845 = vsel %vm667, %v820, 0
      %v848 = vsel %vm667, %v826, 0
      %v851 = vsel %vm667, %v828, 0
      %853 = vmatprep.subr.bf16.mxu0 0
      %854 = vmatpush1.bf16.xpose.msra.mxu0 %v848
      %855 = vmatprep.subr.bf16.mxu0 0
      %856 = vmatpush1.bf16.xpose.msra.mxu0 %v851
      %857 = vmatprep.subr.bf16.mxu0 0
      %858 = vmatpush1.bf16.xpose.msra.mxu0 0
      %859 = vmatprep.subr.bf16.mxu0 0
      %860 = vmatpush1.bf16.xpose.msra.mxu0 0
      %861 = vmatprep.subr.bf16.mxu0 0
      %862 = vmatpush1.bf16.xpose.msra.mxu0 0
      %863 = vmatprep.subr.bf16.mxu0 0
      %864 = vmatpush1.bf16.xpose.msra.mxu0 0
      %865 = vmatprep.subr.bf16.mxu0 0
      %866 = vmatpush1.bf16.xpose.msra.mxu0 0
      %867 = vmatprep.subr.bf16.mxu0 0
      %868 = vmatpush1.bf16.xpose.msra.mxu0 0
      %869 = vmatprep.subr.bf16.mxu0 0
      %870 = vmatpush1.bf16.xpose.msra.mxu0 0
      %871 = vmatprep.subr.bf16.mxu0 0
      %872 = vmatpush1.bf16.xpose.msra.mxu0 0
      %873 = vmatprep.subr.bf16.mxu0 0
      %874 = vmatpush1.bf16.xpose.msra.mxu0 0
      %875 = vmatprep.subr.bf16.mxu0 0
      %876 = vmatpush1.bf16.xpose.msra.mxu0 0
      %877 = vmatprep.subr.bf16.mxu0 0
      %878 = vmatpush1.bf16.xpose.msra.mxu0 0
      %879 = vmatprep.subr.bf16.mxu0 0
      %880 = vmatpush1.bf16.xpose.msra.mxu0 0
      %881 = vmatprep.subr.bf16.mxu0 0
      %882 = vmatpush1.bf16.xpose.msra.mxu0 0
      %883 = vmatprep.subr.bf16.mxu0 0
      %884 = vmatpush1.bf16.xpose.msra.mxu0 0
      %885 = vmatprep.mubr.bf16.mxu0 0
      %886 = vmatmul.mubr.bf16.gmra.mrb[0].mxu0 %v830
      %v887 = vpop.f32.mrb[0].mxu0
      %v888 = vadd.f32 %v619, %v887
      %v889 = vpop.f32.mrb[0].mxu0
      %v890 = vpop.f32.mrb[0].mxu0
      %v891 = vadd.f32 %v620, %v890
      %v892 = vpop.f32.mrb[0].mxu0
      %893 = vmatprep.mubr.bf16.mxu0 0
      %894 = vmatmul.mubr.bf16.gmra.mrb[0].mxu0 %v833
      %v895 = vpop.f32.mrb[0].mxu0
      %v896 = vadd.f32 %v621, %v895
      %v897 = vpop.f32.mrb[0].mxu0
      %v898 = vpop.f32.mrb[0].mxu0
      %v899 = vadd.f32 %v622, %v898
      %v900 = vpop.f32.mrb[0].mxu0
      %901 = vmatprep.mubr.bf16.mxu0 0
      %902 = vmatmul.mubr.bf16.gmra.mrb[0].mxu0 %v836
      %v903 = vpop.f32.mrb[0].mxu0
      %v904 = vadd.f32 %v623, %v903
      %v905 = vpop.f32.mrb[0].mxu0
      %v906 = vpop.f32.mrb[0].mxu0
      %v907 = vadd.f32 %v624, %v906
      %v908 = vpop.f32.mrb[0].mxu0
      %909 = vmatprep.mubr.bf16.mxu0 0
      %910 = vmatmul.mubr.bf16.gmra.mrb[0].mxu0 %v839
      %v911 = vpop.f32.mrb[0].mxu0
      %v912 = vadd.f32 %v625, %v911
      %v913 = vpop.f32.mrb[0].mxu0
      %v914 = vpop.f32.mrb[0].mxu0
      %v915 = vadd.f32 %v626, %v914
      %v916 = vpop.f32.mrb[0].mxu0
      %917 = vmatprep.mubr.bf16.mxu0 0
      %918 = vmatmul.mubr.bf16.gmra.mrb[0].mxu0 %v842
      %v919 = vpop.f32.mrb[0].mxu0
      %v920 = vadd.f32 %v627, %v919
      %v921 = vpop.f32.mrb[0].mxu0
      %v922 = vpop.f32.mrb[0].mxu0
      %v923 = vadd.f32 %v628, %v922
      %v924 = vpop.f32.mrb[0].mxu0
      %925 = vmatprep.mubr.bf16.mxu0 0
      %926 = vmatmul.mubr.bf16.gmra.mrb[0].mxu0 %v845
      %v927 = vpop.f32.mrb[0].mxu0
      %v928 = vadd.f32 %v629, %v927
      %v929 = vpop.f32.mrb[0].mxu0
      %v930 = vpop.f32.mrb[0].mxu0
      %v931 = vadd.f32 %v630, %v930
      %v932 = vpop.f32.mrb[0].mxu0
      %933 = vdwg.mxu0
      %vm934 = vcmask 195584
      %v935 = vsel %vm934, %v888, -inf
      %936 = vmax.xlane.f32.xlu0 %v935
      %v937 = vpop.xlane.xlu0 %936
      %v938 = vsel %vm934, %v891, -inf
      %939 = vmax.xlane.f32.xlu0 %v938
      %v940 = vpop.xlane.xlu0 %939
      %v941 = vsel %vm934, %v896, -inf
      %942 = vmax.xlane.f32.xlu0 %v941
      %v943 = vpop.xlane.xlu0 %942
      %v944 = vsel %vm934, %v899, -inf
      %945 = vmax.xlane.f32.xlu0 %v944
      %v946 = vpop.xlane.xlu0 %945
      %v947 = vsel %vm934, %v904, -inf
      %948 = vmax.xlane.f32.xlu0 %v947
      %v949 = vpop.xlane.xlu0 %948
      %v950 = vsel %vm934, %v907, -inf
      %951 = vmax.xlane.f32.xlu0 %v950
      %v952 = vpop.xlane.xlu0 %951
      %v953 = vsel %vm934, %v912, -inf
      %954 = vmax.xlane.f32.xlu0 %v953
      %v955 = vpop.xlane.xlu0 %954
      %v956 = vsel %vm934, %v915, -inf
      %957 = vmax.xlane.f32.xlu0 %v956
      %v958 = vpop.xlane.xlu0 %957
      %v959 = vsel %vm934, %v920, -inf
      %960 = vmax.xlane.f32.xlu0 %v959
      %v961 = vpop.xlane.xlu0 %960
      %v962 = vsel %vm934, %v923, -inf
      %963 = vmax.xlane.f32.xlu0 %v962
      %v964 = vpop.xlane.xlu0 %963
      %v965 = vsel %vm934, %v928, -inf
      %966 = vmax.xlane.f32.xlu0 %v965
      %v967 = vpop.xlane.xlu0 %966
      %v968 = vsel %vm934, %v931, -inf
      %969 = vmax.xlane.f32.xlu0 %v968
      %v970 = vpop.xlane.xlu0 %969
      %v971 = vsub.f32 %v888, %v937
      %v972 = vsub.f32 %v891, %v940
      %v973 = vsub.f32 %v896, %v943
      %v974 = vsub.f32 %v899, %v946
      %v975 = vsub.f32 %v904, %v949
      %v976 = vsub.f32 %v907, %v952
      %v977 = vsub.f32 %v912, %v955
      %v978 = vsub.f32 %v915, %v958
      %v979 = vsub.f32 %v920, %v961
      %v980 = vsub.f32 %v923, %v964
      %v981 = vsub.f32 %v928, %v967
      %v982 = vsub.f32 %v931, %v970
      %v983 = vmul.f32 %v971, 1.442695
      %v984 = vpow.pop %v983
      %v985 = vmul.f32 %v972, 1.442695
      %v986 = vpow.pop %v985
      %v987 = vmul.f32 %v973, 1.442695
      %v988 = vpow.pop %v987
      %v989 = vmul.f32 %v974, 1.442695
      %v990 = vpow.pop %v989
      %v991 = vmul.f32 %v975, 1.442695
      %v992 = vpow.pop %v991
      %v993 = vmul.f32 %v976, 1.442695
      %v994 = vpow.pop %v993
      %v995 = vmul.f32 %v977, 1.442695
      %v996 = vpow.pop %v995
      %v997 = vmul.f32 %v978, 1.442695
      %v998 = vpow.pop %v997
      %v999 = vmul.f32 %v979, 1.442695
      %v1000 = vpow.pop %v999
      %v1001 = vmul.f32 %v980, 1.442695
      %v1002 = vpow.pop %v1001
      %v1003 = vmul.f32 %v981, 1.442695
      %v1004 = vpow.pop %v1003
      %v1005 = vmul.f32 %v982, 1.442695
      %v1006 = vpow.pop %v1005
      %v1007 = vsel %vm934, %v984, 0.0
      %1008 = vadd.xlane.f32.xlu0 %v1007
      %v1009 = vpop.xlane.xlu0 %1008
      %v1010 = vsel %vm934, %v986, 0.0
      %1011 = vadd.xlane.f32.xlu0 %v1010
      %v1012 = vpop.xlane.xlu0 %1011
      %v1013 = vsel %vm934, %v988, 0.0
      %1014 = vadd.xlane.f32.xlu0 %v1013
      %v1015 = vpop.xlane.xlu0 %1014
      %v1016 = vsel %vm934, %v990, 0.0
      %1017 = vadd.xlane.f32.xlu0 %v1016
      %v1018 = vpop.xlane.xlu0 %1017
      %v1019 = vsel %vm934, %v992, 0.0
      %1020 = vadd.xlane.f32.xlu0 %v1019
      %v1021 = vpop.xlane.xlu0 %1020
      %v1022 = vsel %vm934, %v994, 0.0
      %1023 = vadd.xlane.f32.xlu0 %v1022
      %v1024 = vpop.xlane.xlu0 %1023
      %v1025 = vsel %vm934, %v996, 0.0
      %1026 = vadd.xlane.f32.xlu0 %v1025
      %v1027 = vpop.xlane.xlu0 %1026
      %v1028 = vsel %vm934, %v998, 0.0
      %1029 = vadd.xlane.f32.xlu0 %v1028
      %v1030 = vpop.xlane.xlu0 %1029
      %v1031 = vsel %vm934, %v1000, 0.0
      %1032 = vadd.xlane.f32.xlu0 %v1031
      %v1033 = vpop.xlane.xlu0 %1032
      %v1034 = vsel %vm934, %v1002, 0.0
      %1035 = vadd.xlane.f32.xlu0 %v1034
      %v1036 = vpop.xlane.xlu0 %1035
      %v1037 = vsel %vm934, %v1004, 0.0
      %1038 = vadd.xlane.f32.xlu0 %v1037
      %v1039 = vpop.xlane.xlu0 %1038
      %v1040 = vsel %vm934, %v1006, 0.0
      %1041 = vadd.xlane.f32.xlu0 %v1040
      %v1042 = vpop.xlane.xlu0 %1041
      %v1043 = vrcp.pop %v1009
      %v1044 = vrcp.pop %v1012
      %v1045 = vrcp.pop %v1015
      %v1046 = vrcp.pop %v1018
      %v1047 = vrcp.pop %v1021
      %v1048 = vrcp.pop %v1024
      %v1049 = vrcp.pop %v1027
      %v1050 = vrcp.pop %v1030
      %v1051 = vrcp.pop %v1033
      %v1052 = vrcp.pop %v1036
      %v1053 = vrcp.pop %v1039
      %v1054 = vrcp.pop %v1042
      %v1055 = vmul.f32 %v984, %v1043
      %v1056 = vmul.f32 %v986, %v1044
      %v1057 = vmul.f32 %v988, %v1045
      %v1058 = vmul.f32 %v990, %v1046
      %v1059 = vmul.f32 %v992, %v1047
      %v1060 = vmul.f32 %v994, %v1048
      %v1061 = vmul.f32 %v996, %v1049
      %v1062 = vmul.f32 %v998, %v1050
      %v1063 = vmul.f32 %v1000, %v1051
      %v1064 = vmul.f32 %v1002, %v1052
      %v1065 = vmul.f32 %v1004, %v1053
      %v1066 = vmul.f32 %v1006, %v1054
      %v1067 = vpack.c.bf16 %v1056, %v1055
      %v1068 = vpack.c.bf16 %v1058, %v1057
      %v1069 = vpack.c.bf16 %v1060, %v1059
      %v1070 = vpack.c.bf16 %v1062, %v1061
      %v1071 = vpack.c.bf16 %v1064, %v1063
      %v1072 = vpack.c.bf16 %v1066, %v1065
      %1073 = vrot.lane.b32.xlu0 %v821, 64
      %v1074 = vpop.permute.xlu0 %1073
      %1075 = vrot.lane.b32.xlu0 %v822, 64
      %v1076 = vpop.permute.xlu0 %1075
      %v1079 = vsel %vm934, %v1067, 0
      %v1082 = vsel %vm934, %v1068, 0
      %v1085 = vsel %vm934, %v1069, 0
      %v1088 = vsel %vm934, %v1070, 0
      %v1091 = vsel %vm934, %v1071, 0
      %v1094 = vsel %vm934, %v1072, 0
      %vm1096 = vcmask 1043456
      %v1098 = vsel %vm1096, %v1076, 0
      %1100 = vmatprep.subr.bf16.mxu0 0
      %1101 = vmatpush1.bf16.msra.mxu0 %v1074
      %1102 = vmatprep.subr.bf16.mxu0 0
      %1103 = vmatpush1.bf16.msra.mxu0 %v1098
      %1104 = vmatprep.subr.bf16.mxu0 0
      %1105 = vmatpush1.bf16.msra.mxu0 0
      %1106 = vmatprep.subr.bf16.mxu0 0
      %1107 = vmatpush1.bf16.msra.mxu0 0
      %1108 = vmatprep.subr.bf16.mxu0 0
      %1109 = vmatpush1.bf16.msra.mxu0 0
      %1110 = vmatprep.subr.bf16.mxu0 0
      %1111 = vmatpush1.bf16.msra.mxu0 0
      %1112 = vmatprep.subr.bf16.mxu0 0
      %1113 = vmatpush1.bf16.msra.mxu0 0
      %1114 = vmatprep.subr.bf16.mxu0 0
      %1115 = vmatpush1.bf16.msra.mxu0 0
      %1116 = vmatprep.subr.bf16.mxu0 0
      %1117 = vmatpush1.bf16.msra.mxu0 0
      %1118 = vmatprep.subr.bf16.mxu0 0
      %1119 = vmatpush1.bf16.msra.mxu0 0
      %1120 = vmatprep.subr.bf16.mxu0 0
      %1121 = vmatpush1.bf16.msra.mxu0 0
      %1122 = vmatprep.subr.bf16.mxu0 0
      %1123 = vmatpush1.bf16.msra.mxu0 0
      %1124 = vmatprep.subr.bf16.mxu0 0
      %1125 = vmatpush1.bf16.msra.mxu0 0
      %1126 = vmatprep.subr.bf16.mxu0 0
      %1127 = vmatpush1.bf16.msra.mxu0 0
      %1128 = vmatprep.subr.bf16.mxu0 0
      %1129 = vmatpush1.bf16.msra.mxu0 0
      %1130 = vmatprep.subr.bf16.mxu0 0
      %1131 = vmatpush1.bf16.msra.mxu0 0
      %1132 = vmatprep.mubr.bf16.mxu0 0
      %1133 = vmatmul.mubr.bf16.gmra.mrb[0].mxu0 %v1079
      %v1134 = vpop.f32.mrb[0].mxu0
      %v1135 = vadd.f32 0.0, %v1134
      %v1136 = vpop.f32.mrb[0].mxu0
      %v1137 = vpop.f32.mrb[0].mxu0
      %v1138 = vadd.f32 0.0, %v1137
      %v1139 = vpop.f32.mrb[0].mxu0
      %1140 = vmatprep.mubr.bf16.mxu0 0
      %1141 = vmatmul.mubr.bf16.gmra.mrb[0].mxu0 %v1082
      %v1142 = vpop.f32.mrb[0].mxu0
      %v1143 = vadd.f32 0.0, %v1142
      %v1144 = vpop.f32.mrb[0].mxu0
      %v1145 = vpop.f32.mrb[0].mxu0
      %v1146 = vadd.f32 0.0, %v1145
      %v1147 = vpop.f32.mrb[0].mxu0
      %1148 = vmatprep.mubr.bf16.mxu0 0
      %1149 = vmatmul.mubr.bf16.gmra.mrb[0].mxu0 %v1085
      %v1150 = vpop.f32.mrb[0].mxu0
      %v1151 = vadd.f32 0.0, %v1150
      %v1152 = vpop.f32.mrb[0].mxu0
      %v1153 = vpop.f32.mrb[0].mxu0
      %v1154 = vadd.f32 0.0, %v1153
      %v1155 = vpop.f32.mrb[0].mxu0
      %1156 = vmatprep.mubr.bf16.mxu0 0
      %1157 = vmatmul.mubr.bf16.gmra.mrb[0].mxu0 %v1088
      %v1158 = vpop.f32.mrb[0].mxu0
      %v1159 = vadd.f32 0.0, %v1158
      %v1160 = vpop.f32.mrb[0].mxu0
      %v1161 = vpop.f32.mrb[0].mxu0
      %v1162 = vadd.f32 0.0, %v1161
      %v1163 = vpop.f32.mrb[0].mxu0
      %1164 = vmatprep.mubr.bf16.mxu0 0
      %1165 = vmatmul.mubr.bf16.gmra.mrb[0].mxu0 %v1091
      %v1166 = vpop.f32.mrb[0].mxu0
      %v1167 = vadd.f32 0.0, %v1166
      %v1168 = vpop.f32.mrb[0].mxu0
      %v1169 = vpop.f32.mrb[0].mxu0
      %v1170 = vadd.f32 0.0, %v1169
      %v1171 = vpop.f32.mrb[0].mxu0
      %1172 = vmatprep.mubr.bf16.mxu0 0
      %1173 = vmatmul.mubr.bf16.gmra.mrb[0].mxu0 %v1094
      %v1174 = vpop.f32.mrb[0].mxu0
      %v1175 = vadd.f32 0.0, %v1174
      %v1176 = vpop.f32.mrb[0].mxu0
      %v1177 = vpop.f32.mrb[0].mxu0
      %v1178 = vadd.f32 0.0, %v1177
      %v1179 = vpop.f32.mrb[0].mxu0
      %1180 = vdwg.mxu0
      %v1181 = vmul.f32 %v1135, %v607
      %v1182 = vmul.f32 %v1138, %v608
      %v1183 = vmul.f32 %v1143, %v609
      %v1184 = vmul.f32 %v1146, %v610
      %v1185 = vmul.f32 %v1151, %v611
      %v1186 = vmul.f32 %v1154, %v612
      %v1187 = vmul.f32 %v1159, %v613
      %v1188 = vmul.f32 %v1162, %v614
      %v1189 = vmul.f32 %v1167, %v615
      %v1190 = vmul.f32 %v1170, %v616
      %v1191 = vmul.f32 %v1175, %v617
      %v1192 = vmul.f32 %v1178, %v618
      %v1193 = vadd.f32 %v1181, %v1184
      %v1194 = vadd.f32 %v1182, %v1185
      %v1195 = vadd.f32 %v1183, %v1186
      %v1196 = vadd.f32 %v1193, %v1187
      %v1197 = vadd.f32 %v1194, %v1188
      %v1198 = vadd.f32 %v1195, %v1189
      %v1199 = vadd.f32 %v1196, %v1190
      %v1200 = vadd.f32 %v1197, %v1191
      %v1201 = vadd.f32 %v1198, %v1192
      %v1202 = vpack.c.bf16 %v1200, %v1199
      %v1203 = vpack.c.bf16 %v1201, %v1201
      %v1208 = vunpack.c.l.b16 %v638
      %v1209 = vunpack.c.l.b16 %v639
      %v1210 = vunpack.c.l.b16 %v640
      %v1211 = vunpack.c.l.b16 %v641
      %v1212 = vpack.c.b16 %v1209, %v1208
      %v1213 = vpack.c.b16 %v1211, %v1210
      %v1217 = vsel %vm667, %v1202, 0
      %v1220 = vsel %vm667, %v1203, 0
      %1222 = vmatprep.subr.bf16.mxu0 0
      %1223 = vmatpush1.bf16.msra.mxu0 %v1212
      %1224 = vmatprep.subr.bf16.mxu0 0
      %1225 = vmatpush1.bf16.msra.mxu0 %v1213
      %1226 = vmatprep.subr.bf16.mxu0 0
      %1227 = vmatpush1.bf16.msra.mxu0 0
      %1228 = vmatprep.subr.bf16.mxu0 0
      %1229 = vmatpush1.bf16.msra.mxu0 0
      %1230 = vmatprep.subr.bf16.mxu0 0
      %1231 = vmatpush1.bf16.msra.mxu0 0
      %1232 = vmatprep.subr.bf16.mxu0 0
      %1233 = vmatpush1.bf16.msra.mxu0 0
      %1234 = vmatprep.subr.bf16.mxu0 0
      %1235 = vmatpush1.bf16.msra.mxu0 0
      %1236 = vmatprep.subr.bf16.mxu0 0
      %1237 = vmatpush1.bf16.msra.mxu0 0
      %1238 = vmatprep.subr.bf16.mxu0 0
      %1239 = vmatpush1.bf16.msra.mxu0 0
      %1240 = vmatprep.subr.bf16.mxu0 0
      %1241 = vmatpush1.bf16.msra.mxu0 0
      %1242 = vmatprep.subr.bf16.mxu0 0
      %1243 = vmatpush1.bf16.msra.mxu0 0
      %1244 = vmatprep.subr.bf16.mxu0 0
      %1245 = vmatpush1.bf16.msra.mxu0 0
      %1246 = vmatprep.subr.bf16.mxu0 0
      %1247 = vmatpush1.bf16.msra.mxu0 0
      %1248 = vmatprep.subr.bf16.mxu0 0
      %1249 = vmatpush1.bf16.msra.mxu0 0
      %1250 = vmatprep.subr.bf16.mxu0 0
      %1251 = vmatpush1.bf16.msra.mxu0 0
      %1252 = vmatprep.subr.bf16.mxu0 0
      %1253 = vmatpush1.bf16.msra.mxu0 0
      %1254 = vmatprep.mubr.bf16.mxu0 0
      %1255 = vmatmul.mubr.bf16.gmra.mrb[0].mxu0 %v1217
      %v1256 = vpop.f32.mrb[0].mxu0
      %v1257 = vadd.f32 0.0, %v1256
      %v1258 = vpop.f32.mrb[0].mxu0
      %v1259 = vpop.f32.mrb[0].mxu0
      %v1260 = vadd.f32 0.0, %v1259
      %v1261 = vpop.f32.mrb[0].mxu0
      %1262 = vmatprep.mubr.bf16.mxu0 0
      %1263 = vmatmul.mubr.bf16.gmra.mrb[0].mxu0 %v1220
      %v1264 = vpop.f32.mrb[0].mxu0
      %v1265 = vadd.f32 0.0, %v1264
      %v1266 = vpop.f32.mrb[0].mxu0
      %v1267 = vpop.f32.mrb[0].mxu0
      %v1268 = vpop.f32.mrb[0].mxu0
      %1269 = vdwg.mxu0
      %v1270 = vadd.f32 %v604, %v1257
      %v1271 = vadd.f32 %v605, %v1260
      %v1272 = vadd.f32 %v606, %v1265
      %v1274 = vlaneseq
      %v1275 = vshrl.u32 %v1274, 7
      %v1276 = vsub.s32 0, %v1275
      %v1277 = vrot.slane %v642, %v1276
      %v1279 = vadd.f32 %v1270, %v1277
      %v1280 = vadd.f32 %v1271, %v1277
      %v1281 = vadd.f32 %v1272, %v1277
      %v1282 = vsel %vm667, %v1279, 0.0
      %1283 = vadd.xlane.f32.xlu0 %v1282
      %v1284 = vpop.xlane.xlu0 %1283
      %v1285 = vsel %vm667, %v1280, 0.0
      %1286 = vadd.xlane.f32.xlu0 %v1285
      %v1287 = vpop.xlane.xlu0 %1286
      %v1288 = vsel %vm667, %v1281, 0.0
      %1289 = vadd.xlane.f32.xlu0 %v1288
      %v1290 = vpop.xlane.xlu0 %1289
      %v1291 = vmul.f32 %v1284, %v677
      %v1292 = vmul.f32 %v1287, %v677
      %v1293 = vmul.f32 %v1290, %v677
      %v1294 = vsub.f32 %v1279, %v1291
      %v1295 = vsub.f32 %v1280, %v1292
      %v1296 = vsub.f32 %v1281, %v1293
      %v1297 = vmul.f32 %v1294, %v1294
      %v1298 = vmul.f32 %v1295, %v1295
      %v1299 = vmul.f32 %v1296, %v1296
      %v1300 = vsel %vm667, %v1297, 0.0
      %1301 = vadd.xlane.f32.xlu0 %v1300
      %v1302 = vpop.xlane.xlu0 %1301
      %v1303 = vsel %vm667, %v1298, 0.0
      %1304 = vadd.xlane.f32.xlu0 %v1303
      %v1305 = vpop.xlane.xlu0 %1304
      %v1306 = vsel %vm667, %v1299, 0.0
      %1307 = vadd.xlane.f32.xlu0 %v1306
      %v1308 = vpop.xlane.xlu0 %1307
      %v1309 = vmul.f32 %v1302, %v677
      %v1310 = vmul.f32 %v1305, %v677
      %v1311 = vmul.f32 %v1308, %v677
      %v1312 = vadd.f32 %v1309, 1e-06
      %v1313 = vadd.f32 %v1310, 1e-06
      %v1314 = vadd.f32 %v1311, 1e-06
      %v1315 = vrsqrt.pop %v1312
      %v1316 = vrsqrt.pop %v1313
      %v1317 = vrsqrt.pop %v1314
      %v1318 = vmul.f32 %v1294, %v1315
      %v1319 = vmul.f32 %v1295, %v1316
      %v1320 = vmul.f32 %v1296, %v1317
      %v1322 = vlaneseq
      %v1323 = vshrl.u32 %v1322, 7
      %v1324 = vsub.s32 0, %v1323
      %v1325 = vrot.slane %v643, %v1324
      %v1327 = vmul.f32 %v1318, %v1325
      %v1328 = vmul.f32 %v1319, %v1325
      %v1329 = vmul.f32 %v1320, %v1325
      %v1331 = vlaneseq
      %v1332 = vshrl.u32 %v1331, 7
      %v1333 = vsub.s32 0, %v1332
      %v1334 = vrot.slane %v644, %v1333
      %v1336 = vadd.f32 %v1327, %v1334
      %v1337 = vadd.f32 %v1328, %v1334
      %v1338 = vadd.f32 %v1329, %v1334
      %v1339 = vpack.c.bf16 %v1337, %v1336
      %v1340 = vpack.c.bf16 %v1338, %v1338
      %v1342 = vlaneseq
      %v1343 = vshrl.u32 %v1342, 7
      %v1344 = vsub.s32 0, %v1343
      %v1345 = vrot.slane %v649, %v1344
      %v1351 = vunpack.c.l.b16 %v645
      %v1352 = vunpack.c.l.b16 %v646
      %v1353 = vunpack.c.l.b16 %v647
      %v1354 = vunpack.c.l.b16 %v648
      %v1355 = vpack.c.b16 %v1352, %v1351
      %v1356 = vpack.c.b16 %v1354, %v1353
      %v1360 = vsel %vm667, %v1339, 0
      %v1363 = vsel %vm667, %v1340, 0
      %1365 = vmatprep.subr.bf16.mxu0 0
      %1366 = vmatpush1.bf16.msra.mxu0 %v1355
      %1367 = vmatprep.subr.bf16.mxu0 0
      %1368 = vmatpush1.bf16.msra.mxu0 %v1356
      %1369 = vmatprep.subr.bf16.mxu0 0
      %1370 = vmatpush1.bf16.msra.mxu0 0
      %1371 = vmatprep.subr.bf16.mxu0 0
      %1372 = vmatpush1.bf16.msra.mxu0 0
      %1373 = vmatprep.subr.bf16.mxu0 0
      %1374 = vmatpush1.bf16.msra.mxu0 0
      %1375 = vmatprep.subr.bf16.mxu0 0
      %1376 = vmatpush1.bf16.msra.mxu0 0
      %1377 = vmatprep.subr.bf16.mxu0 0
      %1378 = vmatpush1.bf16.msra.mxu0 0
      %1379 = vmatprep.subr.bf16.mxu0 0
      %1380 = vmatpush1.bf16.msra.mxu0 0
      %1381 = vmatprep.subr.bf16.mxu0 0
      %1382 = vmatpush1.bf16.msra.mxu0 0
      %1383 = vmatprep.subr.bf16.mxu0 0
      %1384 = vmatpush1.bf16.msra.mxu0 0
      %1385 = vmatprep.subr.bf16.mxu0 0
      %1386 = vmatpush1.bf16.msra.mxu0 0
      %1387 = vmatprep.subr.bf16.mxu0 0
      %1388 = vmatpush1.bf16.msra.mxu0 0
      %1389 = vmatprep.subr.bf16.mxu0 0
      %1390 = vmatpush1.bf16.msra.mxu0 0
      %1391 = vmatprep.subr.bf16.mxu0 0
      %1392 = vmatpush1.bf16.msra.mxu0 0
      %1393 = vmatprep.subr.bf16.mxu0 0
      %1394 = vmatpush1.bf16.msra.mxu0 0
      %1395 = vmatprep.subr.bf16.mxu0 0
      %1396 = vmatpush1.bf16.msra.mxu0 0
      %1397 = vmatprep.mubr.bf16.mxu0 0
      %1398 = vmatmul.mubr.bf16.gmra.mrb[0].mxu0 %v1360
      %v1399 = vpop.f32.mrb[0].mxu0
      %v1400 = vadd.f32 %v1345, %v1399
      %v1401 = vpop.f32.mrb[0].mxu0
      %v1402 = vpop.f32.mrb[0].mxu0
      %v1403 = vadd.f32 %v1345, %v1402
      %v1404 = vpop.f32.mrb[0].mxu0
      %1405 = vmatprep.mubr.bf16.mxu0 0
      %1406 = vmatmul.mubr.bf16.gmra.mrb[0].mxu0 %v1363
      %v1407 = vpop.f32.mrb[0].mxu0
      %v1408 = vadd.f32 %v1345, %v1407
      %v1409 = vpop.f32.mrb[0].mxu0
      %v1410 = vpop.f32.mrb[0].mxu0
      %v1411 = vpop.f32.mrb[0].mxu0
      %1412 = vdwg.mxu0
      %v1413 = vmul.f32 %v1400, 0.5
      %v1414 = vmul.f32 %v1403, 0.5
      %v1415 = vmul.f32 %v1408, 0.5
      %v1416 = vmul.f32 %v1400, 0.044715
      %v1417 = vmul.f32 %v1403, 0.044715
      %v1418 = vmul.f32 %v1408, 0.044715
      %v1419 = vmul.f32 %v1416, %v1400
      %v1420 = vmul.f32 %v1417, %v1403
      %v1421 = vmul.f32 %v1418, %v1408
      %v1422 = vmul.f32 %v1419, %v1400
      %v1423 = vmul.f32 %v1420, %v1403
      %v1424 = vmul.f32 %v1421, %v1408
      %v1425 = vadd.f32 %v1400, %v1422
      %v1426 = vadd.f32 %v1403, %v1423
      %v1427 = vadd.f32 %v1408, %v1424
      %v1428 = vmul.f32 %v1425, 0.7978846
      %v1429 = vmul.f32 %v1426, 0.7978846
      %v1430 = vmul.f32 %v1427, 0.7978846
      %v1431 = vtanh.pop %v1428
      %v1432 = vtanh.pop %v1429
      %v1433 = vtanh.pop %v1430
      %v1434 = vadd.f32 %v1431, 1.0
      %v1435 = vadd.f32 %v1432, 1.0
      %v1436 = vadd.f32 %v1433, 1.0
      %v1437 = vmul.f32 %v1413, %v1434
      %v1438 = vmul.f32 %v1414, %v1435
      %v1439 = vmul.f32 %v1415, %v1436
      %v1440 = vpack.c.bf16 %v1438, %v1437
      %v1441 = vpack.c.bf16 %v1439, %v1439
      %v1443 = vlaneseq
      %v1444 = vshrl.u32 %v1443, 7
      %v1445 = vsub.s32 0, %v1444
      %v1446 = vrot.slane %v666, %v1445
      %v1464 = vunpack.c.l.b16 %v650
      %v1465 = vunpack.c.l.b16 %v651
      %v1466 = vunpack.c.l.b16 %v652
      %v1467 = vunpack.c.l.b16 %v653
      %v1468 = vunpack.c.l.b16 %v654
      %v1469 = vunpack.c.l.b16 %v655
      %v1470 = vunpack.c.l.b16 %v656
      %v1471 = vunpack.c.l.b16 %v657
      %v1472 = vunpack.c.l.b16 %v658
      %v1473 = vunpack.c.l.b16 %v659
      %v1474 = vunpack.c.l.b16 %v660
      %v1475 = vunpack.c.l.b16 %v661
      %v1476 = vunpack.c.l.b16 %v662
      %v1477 = vunpack.c.l.b16 %v663
      %v1478 = vunpack.c.l.b16 %v664
      %v1479 = vunpack.c.l.b16 %v665
      %v1480 = vpack.c.b16 %v1465, %v1464
      %v1481 = vpack.c.b16 %v1467, %v1466
      %v1482 = vpack.c.b16 %v1469, %v1468
      %v1483 = vpack.c.b16 %v1471, %v1470
      %v1484 = vpack.c.b16 %v1473, %v1472
      %v1485 = vpack.c.b16 %v1475, %v1474
      %v1486 = vpack.c.b16 %v1477, %v1476
      %v1487 = vpack.c.b16 %v1479, %v1478
      %1496 = vmatprep.subr.bf16.mxu0 0
      %1497 = vmatpush1.bf16.msra.mxu0 %v1480
      %1498 = vmatprep.subr.bf16.mxu0 0
      %1499 = vmatpush1.bf16.msra.mxu0 %v1481
      %1500 = vmatprep.subr.bf16.mxu0 0
      %1501 = vmatpush1.bf16.msra.mxu0 %v1482
      %1502 = vmatprep.subr.bf16.mxu0 0
      %1503 = vmatpush1.bf16.msra.mxu0 %v1483
      %1504 = vmatprep.subr.bf16.mxu0 0
      %1505 = vmatpush1.bf16.msra.mxu0 %v1484
      %1506 = vmatprep.subr.bf16.mxu0 0
      %1507 = vmatpush1.bf16.msra.mxu0 %v1485
      %1508 = vmatprep.subr.bf16.mxu0 0
      %1509 = vmatpush1.bf16.msra.mxu0 %v1486
      %1510 = vmatprep.subr.bf16.mxu0 0
      %1511 = vmatpush1.bf16.msra.mxu0 %v1487
      %1512 = vmatprep.subr.bf16.mxu0 0
      %1513 = vmatpush1.bf16.msra.mxu0 0
      %1514 = vmatprep.subr.bf16.mxu0 0
      %1515 = vmatpush1.bf16.msra.mxu0 0
      %1516 = vmatprep.subr.bf16.mxu0 0
      %1517 = vmatpush1.bf16.msra.mxu0 0
      %1518 = vmatprep.subr.bf16.mxu0 0
      %1519 = vmatpush1.bf16.msra.mxu0 0
      %1520 = vmatprep.subr.bf16.mxu0 0
      %1521 = vmatpush1.bf16.msra.mxu0 0
      %1522 = vmatprep.subr.bf16.mxu0 0
      %1523 = vmatpush1.bf16.msra.mxu0 0
      %1524 = vmatprep.subr.bf16.mxu0 0
      %1525 = vmatpush1.bf16.msra.mxu0 0
      %1526 = vmatprep.subr.bf16.mxu0 0
      %1527 = vmatpush1.bf16.msra.mxu0 0
      %1528 = vmatprep.mubr.bf16.mxu0 0
      %1529 = vmatmul.mubr.bf16.gmra.mrb[0].mxu0 %v1440
      %v1530 = vpop.f32.mrb[0].mxu0
      %v1531 = vadd.f32 %v1446, %v1530
      %v1532 = vpop.f32.mrb[0].mxu0
      %v1533 = vpop.f32.mrb[0].mxu0
      %v1534 = vadd.f32 %v1446, %v1533
      %v1535 = vpop.f32.mrb[0].mxu0
      %1536 = vmatprep.mubr.bf16.mxu0 0
      %1537 = vmatmul.mubr.bf16.gmra.mrb[0].mxu0 %v1441
      %v1538 = vpop.f32.mrb[0].mxu0
      %v1539 = vadd.f32 %v1446, %v1538
      %v1540 = vpop.f32.mrb[0].mxu0
      %v1541 = vpop.f32.mrb[0].mxu0
      %v1542 = vpop.f32.mrb[0].mxu0
      %1543 = vdwg.mxu0
      %v1544 = vadd.f32 %v1279, %v1531
      %v1545 = vadd.f32 %v1280, %v1534
      %v1546 = vadd.f32 %v1281, %v1539
      %v1547 = vld [vmem:[%s15] sm:$0x1]
      %v1548 = vld [vmem:[%s16] sm:$0x1]
      %v1549 = vsel %vm667, %v1544, 0.0
      %1550 = vadd.xlane.f32.xlu0 %v1549
      %v1551 = vpop.xlane.xlu0 %1550
      %v1552 = vsel %vm667, %v1545, 0.0
      %1553 = vadd.xlane.f32.xlu0 %v1552
      %v1554 = vpop.xlane.xlu0 %1553
      %v1555 = vsel %vm667, %v1546, 0.0
      %1556 = vadd.xlane.f32.xlu0 %v1555
      %v1557 = vpop.xlane.xlu0 %1556
      %v1558 = vmul.f32 %v1551, %v677
      %v1559 = vmul.f32 %v1554, %v677
      %v1560 = vmul.f32 %v1557, %v677
      %v1561 = vsub.f32 %v1544, %v1558
      %v1562 = vsub.f32 %v1545, %v1559
      %v1563 = vsub.f32 %v1546, %v1560
      %v1564 = vmul.f32 %v1561, %v1561
      %v1565 = vmul.f32 %v1562, %v1562
      %v1566 = vmul.f32 %v1563, %v1563
      %v1567 = vsel %vm667, %v1564, 0.0
      %1568 = vadd.xlane.f32.xlu0 %v1567
      %v1569 = vpop.xlane.xlu0 %1568
      %v1570 = vsel %vm667, %v1565, 0.0
      %1571 = vadd.xlane.f32.xlu0 %v1570
      %v1572 = vpop.xlane.xlu0 %1571
      %v1573 = vsel %vm667, %v1566, 0.0
      %1574 = vadd.xlane.f32.xlu0 %v1573
      %v1575 = vpop.xlane.xlu0 %1574
      %v1576 = vmul.f32 %v1569, %v677
      %v1577 = vmul.f32 %v1572, %v677
      %v1578 = vmul.f32 %v1575, %v677
      %v1579 = vadd.f32 %v1576, 1e-06
      %v1580 = vadd.f32 %v1577, 1e-06
      %v1581 = vadd.f32 %v1578, 1e-06
      %v1582 = vrsqrt.pop %v1579
      %v1583 = vrsqrt.pop %v1580
      %v1584 = vrsqrt.pop %v1581
      %v1585 = vmul.f32 %v1561, %v1582
      %v1586 = vmul.f32 %v1562, %v1583
      %v1587 = vmul.f32 %v1563, %v1584
      %v1589 = vlaneseq
      %v1590 = vshrl.u32 %v1589, 7
      %v1591 = vsub.s32 0, %v1590
      %v1592 = vrot.slane %v1547, %v1591
      %v1594 = vmul.f32 %v1585, %v1592
      %v1595 = vmul.f32 %v1586, %v1592
      %v1596 = vmul.f32 %v1587, %v1592
      %v1598 = vlaneseq
      %v1599 = vshrl.u32 %v1598, 7
      %v1600 = vsub.s32 0, %v1599
      %v1601 = vrot.slane %v1548, %v1600
      %v1603 = vadd.f32 %v1594, %v1601
      %v1604 = vadd.f32 %v1595, %v1601
      %v1605 = vadd.f32 %v1596, %v1601
      %v1606 = vpack.c.bf16 %v1604, %v1603
      %v1607 = vpack.c.bf16 %v1605, %v1605
      %v1608 = vld [vmem:[%s17] sm:$0xff]
      %v1609 = vld [vmem:[%s17 + $0x8] sm:$0xff]
      %v1610 = vld [vmem:[%s17 + $0x10] sm:$0xff]
      %v1611 = vld [vmem:[%s17 + $0x18] sm:$0xff]
      %v1612 = vld [vmem:[%s18] sm:$0x3]
      %v1614 = vlaneseq
      %v1615 = vshrl.u32 %v1614, 7
      %v1616 = vsub.s32 0, %v1615
      %v1617 = vrot.slane %v1612, %v1616
      %v1618 = vlaneseq
      %v1619 = vshrl.u32 %v1618, 7
      %v1620 = vsub.s32 1, %v1619
      %v1621 = vrot.slane %v1612, %v1620
      %v1628 = vunpack.c.l.b16 %v1608
      %v1629 = vunpack.c.h.b16 %v1608
      %v1630 = vunpack.c.l.b16 %v1609
      %v1631 = vunpack.c.h.b16 %v1609
      %v1632 = vunpack.c.l.b16 %v1610
      %v1633 = vunpack.c.h.b16 %v1610
      %v1634 = vunpack.c.l.b16 %v1611
      %v1635 = vunpack.c.h.b16 %v1611
      %v1636 = vpack.c.b16 %v1630, %v1628
      %v1637 = vpack.c.b16 %v1631, %v1629
      %v1638 = vpack.c.b16 %v1634, %v1632
      %v1639 = vpack.c.b16 %v1635, %v1633
      %v1645 = vsel %vm667, %v1606, 0
      %v1648 = vsel %vm667, %v1607, 0
      %1650 = vmatprep.subr.bf16.mxu0 %v1637
      %1651 = vmatpush1.bf16.msra.mxu0 %v1636
      %1652 = vmatprep.subr.bf16.mxu0 %v1639
      %1653 = vmatpush1.bf16.msra.mxu0 %v1638
      %1654 = vmatprep.subr.bf16.mxu0 0
      %1655 = vmatpush1.bf16.msra.mxu0 0
      %1656 = vmatprep.subr.bf16.mxu0 0
      %1657 = vmatpush1.bf16.msra.mxu0 0
      %1658 = vmatprep.subr.bf16.mxu0 0
      %1659 = vmatpush1.bf16.msra.mxu0 0
      %1660 = vmatprep.subr.bf16.mxu0 0
      %1661 = vmatpush1.bf16.msra.mxu0 0
      %1662 = vmatprep.subr.bf16.mxu0 0
      %1663 = vmatpush1.bf16.msra.mxu0 0
      %1664 = vmatprep.subr.bf16.mxu0 0
      %1665 = vmatpush1.bf16.msra.mxu0 0
      %1666 = vmatprep.subr.bf16.mxu0 0
      %1667 = vmatpush1.bf16.msra.mxu0 0
      %1668 = vmatprep.subr.bf16.mxu0 0
      %1669 = vmatpush1.bf16.msra.mxu0 0
      %1670 = vmatprep.subr.bf16.mxu0 0
      %1671 = vmatpush1.bf16.msra.mxu0 0
      %1672 = vmatprep.subr.bf16.mxu0 0
      %1673 = vmatpush1.bf16.msra.mxu0 0
      %1674 = vmatprep.subr.bf16.mxu0 0
      %1675 = vmatpush1.bf16.msra.mxu0 0
      %1676 = vmatprep.subr.bf16.mxu0 0
      %1677 = vmatpush1.bf16.msra.mxu0 0
      %1678 = vmatprep.subr.bf16.mxu0 0
      %1679 = vmatpush1.bf16.msra.mxu0 0
      %1680 = vmatprep.subr.bf16.mxu0 0
      %1681 = vmatpush1.bf16.msra.mxu0 0
      %1682 = vmatprep.mubr.bf16.mxu0 0
      %1683 = vmatmul.mubr.bf16.gmra.mrb[0].mxu0 %v1645
      %v1684 = vpop.f32.mrb[0].mxu0
      %v1685 = vadd.f32 %v1617, %v1684
      %v1686 = vpop.f32.mrb[0].mxu0
      %v1687 = vadd.f32 %v1621, %v1686
      %v1688 = vpop.f32.mrb[0].mxu0
      %v1689 = vadd.f32 %v1617, %v1688
      %v1690 = vpop.f32.mrb[0].mxu0
      %v1691 = vadd.f32 %v1621, %v1690
      %1692 = vmatprep.mubr.bf16.mxu0 0
      %1693 = vmatmul.mubr.bf16.gmra.mrb[0].mxu0 %v1648
      %v1694 = vpop.f32.mrb[0].mxu0
      %v1695 = vadd.f32 %v1617, %v1694
      %v1696 = vpop.f32.mrb[0].mxu0
      %v1697 = vadd.f32 %v1621, %v1696
      %v1698 = vpop.f32.mrb[0].mxu0
      %v1699 = vpop.f32.mrb[0].mxu0
      %1700 = vdwg.mxu0
      %1701 = vst [vmem:[%s602] sm:$0xff] %v1685
      %1702 = vst [vmem:[%s602 + $0x8] sm:$0xff] %v1687
      %1703 = vst [vmem:[%s602 + $0x10] sm:$0xff] %v1689
      %1704 = vst [vmem:[%s602 + $0x18] sm:$0xff] %v1691
      %1705 = vst [vmem:[%s602 + $0x20] sm:$0xff] %v1695
      %1706 = vst [vmem:[%s602 + $0x28] sm:$0xff] %v1697
      %p1707 = scmp.lt.s32.totalorder %s30, 1
      %s1708 = scalar_select %p1707, %s30, 1
      %s1709 = smul.addr %s1708, 6
      %s1710 = smul.addr %s1709, 8
      %s1711 = scalar_lea.vmem %s19, %s1710
      // Predicated region
      $region97: #{mae_forward.3} parent=95 // pred_check
        %p1712 = pneg %p452
      $region98: #{mae_forward.3} parent=95 // pred_check_branch
        %1714 = sbr.rel (%p1712) target = $region100
      $region99: #{mae_forward.3} parent=95 // pred_region
        _
      $region100: #{mae_forward.3} parent=95 // pred_fallthru
        _
    $region96: #{mae_forward.3} parent=5 // pred_fallthru
      _
    %p1715 = scmp.le.s32.totalorder 2, %s25
    // Predicated region
    $region101: #{mae_forward.3} parent=5 // pred_check
      %p1716 = pneg %p1715
    $region102: #{mae_forward.3} parent=5 // pred_check_branch
      %1718 = sbr.rel (%p1716) target = $region104
    $region103: #{mae_forward.3} parent=5 // pred_region
      %s1719 = ssub.s32 %s25, 2
      // Predicated region
      $region105: #{mae_forward.3} parent=103 // pred_check
        %p1720 = pneg %p458
      $region106: #{mae_forward.3} parent=103 // pred_check_branch
        %1722 = sbr.rel (%p1720) target = $region108
      $region107: #{mae_forward.3} parent=103 // pred_region
        %p1723 = scmp.lt.s32.totalorder %s31, 1
        %s1724 = scalar_select %p1723, %s31, 1
        %s1725 = smul.addr %s1724, 6
        %s1726 = smul.addr %s1725, 8
        %s1727 = scalar_lea.vmem %s19, %s1726
      $region108: #{mae_forward.3} parent=103 // pred_fallthru
        _
    $region104: #{mae_forward.3} parent=5 // pred_fallthru
      _
  $region6: #{mae_forward.3} parent=0 // loop_footer
    %s29 = sadd.s32 1, %s25
  $region7: #{mae_forward.3} parent=0 // loop_footer_branch
    %24 = sbr.rel target = $region3
  $region8: #{mae_forward.3} parent=0 // loop_exit
    _

// kernel: mae_forward.2
$region0: #{mae_forward.2}
  #allocation0 [shape = 'u32[]', space=smem, size = 0x4, offset = 0x4, fixed_abs, tag = 'smem constant byte address 0x4 - core index']
  #allocation1 [shape = 'u32[144,128]{1,0:T(1,128)}', space=vmem, size = 0x12000, scoped, tag = 'internal scratch']
  %s0 = inlined_call_operand.vmem [shape: f32[2,8,192], index: 0, kind: input, shape index: {}]
  %s1 = inlined_call_operand.vmem [shape: f32[2,8,64], index: 1, kind: input, shape index: {}]
  %s2 = inlined_call_operand.vmem [shape: f32[32,64], index: 2, kind: input, shape index: {}]
  %s3 = inlined_call_operand.vmem [shape: f32[32,8], index: 3, kind: input, shape index: {}]
  %s4 = inlined_call_operand.vmem [shape: bf16[192,64], index: 4, kind: input, shape index: {}]
  %s5 = inlined_call_operand.vmem [shape: f32[2,1,64], index: 5, kind: input, shape index: {}]
  %s6 = inlined_call_operand.vmem [shape: f32[2,1,64], index: 6, kind: input, shape index: {}]
  %s7 = inlined_call_operand.vmem [shape: bf16[2,64,192], index: 7, kind: input, shape index: {}]
  %s8 = inlined_call_operand.vmem [shape: f32[2,1,192], index: 8, kind: input, shape index: {}]
  %s9 = inlined_call_operand.vmem [shape: bf16[2,64,64], index: 9, kind: input, shape index: {}]
  %s10 = inlined_call_operand.vmem [shape: f32[2,1,64], index: 10, kind: input, shape index: {}]
  %s11 = inlined_call_operand.vmem [shape: f32[2,1,64], index: 11, kind: input, shape index: {}]
  %s12 = inlined_call_operand.vmem [shape: f32[2,1,64], index: 12, kind: input, shape index: {}]
  %s13 = inlined_call_operand.vmem [shape: bf16[2,64,256], index: 13, kind: input, shape index: {}]
  %s14 = inlined_call_operand.vmem [shape: f32[2,1,256], index: 14, kind: input, shape index: {}]
  %s15 = inlined_call_operand.vmem [shape: bf16[2,256,64], index: 15, kind: input, shape index: {}]
  %s16 = inlined_call_operand.vmem [shape: f32[2,1,64], index: 16, kind: input, shape index: {}]
  %s17 = inlined_call_operand.vmem [shape: f32[1,64], index: 17, kind: input, shape index: {}]
  %s18 = inlined_call_operand.vmem [shape: f32[1,64], index: 18, kind: input, shape index: {}]
  %s19 = inlined_call_operand.vmem [shape: bf16[64,128], index: 19, kind: input, shape index: {}]
  %s20 = inlined_call_operand.vmem [shape: f32[1,128], index: 20, kind: input, shape index: {}]
  %s21 = inlined_call_operand.vmem [shape: f32[2,8,128], index: 21, kind: output, shape index: {}]
  %s22 = sld [smem:[#allocation0]]
  $region117: #{mae_forward.2} parent=0
    _
  %s24 = ssub.s32 1, %s22
  %s25 = scalar_select 0, %s24, %s22
  loop: start=0, step=1, limit=4
  $region2: #{mae_forward.2} parent=0 // loop_pre_header
    _
  $region3: #{mae_forward.2} parent=0 // loop_header
    %s27 = sphi 0, %s31
    %p28 = scmp.ge.s32.totalorder %s27, 4
    %s37 = sphi 0, %s39
    %s40 = sphi 0, %s37
    %s41 = sphi 0, %s40
    %s57 = sphi 0, %s41
    %s63 = sphi 0, %s65
    %s66 = sphi 0, %s63
    %s67 = sphi 0, %s66
    %s83 = sphi 0, %s67
    %s87 = sphi 0, %s87
    %s89 = sphi 0, %s87
    %s90 = sphi 0, %s89
    %s104 = sphi 0, %s90
    %s108 = sphi 0, %s108
    %s110 = sphi 0, %s108
    %s111 = sphi 0, %s110
    %s125 = sphi 0, %s111
    %s129 = sphi 0, %s129
    %s131 = sphi 0, %s129
    %s132 = sphi 0, %s131
    %s146 = sphi 0, %s132
    %s150 = sphi 0, %s150
    %s152 = sphi 0, %s150
    %s153 = sphi 0, %s152
    %s167 = sphi 0, %s153
    %s171 = sphi 0, %s171
    %s173 = sphi 0, %s171
    %s174 = sphi 0, %s173
    %s188 = sphi 0, %s174
    %s192 = sphi 0, %s192
    %s194 = sphi 0, %s192
    %s195 = sphi 0, %s194
    %s209 = sphi 0, %s195
    %s213 = sphi 0, %s213
    %s215 = sphi 0, %s213
    %s216 = sphi 0, %s215
    %s230 = sphi 0, %s216
    %s234 = sphi 0, %s234
    %s236 = sphi 0, %s234
    %s237 = sphi 0, %s236
    %s251 = sphi 0, %s237
    %s255 = sphi 0, %s255
    %s257 = sphi 0, %s255
    %s258 = sphi 0, %s257
    %s272 = sphi 0, %s258
    %s276 = sphi 0, %s276
    %s278 = sphi 0, %s276
    %s279 = sphi 0, %s278
    %s293 = sphi 0, %s279
    %s297 = sphi 0, %s297
    %s299 = sphi 0, %s297
    %s300 = sphi 0, %s299
    %s314 = sphi 0, %s300
    %s318 = sphi 0, %s318
    %s320 = sphi 0, %s318
    %s321 = sphi 0, %s320
    %s335 = sphi 0, %s321
    %s339 = sphi 0, %s339
    %s341 = sphi 0, %s339
    %s342 = sphi 0, %s341
    %s356 = sphi 0, %s342
    %s360 = sphi 0, %s360
    %s362 = sphi 0, %s360
    %s363 = sphi 0, %s362
    %s377 = sphi 0, %s363
    %s381 = sphi 0, %s381
    %s383 = sphi 0, %s381
    %s384 = sphi 0, %s383
    %s398 = sphi 0, %s384
    %s402 = sphi 0, %s402
    %s404 = sphi 0, %s402
    %s405 = sphi 0, %s404
    %s419 = sphi 0, %s405
    %s423 = sphi 0, %s423
    %s425 = sphi 0, %s423
    %s426 = sphi 0, %s425
    %s440 = sphi 0, %s426
    %s444 = sphi 0, %s444
    %s446 = sphi 0, %s444
    %s447 = sphi 0, %s446
    %s461 = sphi 0, %s447
    %s465 = sphi 0, %s465
    %s467 = sphi 0, %s465
    %s468 = sphi 0, %s467
    %s482 = sphi 0, %s468
    %s488 = sphi 0, %s490
    %s491 = sphi 0, %s488
    %s492 = sphi 0, %s491
    %s508 = sphi 0, %s492
  $region4: #{mae_forward.2} parent=0 // loop_header_branch
    %30 = sbr.rel (%p28) target = $region8
  $region5: #{mae_forward.2} parent=0 // loop_body
    %s32 = ssub.s32 %s27, 1
    %s33 = ssub.s32 %s27, 2
    %s34 = sadd.s32 %s27, 1
    %s35 = ssub.s32 %s27, %s34
    %p36 = scmp.eq.s32.totalorder %s35, 0
    %s38 = sadd.s32 %s37, 1
    %s39 = scalar_select %p36, %s37, %s38
    %p42 = pneg %p36
    %p43 = scmp.eq.s32.totalorder %s27, 1
    %p44 = por %p42, %p43
    %p45 = scmp.ne.s32.totalorder %s37, %s40
    %p46 = scmp.eq.s32.totalorder %s27, 0
    %p47 = por %p45, %p46
    %p48 = scmp.ne.s32.totalorder %s37, %s40
    %p49 = scmp.eq.s32.totalorder %s32, 1
    %p50 = por %p48, %p49
    %p51 = scmp.ne.s32.totalorder %s40, %s41
    %p52 = scmp.eq.s32.totalorder %s32, 0
    %p53 = por %p51, %p52
    %p54 = scmp.ne.s32.totalorder %s40, %s41
    %p55 = scmp.eq.s32.totalorder %s33, 1
    %p56 = por %p54, %p55
    %p58 = scmp.ne.s32.totalorder %s41, %s57
    %p59 = scmp.eq.s32.totalorder %s33, 0
    %p60 = por %p58, %p59
    %s61 = ssub.s32 %s27, %s34
    %p62 = scmp.eq.s32.totalorder %s61, 0
    %s64 = sadd.s32 %s63, 1
    %s65 = scalar_select %p62, %s63, %s64
    %p68 = pneg %p62
    %p69 = scmp.eq.s32.totalorder %s27, 1
    %p70 = por %p68, %p69
    %p71 = scmp.ne.s32.totalorder %s63, %s66
    %p72 = scmp.eq.s32.totalorder %s27, 0
    %p73 = por %p71, %p72
    %p74 = scmp.ne.s32.totalorder %s63, %s66
    %p75 = scmp.eq.s32.totalorder %s32, 1
    %p76 = por %p74, %p75
    %p77 = scmp.ne.s32.totalorder %s66, %s67
    %p78 = scmp.eq.s32.totalorder %s32, 0
    %p79 = por %p77, %p78
    %p80 = scmp.ne.s32.totalorder %s66, %s67
    %p81 = scmp.eq.s32.totalorder %s33, 1
    %p82 = por %p80, %p81
    %p84 = scmp.ne.s32.totalorder %s67, %s83
    %p85 = scmp.eq.s32.totalorder %s33, 0
    %p86 = por %p84, %p85
    %s88 = sadd.s32 %s87, 1
    %p91 = scmp.eq.s32.totalorder %s27, 1
    %p92 = scmp.ne.s32.totalorder %s87, %s89
    %p93 = scmp.eq.s32.totalorder %s27, 0
    %p94 = por %p92, %p93
    %p95 = scmp.ne.s32.totalorder %s87, %s89
    %p96 = scmp.eq.s32.totalorder %s32, 1
    %p97 = por %p95, %p96
    %p98 = scmp.ne.s32.totalorder %s89, %s90
    %p99 = scmp.eq.s32.totalorder %s32, 0
    %p100 = por %p98, %p99
    %p101 = scmp.ne.s32.totalorder %s89, %s90
    %p102 = scmp.eq.s32.totalorder %s33, 1
    %p103 = por %p101, %p102
    %p105 = scmp.ne.s32.totalorder %s90, %s104
    %p106 = scmp.eq.s32.totalorder %s33, 0
    %p107 = por %p105, %p106
    %s109 = sadd.s32 %s108, 1
    %p112 = scmp.eq.s32.totalorder %s27, 1
    %p113 = scmp.ne.s32.totalorder %s108, %s110
    %p114 = scmp.eq.s32.totalorder %s27, 0
    %p115 = por %p113, %p114
    %p116 = scmp.ne.s32.totalorder %s108, %s110
    %p117 = scmp.eq.s32.totalorder %s32, 1
    %p118 = por %p116, %p117
    %p119 = scmp.ne.s32.totalorder %s110, %s111
    %p120 = scmp.eq.s32.totalorder %s32, 0
    %p121 = por %p119, %p120
    %p122 = scmp.ne.s32.totalorder %s110, %s111
    %p123 = scmp.eq.s32.totalorder %s33, 1
    %p124 = por %p122, %p123
    %p126 = scmp.ne.s32.totalorder %s111, %s125
    %p127 = scmp.eq.s32.totalorder %s33, 0
    %p128 = por %p126, %p127
    %s130 = sadd.s32 %s129, 1
    %p133 = scmp.eq.s32.totalorder %s27, 1
    %p134 = scmp.ne.s32.totalorder %s129, %s131
    %p135 = scmp.eq.s32.totalorder %s27, 0
    %p136 = por %p134, %p135
    %p137 = scmp.ne.s32.totalorder %s129, %s131
    %p138 = scmp.eq.s32.totalorder %s32, 1
    %p139 = por %p137, %p138
    %p140 = scmp.ne.s32.totalorder %s131, %s132
    %p141 = scmp.eq.s32.totalorder %s32, 0
    %p142 = por %p140, %p141
    %p143 = scmp.ne.s32.totalorder %s131, %s132
    %p144 = scmp.eq.s32.totalorder %s33, 1
    %p145 = por %p143, %p144
    %p147 = scmp.ne.s32.totalorder %s132, %s146
    %p148 = scmp.eq.s32.totalorder %s33, 0
    %p149 = por %p147, %p148
    %s151 = sadd.s32 %s150, 1
    %p154 = scmp.eq.s32.totalorder %s27, 1
    %p155 = scmp.ne.s32.totalorder %s150, %s152
    %p156 = scmp.eq.s32.totalorder %s27, 0
    %p157 = por %p155, %p156
    %p158 = scmp.ne.s32.totalorder %s150, %s152
    %p159 = scmp.eq.s32.totalorder %s32, 1
    %p160 = por %p158, %p159
    %p161 = scmp.ne.s32.totalorder %s152, %s153
    %p162 = scmp.eq.s32.totalorder %s32, 0
    %p163 = por %p161, %p162
    %p164 = scmp.ne.s32.totalorder %s152, %s153
    %p165 = scmp.eq.s32.totalorder %s33, 1
    %p166 = por %p164, %p165
    %p168 = scmp.ne.s32.totalorder %s153, %s167
    %p169 = scmp.eq.s32.totalorder %s33, 0
    %p170 = por %p168, %p169
    %s172 = sadd.s32 %s171, 1
    %p175 = scmp.eq.s32.totalorder %s27, 1
    %p176 = scmp.ne.s32.totalorder %s171, %s173
    %p177 = scmp.eq.s32.totalorder %s27, 0
    %p178 = por %p176, %p177
    %p179 = scmp.ne.s32.totalorder %s171, %s173
    %p180 = scmp.eq.s32.totalorder %s32, 1
    %p181 = por %p179, %p180
    %p182 = scmp.ne.s32.totalorder %s173, %s174
    %p183 = scmp.eq.s32.totalorder %s32, 0
    %p184 = por %p182, %p183
    %p185 = scmp.ne.s32.totalorder %s173, %s174
    %p186 = scmp.eq.s32.totalorder %s33, 1
    %p187 = por %p185, %p186
    %p189 = scmp.ne.s32.totalorder %s174, %s188
    %p190 = scmp.eq.s32.totalorder %s33, 0
    %p191 = por %p189, %p190
    %s193 = sadd.s32 %s192, 1
    %p196 = scmp.eq.s32.totalorder %s27, 1
    %p197 = scmp.ne.s32.totalorder %s192, %s194
    %p198 = scmp.eq.s32.totalorder %s27, 0
    %p199 = por %p197, %p198
    %p200 = scmp.ne.s32.totalorder %s192, %s194
    %p201 = scmp.eq.s32.totalorder %s32, 1
    %p202 = por %p200, %p201
    %p203 = scmp.ne.s32.totalorder %s194, %s195
    %p204 = scmp.eq.s32.totalorder %s32, 0
    %p205 = por %p203, %p204
    %p206 = scmp.ne.s32.totalorder %s194, %s195
    %p207 = scmp.eq.s32.totalorder %s33, 1
    %p208 = por %p206, %p207
    %p210 = scmp.ne.s32.totalorder %s195, %s209
    %p211 = scmp.eq.s32.totalorder %s33, 0
    %p212 = por %p210, %p211
    %s214 = sadd.s32 %s213, 1
    %p217 = scmp.eq.s32.totalorder %s27, 1
    %p218 = scmp.ne.s32.totalorder %s213, %s215
    %p219 = scmp.eq.s32.totalorder %s27, 0
    %p220 = por %p218, %p219
    %p221 = scmp.ne.s32.totalorder %s213, %s215
    %p222 = scmp.eq.s32.totalorder %s32, 1
    %p223 = por %p221, %p222
    %p224 = scmp.ne.s32.totalorder %s215, %s216
    %p225 = scmp.eq.s32.totalorder %s32, 0
    %p226 = por %p224, %p225
    %p227 = scmp.ne.s32.totalorder %s215, %s216
    %p228 = scmp.eq.s32.totalorder %s33, 1
    %p229 = por %p227, %p228
    %p231 = scmp.ne.s32.totalorder %s216, %s230
    %p232 = scmp.eq.s32.totalorder %s33, 0
    %p233 = por %p231, %p232
    %s235 = sadd.s32 %s234, 1
    %p238 = scmp.eq.s32.totalorder %s27, 1
    %p239 = scmp.ne.s32.totalorder %s234, %s236
    %p240 = scmp.eq.s32.totalorder %s27, 0
    %p241 = por %p239, %p240
    %p242 = scmp.ne.s32.totalorder %s234, %s236
    %p243 = scmp.eq.s32.totalorder %s32, 1
    %p244 = por %p242, %p243
    %p245 = scmp.ne.s32.totalorder %s236, %s237
    %p246 = scmp.eq.s32.totalorder %s32, 0
    %p247 = por %p245, %p246
    %p248 = scmp.ne.s32.totalorder %s236, %s237
    %p249 = scmp.eq.s32.totalorder %s33, 1
    %p250 = por %p248, %p249
    %p252 = scmp.ne.s32.totalorder %s237, %s251
    %p253 = scmp.eq.s32.totalorder %s33, 0
    %p254 = por %p252, %p253
    %s256 = sadd.s32 %s255, 1
    %p259 = scmp.eq.s32.totalorder %s27, 1
    %p260 = scmp.ne.s32.totalorder %s255, %s257
    %p261 = scmp.eq.s32.totalorder %s27, 0
    %p262 = por %p260, %p261
    %p263 = scmp.ne.s32.totalorder %s255, %s257
    %p264 = scmp.eq.s32.totalorder %s32, 1
    %p265 = por %p263, %p264
    %p266 = scmp.ne.s32.totalorder %s257, %s258
    %p267 = scmp.eq.s32.totalorder %s32, 0
    %p268 = por %p266, %p267
    %p269 = scmp.ne.s32.totalorder %s257, %s258
    %p270 = scmp.eq.s32.totalorder %s33, 1
    %p271 = por %p269, %p270
    %p273 = scmp.ne.s32.totalorder %s258, %s272
    %p274 = scmp.eq.s32.totalorder %s33, 0
    %p275 = por %p273, %p274
    %s277 = sadd.s32 %s276, 1
    %p280 = scmp.eq.s32.totalorder %s27, 1
    %p281 = scmp.ne.s32.totalorder %s276, %s278
    %p282 = scmp.eq.s32.totalorder %s27, 0
    %p283 = por %p281, %p282
    %p284 = scmp.ne.s32.totalorder %s276, %s278
    %p285 = scmp.eq.s32.totalorder %s32, 1
    %p286 = por %p284, %p285
    %p287 = scmp.ne.s32.totalorder %s278, %s279
    %p288 = scmp.eq.s32.totalorder %s32, 0
    %p289 = por %p287, %p288
    %p290 = scmp.ne.s32.totalorder %s278, %s279
    %p291 = scmp.eq.s32.totalorder %s33, 1
    %p292 = por %p290, %p291
    %p294 = scmp.ne.s32.totalorder %s279, %s293
    %p295 = scmp.eq.s32.totalorder %s33, 0
    %p296 = por %p294, %p295
    %s298 = sadd.s32 %s297, 1
    %p301 = scmp.eq.s32.totalorder %s27, 1
    %p302 = scmp.ne.s32.totalorder %s297, %s299
    %p303 = scmp.eq.s32.totalorder %s27, 0
    %p304 = por %p302, %p303
    %p305 = scmp.ne.s32.totalorder %s297, %s299
    %p306 = scmp.eq.s32.totalorder %s32, 1
    %p307 = por %p305, %p306
    %p308 = scmp.ne.s32.totalorder %s299, %s300
    %p309 = scmp.eq.s32.totalorder %s32, 0
    %p310 = por %p308, %p309
    %p311 = scmp.ne.s32.totalorder %s299, %s300
    %p312 = scmp.eq.s32.totalorder %s33, 1
    %p313 = por %p311, %p312
    %p315 = scmp.ne.s32.totalorder %s300, %s314
    %p316 = scmp.eq.s32.totalorder %s33, 0
    %p317 = por %p315, %p316
    %s319 = sadd.s32 %s318, 1
    %p322 = scmp.eq.s32.totalorder %s27, 1
    %p323 = scmp.ne.s32.totalorder %s318, %s320
    %p324 = scmp.eq.s32.totalorder %s27, 0
    %p325 = por %p323, %p324
    %p326 = scmp.ne.s32.totalorder %s318, %s320
    %p327 = scmp.eq.s32.totalorder %s32, 1
    %p328 = por %p326, %p327
    %p329 = scmp.ne.s32.totalorder %s320, %s321
    %p330 = scmp.eq.s32.totalorder %s32, 0
    %p331 = por %p329, %p330
    %p332 = scmp.ne.s32.totalorder %s320, %s321
    %p333 = scmp.eq.s32.totalorder %s33, 1
    %p334 = por %p332, %p333
    %p336 = scmp.ne.s32.totalorder %s321, %s335
    %p337 = scmp.eq.s32.totalorder %s33, 0
    %p338 = por %p336, %p337
    %s340 = sadd.s32 %s339, 1
    %p343 = scmp.eq.s32.totalorder %s27, 1
    %p344 = scmp.ne.s32.totalorder %s339, %s341
    %p345 = scmp.eq.s32.totalorder %s27, 0
    %p346 = por %p344, %p345
    %p347 = scmp.ne.s32.totalorder %s339, %s341
    %p348 = scmp.eq.s32.totalorder %s32, 1
    %p349 = por %p347, %p348
    %p350 = scmp.ne.s32.totalorder %s341, %s342
    %p351 = scmp.eq.s32.totalorder %s32, 0
    %p352 = por %p350, %p351
    %p353 = scmp.ne.s32.totalorder %s341, %s342
    %p354 = scmp.eq.s32.totalorder %s33, 1
    %p355 = por %p353, %p354
    %p357 = scmp.ne.s32.totalorder %s342, %s356
    %p358 = scmp.eq.s32.totalorder %s33, 0
    %p359 = por %p357, %p358
    %s361 = sadd.s32 %s360, 1
    %p364 = scmp.eq.s32.totalorder %s27, 1
    %p365 = scmp.ne.s32.totalorder %s360, %s362
    %p366 = scmp.eq.s32.totalorder %s27, 0
    %p367 = por %p365, %p366
    %p368 = scmp.ne.s32.totalorder %s360, %s362
    %p369 = scmp.eq.s32.totalorder %s32, 1
    %p370 = por %p368, %p369
    %p371 = scmp.ne.s32.totalorder %s362, %s363
    %p372 = scmp.eq.s32.totalorder %s32, 0
    %p373 = por %p371, %p372
    %p374 = scmp.ne.s32.totalorder %s362, %s363
    %p375 = scmp.eq.s32.totalorder %s33, 1
    %p376 = por %p374, %p375
    %p378 = scmp.ne.s32.totalorder %s363, %s377
    %p379 = scmp.eq.s32.totalorder %s33, 0
    %p380 = por %p378, %p379
    %s382 = sadd.s32 %s381, 1
    %p385 = scmp.eq.s32.totalorder %s27, 1
    %p386 = scmp.ne.s32.totalorder %s381, %s383
    %p387 = scmp.eq.s32.totalorder %s27, 0
    %p388 = por %p386, %p387
    %p389 = scmp.ne.s32.totalorder %s381, %s383
    %p390 = scmp.eq.s32.totalorder %s32, 1
    %p391 = por %p389, %p390
    %p392 = scmp.ne.s32.totalorder %s383, %s384
    %p393 = scmp.eq.s32.totalorder %s32, 0
    %p394 = por %p392, %p393
    %p395 = scmp.ne.s32.totalorder %s383, %s384
    %p396 = scmp.eq.s32.totalorder %s33, 1
    %p397 = por %p395, %p396
    %p399 = scmp.ne.s32.totalorder %s384, %s398
    %p400 = scmp.eq.s32.totalorder %s33, 0
    %p401 = por %p399, %p400
    %s403 = sadd.s32 %s402, 1
    %p406 = scmp.eq.s32.totalorder %s27, 1
    %p407 = scmp.ne.s32.totalorder %s402, %s404
    %p408 = scmp.eq.s32.totalorder %s27, 0
    %p409 = por %p407, %p408
    %p410 = scmp.ne.s32.totalorder %s402, %s404
    %p411 = scmp.eq.s32.totalorder %s32, 1
    %p412 = por %p410, %p411
    %p413 = scmp.ne.s32.totalorder %s404, %s405
    %p414 = scmp.eq.s32.totalorder %s32, 0
    %p415 = por %p413, %p414
    %p416 = scmp.ne.s32.totalorder %s404, %s405
    %p417 = scmp.eq.s32.totalorder %s33, 1
    %p418 = por %p416, %p417
    %p420 = scmp.ne.s32.totalorder %s405, %s419
    %p421 = scmp.eq.s32.totalorder %s33, 0
    %p422 = por %p420, %p421
    %s424 = sadd.s32 %s423, 1
    %p427 = scmp.eq.s32.totalorder %s27, 1
    %p428 = scmp.ne.s32.totalorder %s423, %s425
    %p429 = scmp.eq.s32.totalorder %s27, 0
    %p430 = por %p428, %p429
    %p431 = scmp.ne.s32.totalorder %s423, %s425
    %p432 = scmp.eq.s32.totalorder %s32, 1
    %p433 = por %p431, %p432
    %p434 = scmp.ne.s32.totalorder %s425, %s426
    %p435 = scmp.eq.s32.totalorder %s32, 0
    %p436 = por %p434, %p435
    %p437 = scmp.ne.s32.totalorder %s425, %s426
    %p438 = scmp.eq.s32.totalorder %s33, 1
    %p439 = por %p437, %p438
    %p441 = scmp.ne.s32.totalorder %s426, %s440
    %p442 = scmp.eq.s32.totalorder %s33, 0
    %p443 = por %p441, %p442
    %s445 = sadd.s32 %s444, 1
    %p448 = scmp.eq.s32.totalorder %s27, 1
    %p449 = scmp.ne.s32.totalorder %s444, %s446
    %p450 = scmp.eq.s32.totalorder %s27, 0
    %p451 = por %p449, %p450
    %p452 = scmp.ne.s32.totalorder %s444, %s446
    %p453 = scmp.eq.s32.totalorder %s32, 1
    %p454 = por %p452, %p453
    %p455 = scmp.ne.s32.totalorder %s446, %s447
    %p456 = scmp.eq.s32.totalorder %s32, 0
    %p457 = por %p455, %p456
    %p458 = scmp.ne.s32.totalorder %s446, %s447
    %p459 = scmp.eq.s32.totalorder %s33, 1
    %p460 = por %p458, %p459
    %p462 = scmp.ne.s32.totalorder %s447, %s461
    %p463 = scmp.eq.s32.totalorder %s33, 0
    %p464 = por %p462, %p463
    %s466 = sadd.s32 %s465, 1
    %p469 = scmp.eq.s32.totalorder %s27, 1
    %p470 = scmp.ne.s32.totalorder %s465, %s467
    %p471 = scmp.eq.s32.totalorder %s27, 0
    %p472 = por %p470, %p471
    %p473 = scmp.ne.s32.totalorder %s465, %s467
    %p474 = scmp.eq.s32.totalorder %s32, 1
    %p475 = por %p473, %p474
    %p476 = scmp.ne.s32.totalorder %s467, %s468
    %p477 = scmp.eq.s32.totalorder %s32, 0
    %p478 = por %p476, %p477
    %p479 = scmp.ne.s32.totalorder %s467, %s468
    %p480 = scmp.eq.s32.totalorder %s33, 1
    %p481 = por %p479, %p480
    %p483 = scmp.ne.s32.totalorder %s468, %s482
    %p484 = scmp.eq.s32.totalorder %s33, 0
    %p485 = por %p483, %p484
    %s486 = ssub.s32 %s27, %s34
    %p487 = scmp.eq.s32.totalorder %s486, 0
    %s489 = sadd.s32 %s488, 1
    %s490 = scalar_select %p487, %s488, %s489
    %p493 = pneg %p487
    %p494 = scmp.eq.s32.totalorder %s27, 1
    %p495 = por %p493, %p494
    %p496 = scmp.ne.s32.totalorder %s488, %s491
    %p497 = scmp.eq.s32.totalorder %s27, 0
    %p498 = por %p496, %p497
    %p499 = scmp.ne.s32.totalorder %s488, %s491
    %p500 = scmp.eq.s32.totalorder %s32, 1
    %p501 = por %p499, %p500
    %p502 = scmp.ne.s32.totalorder %s491, %s492
    %p503 = scmp.eq.s32.totalorder %s32, 0
    %p504 = por %p502, %p503
    %p505 = scmp.ne.s32.totalorder %s491, %s492
    %p506 = scmp.eq.s32.totalorder %s33, 1
    %p507 = por %p505, %p506
    %p509 = scmp.ne.s32.totalorder %s492, %s508
    %p510 = scmp.eq.s32.totalorder %s33, 0
    %p511 = por %p509, %p510
    %p512 = scmp.le.s32.totalorder 1, %s27
    %p513 = scmp.lt.s32.totalorder %s27, 3
    %p514 = pnand %p512, %p513
    %p515 = pneg %p514
    // Predicated region
    $region9: #{mae_forward.2} parent=5 // pred_check
      _
    $region10: #{mae_forward.2} parent=5 // pred_check_branch
      %517 = sbr.rel (%p514) target = $region12
    $region11: #{mae_forward.2} parent=5 // pred_region
      %s518 = ssub.s32 %s27, 1
      // Predicated region
      $region13: #{mae_forward.2} parent=11 // pred_check
        %p519 = pneg %p100
      $region14: #{mae_forward.2} parent=11 // pred_check_branch
        %521 = sbr.rel (%p519) target = $region16
      $region15: #{mae_forward.2} parent=11 // pred_region
        _
      $region16: #{mae_forward.2} parent=11 // pred_fallthru
        _
      // Predicated region
      $region17: #{mae_forward.2} parent=11 // pred_check
        %p522 = pneg %p121
      $region18: #{mae_forward.2} parent=11 // pred_check_branch
        %524 = sbr.rel (%p522) target = $region20
      $region19: #{mae_forward.2} parent=11 // pred_region
        _
      $region20: #{mae_forward.2} parent=11 // pred_fallthru
        _
      // Predicated region
      $region21: #{mae_forward.2} parent=11 // pred_check
        %p525 = pneg %p142
      $region22: #{mae_forward.2} parent=11 // pred_check_branch
        %527 = sbr.rel (%p525) target = $region24
      $region23: #{mae_forward.2} parent=11 // pred_region
        _
      $region24: #{mae_forward.2} parent=11 // pred_fallthru
        _
      // Predicated region
      $region25: #{mae_forward.2} parent=11 // pred_check
        %p528 = pneg %p163
      $region26: #{mae_forward.2} parent=11 // pred_check_branch
        %530 = sbr.rel (%p528) target = $region28
      $region27: #{mae_forward.2} parent=11 // pred_region
        _
      $region28: #{mae_forward.2} parent=11 // pred_fallthru
        _
      // Predicated region
      $region29: #{mae_forward.2} parent=11 // pred_check
        %p531 = pneg %p184
      $region30: #{mae_forward.2} parent=11 // pred_check_branch
        %533 = sbr.rel (%p531) target = $region32
      $region31: #{mae_forward.2} parent=11 // pred_region
        _
      $region32: #{mae_forward.2} parent=11 // pred_fallthru
        _
      // Predicated region
      $region33: #{mae_forward.2} parent=11 // pred_check
        %p534 = pneg %p205
      $region34: #{mae_forward.2} parent=11 // pred_check_branch
        %536 = sbr.rel (%p534) target = $region36
      $region35: #{mae_forward.2} parent=11 // pred_region
        _
      $region36: #{mae_forward.2} parent=11 // pred_fallthru
        _
      // Predicated region
      $region37: #{mae_forward.2} parent=11 // pred_check
        %p537 = pneg %p226
      $region38: #{mae_forward.2} parent=11 // pred_check_branch
        %539 = sbr.rel (%p537) target = $region40
      $region39: #{mae_forward.2} parent=11 // pred_region
        _
      $region40: #{mae_forward.2} parent=11 // pred_fallthru
        _
      // Predicated region
      $region41: #{mae_forward.2} parent=11 // pred_check
        %p540 = pneg %p247
      $region42: #{mae_forward.2} parent=11 // pred_check_branch
        %542 = sbr.rel (%p540) target = $region44
      $region43: #{mae_forward.2} parent=11 // pred_region
        _
      $region44: #{mae_forward.2} parent=11 // pred_fallthru
        _
      // Predicated region
      $region45: #{mae_forward.2} parent=11 // pred_check
        %p543 = pneg %p268
      $region46: #{mae_forward.2} parent=11 // pred_check_branch
        %545 = sbr.rel (%p543) target = $region48
      $region47: #{mae_forward.2} parent=11 // pred_region
        _
      $region48: #{mae_forward.2} parent=11 // pred_fallthru
        _
      // Predicated region
      $region49: #{mae_forward.2} parent=11 // pred_check
        %p546 = pneg %p289
      $region50: #{mae_forward.2} parent=11 // pred_check_branch
        %548 = sbr.rel (%p546) target = $region52
      $region51: #{mae_forward.2} parent=11 // pred_region
        _
      $region52: #{mae_forward.2} parent=11 // pred_fallthru
        _
      // Predicated region
      $region53: #{mae_forward.2} parent=11 // pred_check
        %p549 = pneg %p310
      $region54: #{mae_forward.2} parent=11 // pred_check_branch
        %551 = sbr.rel (%p549) target = $region56
      $region55: #{mae_forward.2} parent=11 // pred_region
        _
      $region56: #{mae_forward.2} parent=11 // pred_fallthru
        _
      // Predicated region
      $region57: #{mae_forward.2} parent=11 // pred_check
        %p552 = pneg %p331
      $region58: #{mae_forward.2} parent=11 // pred_check_branch
        %554 = sbr.rel (%p552) target = $region60
      $region59: #{mae_forward.2} parent=11 // pred_region
        _
      $region60: #{mae_forward.2} parent=11 // pred_fallthru
        _
      // Predicated region
      $region61: #{mae_forward.2} parent=11 // pred_check
        %p555 = pneg %p352
      $region62: #{mae_forward.2} parent=11 // pred_check_branch
        %557 = sbr.rel (%p555) target = $region64
      $region63: #{mae_forward.2} parent=11 // pred_region
        _
      $region64: #{mae_forward.2} parent=11 // pred_fallthru
        _
      // Predicated region
      $region65: #{mae_forward.2} parent=11 // pred_check
        %p558 = pneg %p373
      $region66: #{mae_forward.2} parent=11 // pred_check_branch
        %560 = sbr.rel (%p558) target = $region68
      $region67: #{mae_forward.2} parent=11 // pred_region
        _
      $region68: #{mae_forward.2} parent=11 // pred_fallthru
        _
      // Predicated region
      $region69: #{mae_forward.2} parent=11 // pred_check
        %p561 = pneg %p394
      $region70: #{mae_forward.2} parent=11 // pred_check_branch
        %563 = sbr.rel (%p561) target = $region72
      $region71: #{mae_forward.2} parent=11 // pred_region
        _
      $region72: #{mae_forward.2} parent=11 // pred_fallthru
        _
      // Predicated region
      $region73: #{mae_forward.2} parent=11 // pred_check
        %p564 = pneg %p415
      $region74: #{mae_forward.2} parent=11 // pred_check_branch
        %566 = sbr.rel (%p564) target = $region76
      $region75: #{mae_forward.2} parent=11 // pred_region
        _
      $region76: #{mae_forward.2} parent=11 // pred_fallthru
        _
      // Predicated region
      $region77: #{mae_forward.2} parent=11 // pred_check
        %p567 = pneg %p436
      $region78: #{mae_forward.2} parent=11 // pred_check_branch
        %569 = sbr.rel (%p567) target = $region80
      $region79: #{mae_forward.2} parent=11 // pred_region
        _
      $region80: #{mae_forward.2} parent=11 // pred_fallthru
        _
      // Predicated region
      $region81: #{mae_forward.2} parent=11 // pred_check
        %p570 = pneg %p457
      $region82: #{mae_forward.2} parent=11 // pred_check_branch
        %572 = sbr.rel (%p570) target = $region84
      $region83: #{mae_forward.2} parent=11 // pred_region
        _
      $region84: #{mae_forward.2} parent=11 // pred_fallthru
        _
      // Predicated region
      $region85: #{mae_forward.2} parent=11 // pred_check
        %p573 = pneg %p478
      $region86: #{mae_forward.2} parent=11 // pred_check_branch
        %575 = sbr.rel (%p573) target = $region88
      $region87: #{mae_forward.2} parent=11 // pred_region
        _
      $region88: #{mae_forward.2} parent=11 // pred_fallthru
        _
    $region12: #{mae_forward.2} parent=5 // pred_fallthru
      _
    %p576 = scmp.lt.s32.totalorder %s27, 2
    // Predicated region
    $region89: #{mae_forward.2} parent=5 // pred_check
      %p577 = pneg %p576
    $region90: #{mae_forward.2} parent=5 // pred_check_branch
      %579 = sbr.rel (%p577) target = $region92
    $region91: #{mae_forward.2} parent=5 // pred_region
      // Predicated region
      $region93: #{mae_forward.2} parent=91 // pred_check
        %p580 = pneg %p47
      $region94: #{mae_forward.2} parent=91 // pred_check_branch
        %582 = sbr.rel (%p580) target = $region96
      $region95: #{mae_forward.2} parent=91 // pred_region
        %p583 = scmp.lt.s32.totalorder %s27, 1
        %s584 = scalar_select %p583, %s27, 1
        %s585 = smul.addr %s584, 2
        %s586 = smul.addr %s585, 8
        %s587 = scalar_lea.vmem %s0, %s586
      $region96: #{mae_forward.2} parent=91 // pred_fallthru
        _
      // Predicated region
      $region97: #{mae_forward.2} parent=91 // pred_check
        %p588 = pneg %p73
      $region98: #{mae_forward.2} parent=91 // pred_check_branch
        %590 = sbr.rel (%p588) target = $region100
      $region99: #{mae_forward.2} parent=91 // pred_region
        %p591 = scmp.lt.s32.totalorder %s27, 1
        %s592 = scalar_select %p591, %s27, 1
        %s593 = smul.addr %s592, 8
        %s594 = scalar_lea.vmem %s1, %s593
      $region100: #{mae_forward.2} parent=91 // pred_fallthru
        _
    $region92: #{mae_forward.2} parent=5 // pred_fallthru
      _
    %p595 = scmp.le.s32.totalorder 1, %s27
    %p596 = scmp.lt.s32.totalorder %s27, 3
    %p597 = pnand %p595, %p596
    %p598 = pneg %p597
    // Predicated region
    $region101: #{mae_forward.2} parent=5 // pred_check
      _
    $region102: #{mae_forward.2} parent=5 // pred_check_branch
      %600 = sbr.rel (%p597) target = $region104
    $region103: #{mae_forward.2} parent=5 // pred_region
      %s601 = ssub.s32 %s27, 1
      %p602 = scmp.lt.s32.totalorder %s32, 1
      %s603 = scalar_select %p602, %s32, 1
      %s604 = smul.addr %s603, 2
      %s605 = smul.addr %s604, 8
      %s606 = scalar_lea.vmem %s0, %s605
      %p607 = pneg %p53
      %p608 = pneg %p50
      %p609 = scmp.lt.s32.totalorder %s32, 1
      %s610 = scalar_select %p609, %s32, 1
      %s611 = smul.addr %s610, 8
      %s612 = scalar_lea.vmem %s1, %s611
      %p613 = pneg %p79
      %p614 = pneg %p76
      %p615 = pneg %p100
      %p616 = pneg %p97
      %p617 = pneg %p121
      %p618 = pneg %p118
      %p619 = pneg %p142
      %p620 = pneg %p139
      %p621 = pneg %p163
      %p622 = pneg %p160
      %p623 = pneg %p184
      %p624 = pneg %p181
      %p625 = pneg %p205
      %p626 = pneg %p202
      %p627 = pneg %p226
      %p628 = pneg %p223
      %p629 = pneg %p247
      %p630 = pneg %p244
      %p631 = pneg %p268
      %p632 = pneg %p265
      %p633 = pneg %p289
      %p634 = pneg %p286
      %p635 = pneg %p310
      %p636 = pneg %p307
      %p637 = pneg %p331
      %p638 = pneg %p328
      %p639 = pneg %p352
      %p640 = pneg %p349
      %p641 = pneg %p373
      %p642 = pneg %p370
      %p643 = pneg %p394
      %p644 = pneg %p391
      %p645 = pneg %p415
      %p646 = pneg %p412
      %p647 = pneg %p436
      %p648 = pneg %p433
      %p649 = pneg %p457
      %p650 = pneg %p454
      %p651 = pneg %p478
      %p652 = pneg %p475
      %p653 = pneg %p504
      %p654 = pneg %p501
      %p655 = scmp.lt.s32.totalorder %s32, 1
      %s656 = scalar_select %p655, %s32, 1
      %s657 = smul.addr %s656, 8
      %s658 = scalar_lea.vmem %s21, %s657
      %p659 = scmp.lt.s32.totalorder %s32, 1
      %s660 = scalar_select %p659, %s32, 1
      %s661 = smul.addr %s660, 2
      %s662 = smul.addr %s661, 8
      %s663 = scalar_lea.vmem %s0, %s662
      %p664 = scmp.lt.s32.totalorder %s32, 1
      %s665 = scalar_select %p664, %s32, 1
      %s666 = smul.addr %s665, 8
      %s667 = scalar_lea.vmem %s1, %s666
      %p668 = scmp.lt.s32.totalorder %s32, 1
      %s669 = scalar_select %p668, %s32, 1
      %s670 = smul.addr %s669, 8
      %s671 = scalar_lea.vmem %s21, %s670
      %v673 = vld [vmem:[%s663] sm:$0xff]
      %v674 = vld [vmem:[%s663 + $0x8] sm:$0xff]
      %v675 = vpack.c.bf16 %v673, %v673
      %v676 = vpack.c.bf16 %v674, %v674
      %v677 = vld [vmem:[%s4] sm:$0xf]
      %v678 = vld [vmem:[%s4 + $0x4] sm:$0xf]
      %v679 = vld [vmem:[%s4 + $0x8] sm:$0xf]
      %v680 = vld [vmem:[%s4 + $0xc] sm:$0xf]
      %v681 = vld [vmem:[%s4 + $0x10] sm:$0xf]
      %v682 = vld [vmem:[%s4 + $0x14] sm:$0xf]
      %v683 = vld [vmem:[%s4 + $0x18] sm:$0xf]
      %v684 = vld [vmem:[%s4 + $0x1c] sm:$0xf]
      %v685 = vld [vmem:[%s4 + $0x20] sm:$0xf]
      %v686 = vld [vmem:[%s4 + $0x24] sm:$0xf]
      %v687 = vld [vmem:[%s4 + $0x28] sm:$0xf]
      %v688 = vld [vmem:[%s4 + $0x2c] sm:$0xf]
      %v689 = vld [vmem:[%s4 + $0x30] sm:$0xf]
      %v690 = vld [vmem:[%s4 + $0x34] sm:$0xf]
      %v691 = vld [vmem:[%s4 + $0x38] sm:$0xf]
      %v692 = vld [vmem:[%s4 + $0x3c] sm:$0xf]
      %v693 = vld [vmem:[%s4 + $0x40] sm:$0xf]
      %v694 = vld [vmem:[%s4 + $0x44] sm:$0xf]
      %v695 = vld [vmem:[%s4 + $0x48] sm:$0xf]
      %v696 = vld [vmem:[%s4 + $0x4c] sm:$0xf]
      %v697 = vld [vmem:[%s4 + $0x50] sm:$0xf]
      %v698 = vld [vmem:[%s4 + $0x54] sm:$0xf]
      %v699 = vld [vmem:[%s4 + $0x58] sm:$0xf]
      %v700 = vld [vmem:[%s4 + $0x5c] sm:$0xf]
      %v701 = vld [vmem:[%s667] sm:$0xff]
      %v726 = vunpack.c.l.b16 %v677
      %v727 = vunpack.c.l.b16 %v678
      %v728 = vunpack.c.l.b16 %v679
      %v729 = vunpack.c.l.b16 %v680
      %v730 = vunpack.c.l.b16 %v681
      %v731 = vunpack.c.l.b16 %v682
      %v732 = vunpack.c.l.b16 %v683
      %v733 = vunpack.c.l.b16 %v684
      %v734 = vunpack.c.l.b16 %v685
      %v735 = vunpack.c.l.b16 %v686
      %v736 = vunpack.c.l.b16 %v687
      %v737 = vunpack.c.l.b16 %v688
      %v738 = vunpack.c.l.b16 %v689
      %v739 = vunpack.c.l.b16 %v690
      %v740 = vunpack.c.l.b16 %v691
      %v741 = vunpack.c.l.b16 %v692
      %v742 = vunpack.c.l.b16 %v693
      %v743 = vunpack.c.l.b16 %v694
      %v744 = vunpack.c.l.b16 %v695
      %v745 = vunpack.c.l.b16 %v696
      %v746 = vunpack.c.l.b16 %v697
      %v747 = vunpack.c.l.b16 %v698
      %v748 = vunpack.c.l.b16 %v699
      %v749 = vunpack.c.l.b16 %v700
      %v750 = vpack.c.b16 %v727, %v726
      %v751 = vpack.c.b16 %v729, %v728
      %v752 = vpack.c.b16 %v731, %v730
      %v753 = vpack.c.b16 %v733, %v732
      %v754 = vpack.c.b16 %v735, %v734
      %v755 = vpack.c.b16 %v737, %v736
      %v756 = vpack.c.b16 %v739, %v738
      %v757 = vpack.c.b16 %v741, %v740
      %v758 = vpack.c.b16 %v743, %v742
      %v759 = vpack.c.b16 %v745, %v744
      %v760 = vpack.c.b16 %v747, %v746
      %v761 = vpack.c.b16 %v749, %v748
      %vm774 = vcmask 523264
      %v776 = vsel %vm774, %v676, 0
      %778 = vmatprep.subr.bf16.mxu0 0
      %779 = vmatpush1.bf16.msra.mxu0 %v750
      %780 = vmatprep.subr.bf16.mxu0 0
      %781 = vmatpush1.bf16.msra.mxu0 %v751
      %782 = vmatprep.subr.bf16.mxu0 0
      %783 = vmatpush1.bf16.msra.mxu0 %v752
      %784 = vmatprep.subr.bf16.mxu0 0
      %785 = vmatpush1.bf16.msra.mxu0 %v753
      %786 = vmatprep.subr.bf16.mxu0 0
      %787 = vmatpush1.bf16.msra.mxu0 %v754
      %788 = vmatprep.subr.bf16.mxu0 0
      %789 = vmatpush1.bf16.msra.mxu0 %v755
      %790 = vmatprep.subr.bf16.mxu0 0
      %791 = vmatpush1.bf16.msra.mxu0 %v756
      %792 = vmatprep.subr.bf16.mxu0 0
      %793 = vmatpush1.bf16.msra.mxu0 %v757
      %794 = vmatprep.subr.bf16.mxu0 0
      %795 = vmatpush1.bf16.msra.mxu0 %v758
      %796 = vmatprep.subr.bf16.mxu0 0
      %797 = vmatpush1.bf16.msra.mxu0 %v759
      %798 = vmatprep.subr.bf16.mxu0 0
      %799 = vmatpush1.bf16.msra.mxu0 %v760
      %800 = vmatprep.subr.bf16.mxu0 0
      %801 = vmatpush1.bf16.msra.mxu0 %v761
      %802 = vmatprep.subr.bf16.mxu0 0
      %803 = vmatpush1.bf16.msra.mxu0 0
      %804 = vmatprep.subr.bf16.mxu0 0
      %805 = vmatpush1.bf16.msra.mxu0 0
      %806 = vmatprep.subr.bf16.mxu0 0
      %807 = vmatpush1.bf16.msra.mxu0 0
      %808 = vmatprep.subr.bf16.mxu0 0
      %809 = vmatpush1.bf16.msra.mxu0 0
      %810 = vmatprep.mubr.bf16.mxu0 %v776
      %811 = vmatmul.mubr.bf16.gmra.mrb[0].mxu0 %v675
      %v812 = vpop.f32.mrb[0].mxu0
      %v813 = vadd.f32 %v701, %v812
      %v814 = vpop.f32.mrb[0].mxu0
      %v815 = vpop.f32.mrb[0].mxu0
      %v816 = vpop.f32.mrb[0].mxu0
      %817 = vdwg.mxu0
      %v818 = vld [vmem:[%s2] sm:$0xff]
      %v819 = vld [vmem:[%s2 + $0x8] sm:$0xff]
      %v820 = vld [vmem:[%s2 + $0x10] sm:$0xff]
      %v821 = vld [vmem:[%s2 + $0x18] sm:$0xff]
      %v822 = vld [vmem:[%s3] sm:$0xff]
      %v823 = vld [vmem:[%s3 + $0x8] sm:$0xff]
      %v824 = vld [vmem:[%s3 + $0x10] sm:$0xff]
      %v825 = vld [vmem:[%s3 + $0x18] sm:$0xff]
      %v826 = vld [vmem:[%s5] sm:$0x1]
      %v827 = vld [vmem:[%s6] sm:$0x1]
      %v828 = vld [vmem:[%s7] sm:$0xff]
      %v829 = vld [vmem:[%s7 + $0x8] sm:$0xff]
      %v830 = vld [vmem:[%s7 + $0x10] sm:$0xff]
      %v831 = vld [vmem:[%s7 + $0x18] sm:$0xff]
      %v832 = vld [vmem:[%s7 + $0x20] sm:$0xff]
      %v833 = vld [vmem:[%s7 + $0x28] sm:$0xff]
      %v834 = vld [vmem:[%s7 + $0x30] sm:$0xff]
      %v835 = vld [vmem:[%s7 + $0x38] sm:$0xff]
      %v836 = vld [vmem:[%s8] sm:$0x3]
      %v837 = vld [vmem:[%s9] sm:$0xf]
      %v838 = vld [vmem:[%s9 + $0x4] sm:$0xf]
      %v839 = vld [vmem:[%s9 + $0x8] sm:$0xf]
      %v840 = vld [vmem:[%s9 + $0xc] sm:$0xf]
      %v841 = vld [vmem:[%s9 + $0x10] sm:$0xf]
      %v842 = vld [vmem:[%s9 + $0x14] sm:$0xf]
      %v843 = vld [vmem:[%s9 + $0x18] sm:$0xf]
      %v844 = vld [vmem:[%s9 + $0x1c] sm:$0xf]
      %v845 = vld [vmem:[%s10] sm:$0x1]
      %v846 = vld [vmem:[%s11] sm:$0x1]
      %v847 = vld [vmem:[%s12] sm:$0x1]
      %v848 = vld [vmem:[%s13] sm:$0xff]
      %v849 = vld [vmem:[%s13 + $0x8] sm:$0xff]
      %v850 = vld [vmem:[%s13 + $0x10] sm:$0xff]
      %v851 = vld [vmem:[%s13 + $0x18] sm:$0xff]
      %v852 = vld [vmem:[%s13 + $0x20] sm:$0xff]
      %v853 = vld [vmem:[%s13 + $0x28] sm:$0xff]
      %v854 = vld [vmem:[%s13 + $0x30] sm:$0xff]
      %v855 = vld [vmem:[%s13 + $0x38] sm:$0xff]
      %v856 = vld [vmem:[%s14] sm:$0x3]
      %v857 = vld [vmem:[%s15] sm:$0xf]
      %v858 = vld [vmem:[%s15 + $0x4] sm:$0xf]
      %v859 = vld [vmem:[%s15 + $0x8] sm:$0xf]
      %v860 = vld [vmem:[%s15 + $0xc] sm:$0xf]
      %v861 = vld [vmem:[%s15 + $0x10] sm:$0xf]
      %v862 = vld [vmem:[%s15 + $0x14] sm:$0xf]
      %v863 = vld [vmem:[%s15 + $0x18] sm:$0xf]
      %v864 = vld [vmem:[%s15 + $0x1c] sm:$0xf]
      %v865 = vld [vmem:[%s15 + $0x20] sm:$0xf]
      %v866 = vld [vmem:[%s15 + $0x24] sm:$0xf]
      %v867 = vld [vmem:[%s15 + $0x28] sm:$0xf]
      %v868 = vld [vmem:[%s15 + $0x2c] sm:$0xf]
      %v869 = vld [vmem:[%s15 + $0x30] sm:$0xf]
      %v870 = vld [vmem:[%s15 + $0x34] sm:$0xf]
      %v871 = vld [vmem:[%s15 + $0x38] sm:$0xf]
      %v872 = vld [vmem:[%s15 + $0x3c] sm:$0xf]
      %v873 = vld [vmem:[%s15 + $0x40] sm:$0xf]
      %v874 = vld [vmem:[%s15 + $0x44] sm:$0xf]
      %v875 = vld [vmem:[%s15 + $0x48] sm:$0xf]
      %v876 = vld [vmem:[%s15 + $0x4c] sm:$0xf]
      %v877 = vld [vmem:[%s15 + $0x50] sm:$0xf]
      %v878 = vld [vmem:[%s15 + $0x54] sm:$0xf]
      %v879 = vld [vmem:[%s15 + $0x58] sm:$0xf]
      %v880 = vld [vmem:[%s15 + $0x5c] sm:$0xf]
      %v881 = vld [vmem:[%s15 + $0x60] sm:$0xf]
      %v882 = vld [vmem:[%s15 + $0x64] sm:$0xf]
      %v883 = vld [vmem:[%s15 + $0x68] sm:$0xf]
      %v884 = vld [vmem:[%s15 + $0x6c] sm:$0xf]
      %v885 = vld [vmem:[%s15 + $0x70] sm:$0xf]
      %v886 = vld [vmem:[%s15 + $0x74] sm:$0xf]
      %v887 = vld [vmem:[%s15 + $0x78] sm:$0xf]
      %v888 = vld [vmem:[%s15 + $0x7c] sm:$0xf]
      %v889 = vld [vmem:[%s16] sm:$0x1]
      %v890 = vsel %vm774, %v813, 0.0
      %891 = vadd.xlane.f32.xlu0 %v890
      %v892 = vpop.xlane.xlu0 %891
      %v893 = vrcp.pop 64.0
      %v894 = vmul.f32 %v892, %v893
      %v895 = vsub.f32 %v813, %v894
      %v896 = vmul.f32 %v895, %v895
      %v897 = vsel %vm774, %v896, 0.0
      %898 = vadd.xlane.f32.xlu0 %v897
      %v899 = vpop.xlane.xlu0 %898
      %v900 = vmul.f32 %v899, %v893
      %v901 = vadd.f32 %v900, 1e-06
      %v902 = vrsqrt.pop %v901
      %v903 = vmul.f32 %v895, %v902
      %v905 = vlaneseq
      %v906 = vshrl.u32 %v905, 7
      %v907 = vsub.s32 0, %v906
      %v908 = vrot.slane %v826, %v907
      %v910 = vmul.f32 %v903, %v908
      %v912 = vlaneseq
      %v913 = vshrl.u32 %v912, 7
      %v914 = vsub.s32 0, %v913
      %v915 = vrot.slane %v827, %v914
      %v917 = vadd.f32 %v910, %v915
      %v918 = vpack.c.bf16 %v917, %v917
      %v920 = vlaneseq
      %v921 = vshrl.u32 %v920, 7
      %v922 = vsub.s32 0, %v921
      %v923 = vrot.slane %v836, %v922
      %v924 = vlaneseq
      %v925 = vshrl.u32 %v924, 7
      %v926 = vsub.s32 1, %v925
      %v927 = vrot.slane %v836, %v926
      %v938 = vunpack.c.l.b16 %v828
      %v939 = vunpack.c.h.b16 %v828
      %v940 = vunpack.c.l.b16 %v829
      %v941 = vunpack.c.h.b16 %v829
      %v942 = vunpack.c.l.b16 %v830
      %v943 = vunpack.c.h.b16 %v830
      %v944 = vunpack.c.l.b16 %v831
      %v945 = vunpack.c.h.b16 %v831
      %v946 = vunpack.c.l.b16 %v832
      %v947 = vunpack.c.h.b16 %v832
      %v948 = vunpack.c.l.b16 %v833
      %v949 = vunpack.c.h.b16 %v833
      %v950 = vunpack.c.l.b16 %v834
      %v951 = vunpack.c.h.b16 %v834
      %v952 = vunpack.c.l.b16 %v835
      %v953 = vunpack.c.h.b16 %v835
      %v954 = vpack.c.b16 %v940, %v938
      %v955 = vpack.c.b16 %v941, %v939
      %v956 = vpack.c.b16 %v944, %v942
      %v957 = vpack.c.b16 %v945, %v943
      %v958 = vpack.c.b16 %v948, %v946
      %v959 = vpack.c.b16 %v949, %v947
      %v960 = vpack.c.b16 %v952, %v950
      %v961 = vpack.c.b16 %v953, %v951
      %v971 = vsel %vm774, %v918, 0
      %973 = vmatprep.subr.bf16.mxu0 %v955
      %974 = vmatpush1.bf16.msra.mxu0 %v954
      %975 = vmatprep.subr.bf16.mxu0 %v957
      %976 = vmatpush1.bf16.msra.mxu0 %v956
      %977 = vmatprep.subr.bf16.mxu0 %v959
      %978 = vmatpush1.bf16.msra.mxu0 %v958
      %979 = vmatprep.subr.bf16.mxu0 %v961
      %980 = vmatpush1.bf16.msra.mxu0 %v960
      %981 = vmatprep.subr.bf16.mxu0 0
      %982 = vmatpush1.bf16.msra.mxu0 0
      %983 = vmatprep.subr.bf16.mxu0 0
      %984 = vmatpush1.bf16.msra.mxu0 0
      %985 = vmatprep.subr.bf16.mxu0 0
      %986 = vmatpush1.bf16.msra.mxu0 0
      %987 = vmatprep.subr.bf16.mxu0 0
      %988 = vmatpush1.bf16.msra.mxu0 0
      %989 = vmatprep.subr.bf16.mxu0 0
      %990 = vmatpush1.bf16.msra.mxu0 0
      %991 = vmatprep.subr.bf16.mxu0 0
      %992 = vmatpush1.bf16.msra.mxu0 0
      %993 = vmatprep.subr.bf16.mxu0 0
      %994 = vmatpush1.bf16.msra.mxu0 0
      %995 = vmatprep.subr.bf16.mxu0 0
      %996 = vmatpush1.bf16.msra.mxu0 0
      %997 = vmatprep.subr.bf16.mxu0 0
      %998 = vmatpush1.bf16.msra.mxu0 0
      %999 = vmatprep.subr.bf16.mxu0 0
      %1000 = vmatpush1.bf16.msra.mxu0 0
      %1001 = vmatprep.subr.bf16.mxu0 0
      %1002 = vmatpush1.bf16.msra.mxu0 0
      %1003 = vmatprep.subr.bf16.mxu0 0
      %1004 = vmatpush1.bf16.msra.mxu0 0
      %1005 = vmatprep.mubr.bf16.mxu0 0
      %1006 = vmatmul.mubr.bf16.gmra.mrb[0].mxu0 %v971
      %v1007 = vpop.f32.mrb[0].mxu0
      %v1008 = vadd.f32 %v923, %v1007
      %v1009 = vpop.f32.mrb[0].mxu0
      %v1010 = vadd.f32 %v927, %v1009
      %v1011 = vpop.f32.mrb[0].mxu0
      %v1012 = vpop.f32.mrb[0].mxu0
      %1013 = vdwg.mxu0
      %v1014 = vmul.f32 %v1008, 0.25
      %v1015 = vmul.f32 %v1014, %v818
      %v1016 = vmul.f32 %v1014, %v819
      %v1017 = vmul.f32 %v1014, %v820
      %v1018 = vmul.f32 %v1014, %v821
      %v1019 = vpack.c.bf16 %v1016, %v1015
      %v1020 = vpack.c.bf16 %v1018, %v1017
      %v1021 = vpack.c.bf16 %v1008, %v1008
      %1023 = vrot.lane.b32.xlu0 %v1021, 64
      %v1024 = vpop.permute.xlu0 %1023
      %v1026 = vsel %vm774, %v1019, 0
      %v1029 = vsel %vm774, %v1020, 0
      %v1032 = vsel %vm774, %v1024, 0
      %1034 = vmatprep.subr.bf16.mxu0 0
      %1035 = vmatpush1.bf16.xpose.msra.mxu0 %v1032
      %1036 = vmatprep.subr.bf16.mxu0 0
      %1037 = vmatpush1.bf16.xpose.msra.mxu0 0
      %1038 = vmatprep.subr.bf16.mxu0 0
      %1039 = vmatpush1.bf16.xpose.msra.mxu0 0
      %1040 = vmatprep.subr.bf16.mxu0 0
      %1041 = vmatpush1.bf16.xpose.msra.mxu0 0
      %1042 = vmatprep.subr.bf16.mxu0 0
      %1043 = vmatpush1.bf16.xpose.msra.mxu0 0
      %1044 = vmatprep.subr.bf16.mxu0 0
      %1045 = vmatpush1.bf16.xpose.msra.mxu0 0
      %1046 = vmatprep.subr.bf16.mxu0 0
      %1047 = vmatpush1.bf16.xpose.msra.mxu0 0
      %1048 = vmatprep.subr.bf16.mxu0 0
      %1049 = vmatpush1.bf16.xpose.msra.mxu0 0
      %1050 = vmatprep.subr.bf16.mxu0 0
      %1051 = vmatpush1.bf16.xpose.msra.mxu0 0
      %1052 = vmatprep.subr.bf16.mxu0 0
      %1053 = vmatpush1.bf16.xpose.msra.mxu0 0
      %1054 = vmatprep.subr.bf16.mxu0 0
      %1055 = vmatpush1.bf16.xpose.msra.mxu0 0
      %1056 = vmatprep.subr.bf16.mxu0 0
      %1057 = vmatpush1.bf16.xpose.msra.mxu0 0
      %1058 = vmatprep.subr.bf16.mxu0 0
      %1059 = vmatpush1.bf16.xpose.msra.mxu0 0
      %1060 = vmatprep.subr.bf16.mxu0 0
      %1061 = vmatpush1.bf16.xpose.msra.mxu0 0
      %1062 = vmatprep.subr.bf16.mxu0 0
      %1063 = vmatpush1.bf16.xpose.msra.mxu0 0
      %1064 = vmatprep.subr.bf16.mxu0 0
      %1065 = vmatpush1.bf16.xpose.msra.mxu0 0
      %1066 = vmatprep.mubr.bf16.mxu0 0
      %1067 = vmatmul.mubr.bf16.gmra.mrb[0].mxu0 %v1026
      %v1068 = vpop.f32.mrb[0].mxu0
      %v1069 = vadd.f32 %v822, %v1068
      %v1070 = vpop.f32.mrb[0].mxu0
      %v1071 = vpop.f32.mrb[0].mxu0
      %v1072 = vadd.f32 %v823, %v1071
      %v1073 = vpop.f32.mrb[0].mxu0
      %1074 = vmatprep.mubr.bf16.mxu0 0
      %1075 = vmatmul.mubr.bf16.gmra.mrb[0].mxu0 %v1029
      %v1076 = vpop.f32.mrb[0].mxu0
      %v1077 = vadd.f32 %v824, %v1076
      %v1078 = vpop.f32.mrb[0].mxu0
      %v1079 = vpop.f32.mrb[0].mxu0
      %v1080 = vadd.f32 %v825, %v1079
      %v1081 = vpop.f32.mrb[0].mxu0
      %1082 = vdwg.mxu0
      %vm1083 = vcmask 64512
      %v1084 = vsel %vm1083, %v1069, -inf
      %1085 = vmax.xlane.f32.xlu0 %v1084
      %v1086 = vpop.xlane.xlu0 %1085
      %v1087 = vsel %vm1083, %v1072, -inf
      %1088 = vmax.xlane.f32.xlu0 %v1087
      %v1089 = vpop.xlane.xlu0 %1088
      %v1090 = vsel %vm1083, %v1077, -inf
      %1091 = vmax.xlane.f32.xlu0 %v1090
      %v1092 = vpop.xlane.xlu0 %1091
      %v1093 = vsel %vm1083, %v1080, -inf
      %1094 = vmax.xlane.f32.xlu0 %v1093
      %v1095 = vpop.xlane.xlu0 %1094
      %v1096 = vsub.f32 %v1069, %v1086
      %v1097 = vsub.f32 %v1072, %v1089
      %v1098 = vsub.f32 %v1077, %v1092
      %v1099 = vsub.f32 %v1080, %v1095
      %v1100 = vmul.f32 %v1096, 1.442695
      %v1101 = vpow.pop %v1100
      %v1102 = vmul.f32 %v1097, 1.442695
      %v1103 = vpow.pop %v1102
      %v1104 = vmul.f32 %v1098, 1.442695
      %v1105 = vpow.pop %v1104
      %v1106 = vmul.f32 %v1099, 1.442695
      %v1107 = vpow.pop %v1106
      %v1108 = vsel %vm1083, %v1101, 0.0
      %1109 = vadd.xlane.f32.xlu0 %v1108
      %v1110 = vpop.xlane.xlu0 %1109
      %v1111 = vsel %vm1083, %v1103, 0.0
      %1112 = vadd.xlane.f32.xlu0 %v1111
      %v1113 = vpop.xlane.xlu0 %1112
      %v1114 = vsel %vm1083, %v1105, 0.0
      %1115 = vadd.xlane.f32.xlu0 %v1114
      %v1116 = vpop.xlane.xlu0 %1115
      %v1117 = vsel %vm1083, %v1107, 0.0
      %1118 = vadd.xlane.f32.xlu0 %v1117
      %v1119 = vpop.xlane.xlu0 %1118
      %v1120 = vrcp.pop %v1110
      %v1121 = vrcp.pop %v1113
      %v1122 = vrcp.pop %v1116
      %v1123 = vrcp.pop %v1119
      %v1124 = vmul.f32 %v1101, %v1120
      %v1125 = vmul.f32 %v1103, %v1121
      %v1126 = vmul.f32 %v1105, %v1122
      %v1127 = vmul.f32 %v1107, %v1123
      %v1128 = vpack.c.bf16 %v1125, %v1124
      %v1129 = vpack.c.bf16 %v1127, %v1126
      %v1130 = vpack.c.bf16 %v1010, %v1010
      %v1132 = vsel %vm1083, %v1128, 0
      %v1135 = vsel %vm1083, %v1129, 0
      %vm1137 = vcmask 1043456
      %v1139 = vsel %vm1137, %v1130, 0
      %1141 = vmatprep.subr.bf16.mxu0 0
      %1142 = vmatpush1.bf16.msra.mxu0 %v1139
      %1143 = vmatprep.subr.bf16.mxu0 0
      %1144 = vmatpush1.bf16.msra.mxu0 0
      %1145 = vmatprep.subr.bf16.mxu0 0
      %1146 = vmatpush1.bf16.msra.mxu0 0
      %1147 = vmatprep.subr.bf16.mxu0 0
      %1148 = vmatpush1.bf16.msra.mxu0 0
      %1149 = vmatprep.subr.bf16.mxu0 0
      %1150 = vmatpush1.bf16.msra.mxu0 0
      %1151 = vmatprep.subr.bf16.mxu0 0
      %1152 = vmatpush1.bf16.msra.mxu0 0
      %1153 = vmatprep.subr.bf16.mxu0 0
      %1154 = vmatpush1.bf16.msra.mxu0 0
      %1155 = vmatprep.subr.bf16.mxu0 0
      %1156 = vmatpush1.bf16.msra.mxu0 0
      %1157 = vmatprep.subr.bf16.mxu0 0
      %1158 = vmatpush1.bf16.msra.mxu0 0
      %1159 = vmatprep.subr.bf16.mxu0 0
      %1160 = vmatpush1.bf16.msra.mxu0 0
      %1161 = vmatprep.subr.bf16.mxu0 0
      %1162 = vmatpush1.bf16.msra.mxu0 0
      %1163 = vmatprep.subr.bf16.mxu0 0
      %1164 = vmatpush1.bf16.msra.mxu0 0
      %1165 = vmatprep.subr.bf16.mxu0 0
      %1166 = vmatpush1.bf16.msra.mxu0 0
      %1167 = vmatprep.subr.bf16.mxu0 0
      %1168 = vmatpush1.bf16.msra.mxu0 0
      %1169 = vmatprep.subr.bf16.mxu0 0
      %1170 = vmatpush1.bf16.msra.mxu0 0
      %1171 = vmatprep.subr.bf16.mxu0 0
      %1172 = vmatpush1.bf16.msra.mxu0 0
      %1173 = vmatprep.mubr.bf16.mxu0 0
      %1174 = vmatmul.mubr.bf16.gmra.mrb[0].mxu0 %v1132
      %v1175 = vpop.f32.mrb[0].mxu0
      %v1176 = vadd.f32 0.0, %v1175
      %v1177 = vpop.f32.mrb[0].mxu0
      %v1178 = vpop.f32.mrb[0].mxu0
      %v1179 = vadd.f32 0.0, %v1178
      %v1180 = vpop.f32.mrb[0].mxu0
      %1181 = vmatprep.mubr.bf16.mxu0 0
      %1182 = vmatmul.mubr.bf16.gmra.mrb[0].mxu0 %v1135
      %v1183 = vpop.f32.mrb[0].mxu0
      %v1184 = vadd.f32 0.0, %v1183
      %v1185 = vpop.f32.mrb[0].mxu0
      %v1186 = vpop.f32.mrb[0].mxu0
      %v1187 = vadd.f32 0.0, %v1186
      %v1188 = vpop.f32.mrb[0].mxu0
      %1189 = vdwg.mxu0
      %v1190 = vmul.f32 %v1176, %v818
      %v1191 = vmul.f32 %v1179, %v819
      %v1192 = vmul.f32 %v1184, %v820
      %v1193 = vmul.f32 %v1187, %v821
      %v1194 = vadd.f32 %v1190, %v1191
      %v1195 = vadd.f32 %v1194, %v1192
      %v1196 = vadd.f32 %v1195, %v1193
      %v1197 = vpack.c.bf16 %v1196, %v1196
      %v1206 = vunpack.c.l.b16 %v837
      %v1207 = vunpack.c.l.b16 %v838
      %v1208 = vunpack.c.l.b16 %v839
      %v1209 = vunpack.c.l.b16 %v840
      %v1210 = vunpack.c.l.b16 %v841
      %v1211 = vunpack.c.l.b16 %v842
      %v1212 = vunpack.c.l.b16 %v843
      %v1213 = vunpack.c.l.b16 %v844
      %v1214 = vpack.c.b16 %v1207, %v1206
      %v1215 = vpack.c.b16 %v1209, %v1208
      %v1216 = vpack.c.b16 %v1211, %v1210
      %v1217 = vpack.c.b16 %v1213, %v1212
      %v1223 = vsel %vm774, %v1197, 0
      %1225 = vmatprep.subr.bf16.mxu0 0
      %1226 = vmatpush1.bf16.msra.mxu0 %v1214
      %1227 = vmatprep.subr.bf16.mxu0 0
      %1228 = vmatpush1.bf16.msra.mxu0 %v1215
      %1229 = vmatprep.subr.bf16.mxu0 0
      %1230 = vmatpush1.bf16.msra.mxu0 %v1216
      %1231 = vmatprep.subr.bf16.mxu0 0
      %1232 = vmatpush1.bf16.msra.mxu0 %v1217
      %1233 = vmatprep.subr.bf16.mxu0 0
      %1234 = vmatpush1.bf16.msra.mxu0 0
      %1235 = vmatprep.subr.bf16.mxu0 0
      %1236 = vmatpush1.bf16.msra.mxu0 0
      %1237 = vmatprep.subr.bf16.mxu0 0
      %1238 = vmatpush1.bf16.msra.mxu0 0
      %1239 = vmatprep.subr.bf16.mxu0 0
      %1240 = vmatpush1.bf16.msra.mxu0 0
      %1241 = vmatprep.subr.bf16.mxu0 0
      %1242 = vmatpush1.bf16.msra.mxu0 0
      %1243 = vmatprep.subr.bf16.mxu0 0
      %1244 = vmatpush1.bf16.msra.mxu0 0
      %1245 = vmatprep.subr.bf16.mxu0 0
      %1246 = vmatpush1.bf16.msra.mxu0 0
      %1247 = vmatprep.subr.bf16.mxu0 0
      %1248 = vmatpush1.bf16.msra.mxu0 0
      %1249 = vmatprep.subr.bf16.mxu0 0
      %1250 = vmatpush1.bf16.msra.mxu0 0
      %1251 = vmatprep.subr.bf16.mxu0 0
      %1252 = vmatpush1.bf16.msra.mxu0 0
      %1253 = vmatprep.subr.bf16.mxu0 0
      %1254 = vmatpush1.bf16.msra.mxu0 0
      %1255 = vmatprep.subr.bf16.mxu0 0
      %1256 = vmatpush1.bf16.msra.mxu0 0
      %1257 = vmatprep.mubr.bf16.mxu0 0
      %1258 = vmatmul.mubr.bf16.gmra.mrb[0].mxu0 %v1223
      %v1259 = vpop.f32.mrb[0].mxu0
      %v1260 = vadd.f32 0.0, %v1259
      %v1261 = vpop.f32.mrb[0].mxu0
      %v1262 = vpop.f32.mrb[0].mxu0
      %v1263 = vpop.f32.mrb[0].mxu0
      %1264 = vdwg.mxu0
      %v1265 = vadd.f32 %v813, %v1260
      %v1267 = vlaneseq
      %v1268 = vshrl.u32 %v1267, 7
      %v1269 = vsub.s32 0, %v1268
      %v1270 = vrot.slane %v845, %v1269
      %v1272 = vadd.f32 %v1265, %v1270
      %v1273 = vsel %vm774, %v1272, 0.0
      %1274 = vadd.xlane.f32.xlu0 %v1273
      %v1275 = vpop.xlane.xlu0 %1274
      %v1276 = vmul.f32 %v1275, %v893
      %v1277 = vsub.f32 %v1272, %v1276
      %v1278 = vmul.f32 %v1277, %v1277
      %v1279 = vsel %vm774, %v1278, 0.0
      %1280 = vadd.xlane.f32.xlu0 %v1279
      %v1281 = vpop.xlane.xlu0 %1280
      %v1282 = vmul.f32 %v1281, %v893
      %v1283 = vadd.f32 %v1282, 1e-06
      %v1284 = vrsqrt.pop %v1283
      %v1285 = vmul.f32 %v1277, %v1284
      %v1287 = vlaneseq
      %v1288 = vshrl.u32 %v1287, 7
      %v1289 = vsub.s32 0, %v1288
      %v1290 = vrot.slane %v846, %v1289
      %v1292 = vmul.f32 %v1285, %v1290
      %v1294 = vlaneseq
      %v1295 = vshrl.u32 %v1294, 7
      %v1296 = vsub.s32 0, %v1295
      %v1297 = vrot.slane %v847, %v1296
      %v1299 = vadd.f32 %v1292, %v1297
      %v1300 = vpack.c.bf16 %v1299, %v1299
      %v1302 = vlaneseq
      %v1303 = vshrl.u32 %v1302, 7
      %v1304 = vsub.s32 0, %v1303
      %v1305 = vrot.slane %v856, %v1304
      %v1306 = vlaneseq
      %v1307 = vshrl.u32 %v1306, 7
      %v1308 = vsub.s32 1, %v1307
      %v1309 = vrot.slane %v856, %v1308
      %v1320 = vunpack.c.l.b16 %v848
      %v1321 = vunpack.c.h.b16 %v848
      %v1322 = vunpack.c.l.b16 %v849
      %v1323 = vunpack.c.h.b16 %v849
      %v1324 = vunpack.c.l.b16 %v850
      %v1325 = vunpack.c.h.b16 %v850
      %v1326 = vunpack.c.l.b16 %v851
      %v1327 = vunpack.c.h.b16 %v851
      %v1328 = vunpack.c.l.b16 %v852
      %v1329 = vunpack.c.h.b16 %v852
      %v1330 = vunpack.c.l.b16 %v853
      %v1331 = vunpack.c.h.b16 %v853
      %v1332 = vunpack.c.l.b16 %v854
      %v1333 = vunpack.c.h.b16 %v854
      %v1334 = vunpack.c.l.b16 %v855
      %v1335 = vunpack.c.h.b16 %v855
      %v1336 = vpack.c.b16 %v1322, %v1320
      %v1337 = vpack.c.b16 %v1323, %v1321
      %v1338 = vpack.c.b16 %v1326, %v1324
      %v1339 = vpack.c.b16 %v1327, %v1325
      %v1340 = vpack.c.b16 %v1330, %v1328
      %v1341 = vpack.c.b16 %v1331, %v1329
      %v1342 = vpack.c.b16 %v1334, %v1332
      %v1343 = vpack.c.b16 %v1335, %v1333
      %v1353 = vsel %vm774, %v1300, 0
      %1355 = vmatprep.subr.bf16.mxu0 %v1337
      %1356 = vmatpush1.bf16.msra.mxu0 %v1336
      %1357 = vmatprep.subr.bf16.mxu0 %v1339
      %1358 = vmatpush1.bf16.msra.mxu0 %v1338
      %1359 = vmatprep.subr.bf16.mxu0 %v1341
      %1360 = vmatpush1.bf16.msra.mxu0 %v1340
      %1361 = vmatprep.subr.bf16.mxu0 %v1343
      %1362 = vmatpush1.bf16.msra.mxu0 %v1342
      %1363 = vmatprep.subr.bf16.mxu0 0
      %1364 = vmatpush1.bf16.msra.mxu0 0
      %1365 = vmatprep.subr.bf16.mxu0 0
      %1366 = vmatpush1.bf16.msra.mxu0 0
      %1367 = vmatprep.subr.bf16.mxu0 0
      %1368 = vmatpush1.bf16.msra.mxu0 0
      %1369 = vmatprep.subr.bf16.mxu0 0
      %1370 = vmatpush1.bf16.msra.mxu0 0
      %1371 = vmatprep.subr.bf16.mxu0 0
      %1372 = vmatpush1.bf16.msra.mxu0 0
      %1373 = vmatprep.subr.bf16.mxu0 0
      %1374 = vmatpush1.bf16.msra.mxu0 0
      %1375 = vmatprep.subr.bf16.mxu0 0
      %1376 = vmatpush1.bf16.msra.mxu0 0
      %1377 = vmatprep.subr.bf16.mxu0 0
      %1378 = vmatpush1.bf16.msra.mxu0 0
      %1379 = vmatprep.subr.bf16.mxu0 0
      %1380 = vmatpush1.bf16.msra.mxu0 0
      %1381 = vmatprep.subr.bf16.mxu0 0
      %1382 = vmatpush1.bf16.msra.mxu0 0
      %1383 = vmatprep.subr.bf16.mxu0 0
      %1384 = vmatpush1.bf16.msra.mxu0 0
      %1385 = vmatprep.subr.bf16.mxu0 0
      %1386 = vmatpush1.bf16.msra.mxu0 0
      %1387 = vmatprep.mubr.bf16.mxu0 0
      %1388 = vmatmul.mubr.bf16.gmra.mrb[0].mxu0 %v1353
      %v1389 = vpop.f32.mrb[0].mxu0
      %v1390 = vadd.f32 %v1305, %v1389
      %v1391 = vpop.f32.mrb[0].mxu0
      %v1392 = vadd.f32 %v1309, %v1391
      %v1393 = vpop.f32.mrb[0].mxu0
      %v1394 = vpop.f32.mrb[0].mxu0
      %1395 = vdwg.mxu0
      %v1396 = vmul.f32 %v1390, 0.5
      %v1397 = vmul.f32 %v1392, 0.5
      %v1398 = vmul.f32 %v1390, 0.044715
      %v1399 = vmul.f32 %v1392, 0.044715
      %v1400 = vmul.f32 %v1398, %v1390
      %v1401 = vmul.f32 %v1399, %v1392
      %v1402 = vmul.f32 %v1400, %v1390
      %v1403 = vmul.f32 %v1401, %v1392
      %v1404 = vadd.f32 %v1390, %v1402
      %v1405 = vadd.f32 %v1392, %v1403
      %v1406 = vmul.f32 %v1404, 0.7978846
      %v1407 = vmul.f32 %v1405, 0.7978846
      %v1408 = vtanh.pop %v1406
      %v1409 = vtanh.pop %v1407
      %v1410 = vadd.f32 %v1408, 1.0
      %v1411 = vadd.f32 %v1409, 1.0
      %v1412 = vmul.f32 %v1396, %v1410
      %v1413 = vmul.f32 %v1397, %v1411
      %v1414 = vpack.c.bf16 %v1412, %v1412
      %v1415 = vpack.c.bf16 %v1413, %v1413
      %v1417 = vlaneseq
      %v1418 = vshrl.u32 %v1417, 7
      %v1419 = vsub.s32 0, %v1418
      %v1420 = vrot.slane %v889, %v1419
      %v1454 = vunpack.c.l.b16 %v857
      %v1455 = vunpack.c.l.b16 %v858
      %v1456 = vunpack.c.l.b16 %v859
      %v1457 = vunpack.c.l.b16 %v860
      %v1458 = vunpack.c.l.b16 %v861
      %v1459 = vunpack.c.l.b16 %v862
      %v1460 = vunpack.c.l.b16 %v863
      %v1461 = vunpack.c.l.b16 %v864
      %v1462 = vunpack.c.l.b16 %v865
      %v1463 = vunpack.c.l.b16 %v866
      %v1464 = vunpack.c.l.b16 %v867
      %v1465 = vunpack.c.l.b16 %v868
      %v1466 = vunpack.c.l.b16 %v869
      %v1467 = vunpack.c.l.b16 %v870
      %v1468 = vunpack.c.l.b16 %v871
      %v1469 = vunpack.c.l.b16 %v872
      %v1470 = vunpack.c.l.b16 %v873
      %v1471 = vunpack.c.l.b16 %v874
      %v1472 = vunpack.c.l.b16 %v875
      %v1473 = vunpack.c.l.b16 %v876
      %v1474 = vunpack.c.l.b16 %v877
      %v1475 = vunpack.c.l.b16 %v878
      %v1476 = vunpack.c.l.b16 %v879
      %v1477 = vunpack.c.l.b16 %v880
      %v1478 = vunpack.c.l.b16 %v881
      %v1479 = vunpack.c.l.b16 %v882
      %v1480 = vunpack.c.l.b16 %v883
      %v1481 = vunpack.c.l.b16 %v884
      %v1482 = vunpack.c.l.b16 %v885
      %v1483 = vunpack.c.l.b16 %v886
      %v1484 = vunpack.c.l.b16 %v887
      %v1485 = vunpack.c.l.b16 %v888
      %v1486 = vpack.c.b16 %v1455, %v1454
      %v1487 = vpack.c.b16 %v1457, %v1456
      %v1488 = vpack.c.b16 %v1459, %v1458
      %v1489 = vpack.c.b16 %v1461, %v1460
      %v1490 = vpack.c.b16 %v1463, %v1462
      %v1491 = vpack.c.b16 %v1465, %v1464
      %v1492 = vpack.c.b16 %v1467, %v1466
      %v1493 = vpack.c.b16 %v1469, %v1468
      %v1494 = vpack.c.b16 %v1471, %v1470
      %v1495 = vpack.c.b16 %v1473, %v1472
      %v1496 = vpack.c.b16 %v1475, %v1474
      %v1497 = vpack.c.b16 %v1477, %v1476
      %v1498 = vpack.c.b16 %v1479, %v1478
      %v1499 = vpack.c.b16 %v1481, %v1480
      %v1500 = vpack.c.b16 %v1483, %v1482
      %v1501 = vpack.c.b16 %v1485, %v1484
      %1518 = vmatprep.subr.bf16.mxu0 0
      %1519 = vmatpush1.bf16.msra.mxu0 %v1486
      %1520 = vmatprep.subr.bf16.mxu0 0
      %1521 = vmatpush1.bf16.msra.mxu0 %v1487
      %1522 = vmatprep.subr.bf16.mxu0 0
      %1523 = vmatpush1.bf16.msra.mxu0 %v1488
      %1524 = vmatprep.subr.bf16.mxu0 0
      %1525 = vmatpush1.bf16.msra.mxu0 %v1489
      %1526 = vmatprep.subr.bf16.mxu0 0
      %1527 = vmatpush1.bf16.msra.mxu0 %v1490
      %1528 = vmatprep.subr.bf16.mxu0 0
      %1529 = vmatpush1.bf16.msra.mxu0 %v1491
      %1530 = vmatprep.subr.bf16.mxu0 0
      %1531 = vmatpush1.bf16.msra.mxu0 %v1492
      %1532 = vmatprep.subr.bf16.mxu0 0
      %1533 = vmatpush1.bf16.msra.mxu0 %v1493
      %1534 = vmatprep.subr.bf16.mxu0 0
      %1535 = vmatpush1.bf16.msra.mxu0 %v1494
      %1536 = vmatprep.subr.bf16.mxu0 0
      %1537 = vmatpush1.bf16.msra.mxu0 %v1495
      %1538 = vmatprep.subr.bf16.mxu0 0
      %1539 = vmatpush1.bf16.msra.mxu0 %v1496
      %1540 = vmatprep.subr.bf16.mxu0 0
      %1541 = vmatpush1.bf16.msra.mxu0 %v1497
      %1542 = vmatprep.subr.bf16.mxu0 0
      %1543 = vmatpush1.bf16.msra.mxu0 %v1498
      %1544 = vmatprep.subr.bf16.mxu0 0
      %1545 = vmatpush1.bf16.msra.mxu0 %v1499
      %1546 = vmatprep.subr.bf16.mxu0 0
      %1547 = vmatpush1.bf16.msra.mxu0 %v1500
      %1548 = vmatprep.subr.bf16.mxu0 0
      %1549 = vmatpush1.bf16.msra.mxu0 %v1501
      %1550 = vmatprep.mubr.bf16.mxu0 %v1415
      %1551 = vmatmul.mubr.bf16.gmra.mrb[0].mxu0 %v1414
      %v1552 = vpop.f32.mrb[0].mxu0
      %v1553 = vadd.f32 %v1420, %v1552
      %v1554 = vpop.f32.mrb[0].mxu0
      %v1555 = vpop.f32.mrb[0].mxu0
      %v1556 = vpop.f32.mrb[0].mxu0
      %1557 = vdwg.mxu0
      %v1558 = vadd.f32 %v1272, %v1553
      %s1559 = scalar_lea.vmem %s5, 1
      %v1560 = vld [vmem:[%s1559] sm:$0x1]
      %s1561 = scalar_lea.vmem %s6, 1
      %v1562 = vld [vmem:[%s1561] sm:$0x1]
      %s1563 = scalar_lea.vmem %s7, 64
      %v1564 = vld [vmem:[%s1563] sm:$0xff]
      %v1565 = vld [vmem:[%s1563 + $0x8] sm:$0xff]
      %v1566 = vld [vmem:[%s1563 + $0x10] sm:$0xff]
      %v1567 = vld [vmem:[%s1563 + $0x18] sm:$0xff]
      %v1568 = vld [vmem:[%s1563 + $0x20] sm:$0xff]
      %v1569 = vld [vmem:[%s1563 + $0x28] sm:$0xff]
      %v1570 = vld [vmem:[%s1563 + $0x30] sm:$0xff]
      %v1571 = vld [vmem:[%s1563 + $0x38] sm:$0xff]
      %s1572 = scalar_lea.vmem %s8, 2
      %v1573 = vld [vmem:[%s1572] sm:$0x3]
      %s1574 = scalar_lea.vmem %s9, 32
      %v1575 = vld [vmem:[%s1574] sm:$0xf]
      %v1576 = vld [vmem:[%s1574 + $0x4] sm:$0xf]
      %v1577 = vld [vmem:[%s1574 + $0x8] sm:$0xf]
      %v1578 = vld [vmem:[%s1574 + $0xc] sm:$0xf]
      %v1579 = vld [vmem:[%s1574 + $0x10] sm:$0xf]
      %v1580 = vld [vmem:[%s1574 + $0x14] sm:$0xf]
      %v1581 = vld [vmem:[%s1574 + $0x18] sm:$0xf]
      %v1582 = vld [vmem:[%s1574 + $0x1c] sm:$0xf]
      %s1583 = scalar_lea.vmem %s10, 1
      %v1584 = vld [vmem:[%s1583] sm:$0x1]
      %s1585 = scalar_lea.vmem %s11, 1
      %v1586 = vld [vmem:[%s1585] sm:$0x1]
      %s1587 = scalar_lea.vmem %s12, 1
      %v1588 = vld [vmem:[%s1587] sm:$0x1]
      %s1589 = scalar_lea.vmem %s13, 64
      %v1590 = vld [vmem:[%s1589] sm:$0xff]
      %v1591 = vld [vmem:[%s1589 + $0x8] sm:$0xff]
      %v1592 = vld [vmem:[%s1589 + $0x10] sm:$0xff]
      %v1593 = vld [vmem:[%s1589 + $0x18] sm:$0xff]
      %v1594 = vld [vmem:[%s1589 + $0x20] sm:$0xff]
      %v1595 = vld [vmem:[%s1589 + $0x28] sm:$0xff]
      %v1596 = vld [vmem:[%s1589 + $0x30] sm:$0xff]
      %v1597 = vld [vmem:[%s1589 + $0x38] sm:$0xff]
      %s1598 = scalar_lea.vmem %s14, 2
      %v1599 = vld [vmem:[%s1598] sm:$0x3]
      %s1600 = scalar_lea.vmem %s15, 128
      %v1601 = vld [vmem:[%s1600] sm:$0xf]
      %v1602 = vld [vmem:[%s1600 + $0x4] sm:$0xf]
      %v1603 = vld [vmem:[%s1600 + $0x8] sm:$0xf]
      %v1604 = vld [vmem:[%s1600 + $0xc] sm:$0xf]
      %v1605 = vld [vmem:[%s1600 + $0x10] sm:$0xf]
      %v1606 = vld [vmem:[%s1600 + $0x14] sm:$0xf]
      %v1607 = vld [vmem:[%s1600 + $0x18] sm:$0xf]
      %v1608 = vld [vmem:[%s1600 + $0x1c] sm:$0xf]
      %v1609 = vld [vmem:[%s1600 + $0x20] sm:$0xf]
      %v1610 = vld [vmem:[%s1600 + $0x24] sm:$0xf]
      %v1611 = vld [vmem:[%s1600 + $0x28] sm:$0xf]
      %v1612 = vld [vmem:[%s1600 + $0x2c] sm:$0xf]
      %v1613 = vld [vmem:[%s1600 + $0x30] sm:$0xf]
      %v1614 = vld [vmem:[%s1600 + $0x34] sm:$0xf]
      %v1615 = vld [vmem:[%s1600 + $0x38] sm:$0xf]
      %v1616 = vld [vmem:[%s1600 + $0x3c] sm:$0xf]
      %v1617 = vld [vmem:[%s1600 + $0x40] sm:$0xf]
      %v1618 = vld [vmem:[%s1600 + $0x44] sm:$0xf]
      %v1619 = vld [vmem:[%s1600 + $0x48] sm:$0xf]
      %v1620 = vld [vmem:[%s1600 + $0x4c] sm:$0xf]
      %v1621 = vld [vmem:[%s1600 + $0x50] sm:$0xf]
      %v1622 = vld [vmem:[%s1600 + $0x54] sm:$0xf]
      %v1623 = vld [vmem:[%s1600 + $0x58] sm:$0xf]
      %v1624 = vld [vmem:[%s1600 + $0x5c] sm:$0xf]
      %v1625 = vld [vmem:[%s1600 + $0x60] sm:$0xf]
      %v1626 = vld [vmem:[%s1600 + $0x64] sm:$0xf]
      %v1627 = vld [vmem:[%s1600 + $0x68] sm:$0xf]
      %v1628 = vld [vmem:[%s1600 + $0x6c] sm:$0xf]
      %v1629 = vld [vmem:[%s1600 + $0x70] sm:$0xf]
      %v1630 = vld [vmem:[%s1600 + $0x74] sm:$0xf]
      %v1631 = vld [vmem:[%s1600 + $0x78] sm:$0xf]
      %v1632 = vld [vmem:[%s1600 + $0x7c] sm:$0xf]
      %s1633 = scalar_lea.vmem %s16, 1
      %v1634 = vld [vmem:[%s1633] sm:$0x1]
      %v1635 = vsel %vm774, %v1558, 0.0
      %1636 = vadd.xlane.f32.xlu0 %v1635
      %v1637 = vpop.xlane.xlu0 %1636
      %v1638 = vmul.f32 %v1637, %v893
      %v1639 = vsub.f32 %v1558, %v1638
      %v1640 = vmul.f32 %v1639, %v1639
      %v1641 = vsel %vm774, %v1640, 0.0
      %1642 = vadd.xlane.f32.xlu0 %v1641
      %v1643 = vpop.xlane.xlu0 %1642
      %v1644 = vmul.f32 %v1643, %v893
      %v1645 = vadd.f32 %v1644, 1e-06
      %v1646 = vrsqrt.pop %v1645
      %v1647 = vmul.f32 %v1639, %v1646
      %v1649 = vlaneseq
      %v1650 = vshrl.u32 %v1649, 7
      %v1651 = vsub.s32 0, %v1650
      %v1652 = vrot.slane %v1560, %v1651
      %v1654 = vmul.f32 %v1647, %v1652
      %v1656 = vlaneseq
      %v1657 = vshrl.u32 %v1656, 7
      %v1658 = vsub.s32 0, %v1657
      %v1659 = vrot.slane %v1562, %v1658
      %v1661 = vadd.f32 %v1654, %v1659
      %v1662 = vpack.c.bf16 %v1661, %v1661
      %v1664 = vlaneseq
      %v1665 = vshrl.u32 %v1664, 7
      %v1666 = vsub.s32 0, %v1665
      %v1667 = vrot.slane %v1573, %v1666
      %v1668 = vlaneseq
      %v1669 = vshrl.u32 %v1668, 7
      %v1670 = vsub.s32 1, %v1669
      %v1671 = vrot.slane %v1573, %v1670
      %v1682 = vunpack.c.l.b16 %v1564
      %v1683 = vunpack.c.h.b16 %v1564
      %v1684 = vunpack.c.l.b16 %v1565
      %v1685 = vunpack.c.h.b16 %v1565
      %v1686 = vunpack.c.l.b16 %v1566
      %v1687 = vunpack.c.h.b16 %v1566
      %v1688 = vunpack.c.l.b16 %v1567
      %v1689 = vunpack.c.h.b16 %v1567
      %v1690 = vunpack.c.l.b16 %v1568
      %v1691 = vunpack.c.h.b16 %v1568
      %v1692 = vunpack.c.l.b16 %v1569
      %v1693 = vunpack.c.h.b16 %v1569
      %v1694 = vunpack.c.l.b16 %v1570
      %v1695 = vunpack.c.h.b16 %v1570
      %v1696 = vunpack.c.l.b16 %v1571
      %v1697 = vunpack.c.h.b16 %v1571
      %v1698 = vpack.c.b16 %v1684, %v1682
      %v1699 = vpack.c.b16 %v1685, %v1683
      %v1700 = vpack.c.b16 %v1688, %v1686
      %v1701 = vpack.c.b16 %v1689, %v1687
      %v1702 = vpack.c.b16 %v1692, %v1690
      %v1703 = vpack.c.b16 %v1693, %v1691
      %v1704 = vpack.c.b16 %v1696, %v1694
      %v1705 = vpack.c.b16 %v1697, %v1695
      %v1715 = vsel %vm774, %v1662, 0
      %1717 = vmatprep.subr.bf16.mxu0 %v1699
      %1718 = vmatpush1.bf16.msra.mxu0 %v1698
      %1719 = vmatprep.subr.bf16.mxu0 %v1701
      %1720 = vmatpush1.bf16.msra.mxu0 %v1700
      %1721 = vmatprep.subr.bf16.mxu0 %v1703
      %1722 = vmatpush1.bf16.msra.mxu0 %v1702
      %1723 = vmatprep.subr.bf16.mxu0 %v1705
      %1724 = vmatpush1.bf16.msra.mxu0 %v1704
      %1725 = vmatprep.subr.bf16.mxu0 0
      %1726 = vmatpush1.bf16.msra.mxu0 0
      %1727 = vmatprep.subr.bf16.mxu0 0
      %1728 = vmatpush1.bf16.msra.mxu0 0
      %1729 = vmatprep.subr.bf16.mxu0 0
      %1730 = vmatpush1.bf16.msra.mxu0 0
      %1731 = vmatprep.subr.bf16.mxu0 0
      %1732 = vmatpush1.bf16.msra.mxu0 0
      %1733 = vmatprep.subr.bf16.mxu0 0
      %1734 = vmatpush1.bf16.msra.mxu0 0
      %1735 = vmatprep.subr.bf16.mxu0 0
      %1736 = vmatpush1.bf16.msra.mxu0 0
      %1737 = vmatprep.subr.bf16.mxu0 0
      %1738 = vmatpush1.bf16.msra.mxu0 0
      %1739 = vmatprep.subr.bf16.mxu0 0
      %1740 = vmatpush1.bf16.msra.mxu0 0
      %1741 = vmatprep.subr.bf16.mxu0 0
      %1742 = vmatpush1.bf16.msra.mxu0 0
      %1743 = vmatprep.subr.bf16.mxu0 0
      %1744 = vmatpush1.bf16.msra.mxu0 0
      %1745 = vmatprep.subr.bf16.mxu0 0
      %1746 = vmatpush1.bf16.msra.mxu0 0
      %1747 = vmatprep.subr.bf16.mxu0 0
      %1748 = vmatpush1.bf16.msra.mxu0 0
      %1749 = vmatprep.mubr.bf16.mxu0 0
      %1750 = vmatmul.mubr.bf16.gmra.mrb[0].mxu0 %v1715
      %v1751 = vpop.f32.mrb[0].mxu0
      %v1752 = vadd.f32 %v1667, %v1751
      %v1753 = vpop.f32.mrb[0].mxu0
      %v1754 = vadd.f32 %v1671, %v1753
      %v1755 = vpop.f32.mrb[0].mxu0
      %v1756 = vpop.f32.mrb[0].mxu0
      %1757 = vdwg.mxu0
      %v1758 = vmul.f32 %v1752, 0.25
      %v1759 = vmul.f32 %v1758, %v818
      %v1760 = vmul.f32 %v1758, %v819
      %v1761 = vmul.f32 %v1758, %v820
      %v1762 = vmul.f32 %v1758, %v821
      %v1763 = vpack.c.bf16 %v1760, %v1759
      %v1764 = vpack.c.bf16 %v1762, %v1761
      %v1765 = vpack.c.bf16 %v1752, %v1752
      %1767 = vrot.lane.b32.xlu0 %v1765, 64
      %v1768 = vpop.permute.xlu0 %1767
      %v1770 = vsel %vm774, %v1763, 0
      %v1773 = vsel %vm774, %v1764, 0
      %v1776 = vsel %vm774, %v1768, 0
      %1778 = vmatprep.subr.bf16.mxu0 0
      %1779 = vmatpush1.bf16.xpose.msra.mxu0 %v1776
      %1780 = vmatprep.subr.bf16.mxu0 0
      %1781 = vmatpush1.bf16.xpose.msra.mxu0 0
      %1782 = vmatprep.subr.bf16.mxu0 0
      %1783 = vmatpush1.bf16.xpose.msra.mxu0 0
      %1784 = vmatprep.subr.bf16.mxu0 0
      %1785 = vmatpush1.bf16.xpose.msra.mxu0 0
      %1786 = vmatprep.subr.bf16.mxu0 0
      %1787 = vmatpush1.bf16.xpose.msra.mxu0 0
      %1788 = vmatprep.subr.bf16.mxu0 0
      %1789 = vmatpush1.bf16.xpose.msra.mxu0 0
      %1790 = vmatprep.subr.bf16.mxu0 0
      %1791 = vmatpush1.bf16.xpose.msra.mxu0 0
      %1792 = vmatprep.subr.bf16.mxu0 0
      %1793 = vmatpush1.bf16.xpose.msra.mxu0 0
      %1794 = vmatprep.subr.bf16.mxu0 0
      %1795 = vmatpush1.bf16.xpose.msra.mxu0 0
      %1796 = vmatprep.subr.bf16.mxu0 0
      %1797 = vmatpush1.bf16.xpose.msra.mxu0 0
      %1798 = vmatprep.subr.bf16.mxu0 0
      %1799 = vmatpush1.bf16.xpose.msra.mxu0 0
      %1800 = vmatprep.subr.bf16.mxu0 0
      %1801 = vmatpush1.bf16.xpose.msra.mxu0 0
      %1802 = vmatprep.subr.bf16.mxu0 0
      %1803 = vmatpush1.bf16.xpose.msra.mxu0 0
      %1804 = vmatprep.subr.bf16.mxu0 0
      %1805 = vmatpush1.bf16.xpose.msra.mxu0 0
      %1806 = vmatprep.subr.bf16.mxu0 0
      %1807 = vmatpush1.bf16.xpose.msra.mxu0 0
      %1808 = vmatprep.subr.bf16.mxu0 0
      %1809 = vmatpush1.bf16.xpose.msra.mxu0 0
      %1810 = vmatprep.mubr.bf16.mxu0 0
      %1811 = vmatmul.mubr.bf16.gmra.mrb[0].mxu0 %v1770
      %v1812 = vpop.f32.mrb[0].mxu0
      %v1813 = vadd.f32 %v822, %v1812
      %v1814 = vpop.f32.mrb[0].mxu0
      %v1815 = vpop.f32.mrb[0].mxu0
      %v1816 = vadd.f32 %v823, %v1815
      %v1817 = vpop.f32.mrb[0].mxu0
      %1818 = vmatprep.mubr.bf16.mxu0 0
      %1819 = vmatmul.mubr.bf16.gmra.mrb[0].mxu0 %v1773
      %v1820 = vpop.f32.mrb[0].mxu0
      %v1821 = vadd.f32 %v824, %v1820
      %v1822 = vpop.f32.mrb[0].mxu0
      %v1823 = vpop.f32.mrb[0].mxu0
      %v1824 = vadd.f32 %v825, %v1823
      %v1825 = vpop.f32.mrb[0].mxu0
      %1826 = vdwg.mxu0
      %v1827 = vsel %vm1083, %v1813, -inf
      %1828 = vmax.xlane.f32.xlu0 %v1827
      %v1829 = vpop.xlane.xlu0 %1828
      %v1830 = vsel %vm1083, %v1816, -inf
      %1831 = vmax.xlane.f32.xlu0 %v1830
      %v1832 = vpop.xlane.xlu0 %1831
      %v1833 = vsel %vm1083, %v1821, -inf
      %1834 = vmax.xlane.f32.xlu0 %v1833
      %v1835 = vpop.xlane.xlu0 %1834
      %v1836 = vsel %vm1083, %v1824, -inf
      %1837 = vmax.xlane.f32.xlu0 %v1836
      %v1838 = vpop.xlane.xlu0 %1837
      %v1839 = vsub.f32 %v1813, %v1829
      %v1840 = vsub.f32 %v1816, %v1832
      %v1841 = vsub.f32 %v1821, %v1835
      %v1842 = vsub.f32 %v1824, %v1838
      %v1843 = vmul.f32 %v1839, 1.442695
      %v1844 = vpow.pop %v1843
      %v1845 = vmul.f32 %v1840, 1.442695
      %v1846 = vpow.pop %v1845
      %v1847 = vmul.f32 %v1841, 1.442695
      %v1848 = vpow.pop %v1847
      %v1849 = vmul.f32 %v1842, 1.442695
      %v1850 = vpow.pop %v1849
      %v1851 = vsel %vm1083, %v1844, 0.0
      %1852 = vadd.xlane.f32.xlu0 %v1851
      %v1853 = vpop.xlane.xlu0 %1852
      %v1854 = vsel %vm1083, %v1846, 0.0
      %1855 = vadd.xlane.f32.xlu0 %v1854
      %v1856 = vpop.xlane.xlu0 %1855
      %v1857 = vsel %vm1083, %v1848, 0.0
      %1858 = vadd.xlane.f32.xlu0 %v1857
      %v1859 = vpop.xlane.xlu0 %1858
      %v1860 = vsel %vm1083, %v1850, 0.0
      %1861 = vadd.xlane.f32.xlu0 %v1860
      %v1862 = vpop.xlane.xlu0 %1861
      %v1863 = vrcp.pop %v1853
      %v1864 = vrcp.pop %v1856
      %v1865 = vrcp.pop %v1859
      %v1866 = vrcp.pop %v1862
      %v1867 = vmul.f32 %v1844, %v1863
      %v1868 = vmul.f32 %v1846, %v1864
      %v1869 = vmul.f32 %v1848, %v1865
      %v1870 = vmul.f32 %v1850, %v1866
      %v1871 = vpack.c.bf16 %v1868, %v1867
      %v1872 = vpack.c.bf16 %v1870, %v1869
      %v1873 = vpack.c.bf16 %v1754, %v1754
      %v1875 = vsel %vm1083, %v1871, 0
      %v1878 = vsel %vm1083, %v1872, 0
      %v1881 = vsel %vm1137, %v1873, 0
      %1883 = vmatprep.subr.bf16.mxu0 0
      %1884 = vmatpush1.bf16.msra.mxu0 %v1881
      %1885 = vmatprep.subr.bf16.mxu0 0
      %1886 = vmatpush1.bf16.msra.mxu0 0
      %1887 = vmatprep.subr.bf16.mxu0 0
      %1888 = vmatpush1.bf16.msra.mxu0 0
      %1889 = vmatprep.subr.bf16.mxu0 0
      %1890 = vmatpush1.bf16.msra.mxu0 0
      %1891 = vmatprep.subr.bf16.mxu0 0
      %1892 = vmatpush1.bf16.msra.mxu0 0
      %1893 = vmatprep.subr.bf16.mxu0 0
      %1894 = vmatpush1.bf16.msra.mxu0 0
      %1895 = vmatprep.subr.bf16.mxu0 0
      %1896 = vmatpush1.bf16.msra.mxu0 0
      %1897 = vmatprep.subr.bf16.mxu0 0
      %1898 = vmatpush1.bf16.msra.mxu0 0
      %1899 = vmatprep.subr.bf16.mxu0 0
      %1900 = vmatpush1.bf16.msra.mxu0 0
      %1901 = vmatprep.subr.bf16.mxu0 0
      %1902 = vmatpush1.bf16.msra.mxu0 0
      %1903 = vmatprep.subr.bf16.mxu0 0
      %1904 = vmatpush1.bf16.msra.mxu0 0
      %1905 = vmatprep.subr.bf16.mxu0 0
      %1906 = vmatpush1.bf16.msra.mxu0 0
      %1907 = vmatprep.subr.bf16.mxu0 0
      %1908 = vmatpush1.bf16.msra.mxu0 0
      %1909 = vmatprep.subr.bf16.mxu0 0
      %1910 = vmatpush1.bf16.msra.mxu0 0
      %1911 = vmatprep.subr.bf16.mxu0 0
      %1912 = vmatpush1.bf16.msra.mxu0 0
      %1913 = vmatprep.subr.bf16.mxu0 0
      %1914 = vmatpush1.bf16.msra.mxu0 0
      %1915 = vmatprep.mubr.bf16.mxu0 0
      %1916 = vmatmul.mubr.bf16.gmra.mrb[0].mxu0 %v1875
      %v1917 = vpop.f32.mrb[0].mxu0
      %v1918 = vadd.f32 0.0, %v1917
      %v1919 = vpop.f32.mrb[0].mxu0
      %v1920 = vpop.f32.mrb[0].mxu0
      %v1921 = vadd.f32 0.0, %v1920
      %v1922 = vpop.f32.mrb[0].mxu0
      %1923 = vmatprep.mubr.bf16.mxu0 0
      %1924 = vmatmul.mubr.bf16.gmra.mrb[0].mxu0 %v1878
      %v1925 = vpop.f32.mrb[0].mxu0
      %v1926 = vadd.f32 0.0, %v1925
      %v1927 = vpop.f32.mrb[0].mxu0
      %v1928 = vpop.f32.mrb[0].mxu0
      %v1929 = vadd.f32 0.0, %v1928
      %v1930 = vpop.f32.mrb[0].mxu0
      %1931 = vdwg.mxu0
      %v1932 = vmul.f32 %v1918, %v818
      %v1933 = vmul.f32 %v1921, %v819
      %v1934 = vmul.f32 %v1926, %v820
      %v1935 = vmul.f32 %v1929, %v821
      %v1936 = vadd.f32 %v1932, %v1933
      %v1937 = vadd.f32 %v1936, %v1934
      %v1938 = vadd.f32 %v1937, %v1935
      %v1939 = vpack.c.bf16 %v1938, %v1938
      %v1948 = vunpack.c.l.b16 %v1575
      %v1949 = vunpack.c.l.b16 %v1576
      %v1950 = vunpack.c.l.b16 %v1577
      %v1951 = vunpack.c.l.b16 %v1578
      %v1952 = vunpack.c.l.b16 %v1579
      %v1953 = vunpack.c.l.b16 %v1580
      %v1954 = vunpack.c.l.b16 %v1581
      %v1955 = vunpack.c.l.b16 %v1582
      %v1956 = vpack.c.b16 %v1949, %v1948
      %v1957 = vpack.c.b16 %v1951, %v1950
      %v1958 = vpack.c.b16 %v1953, %v1952
      %v1959 = vpack.c.b16 %v1955, %v1954
      %v1965 = vsel %vm774, %v1939, 0
      %1967 = vmatprep.subr.bf16.mxu0 0
      %1968 = vmatpush1.bf16.msra.mxu0 %v1956
      %1969 = vmatprep.subr.bf16.mxu0 0
      %1970 = vmatpush1.bf16.msra.mxu0 %v1957
      %1971 = vmatprep.subr.bf16.mxu0 0
      %1972 = vmatpush1.bf16.msra.mxu0 %v1958
      %1973 = vmatprep.subr.bf16.mxu0 0
      %1974 = vmatpush1.bf16.msra.mxu0 %v1959
      %1975 = vmatprep.subr.bf16.mxu0 0
      %1976 = vmatpush1.bf16.msra.mxu0 0
      %1977 = vmatprep.subr.bf16.mxu0 0
      %1978 = vmatpush1.bf16.msra.mxu0 0
      %1979 = vmatprep.subr.bf16.mxu0 0
      %1980 = vmatpush1.bf16.msra.mxu0 0
      %1981 = vmatprep.subr.bf16.mxu0 0
      %1982 = vmatpush1.bf16.msra.mxu0 0
      %1983 = vmatprep.subr.bf16.mxu0 0
      %1984 = vmatpush1.bf16.msra.mxu0 0
      %1985 = vmatprep.subr.bf16.mxu0 0
      %1986 = vmatpush1.bf16.msra.mxu0 0
      %1987 = vmatprep.subr.bf16.mxu0 0
      %1988 = vmatpush1.bf16.msra.mxu0 0
      %1989 = vmatprep.subr.bf16.mxu0 0
      %1990 = vmatpush1.bf16.msra.mxu0 0
      %1991 = vmatprep.subr.bf16.mxu0 0
      %1992 = vmatpush1.bf16.msra.mxu0 0
      %1993 = vmatprep.subr.bf16.mxu0 0
      %1994 = vmatpush1.bf16.msra.mxu0 0
      %1995 = vmatprep.subr.bf16.mxu0 0
      %1996 = vmatpush1.bf16.msra.mxu0 0
      %1997 = vmatprep.subr.bf16.mxu0 0
      %1998 = vmatpush1.bf16.msra.mxu0 0
      %1999 = vmatprep.mubr.bf16.mxu0 0
      %2000 = vmatmul.mubr.bf16.gmra.mrb[0].mxu0 %v1965
      %v2001 = vpop.f32.mrb[0].mxu0
      %v2002 = vadd.f32 0.0, %v2001
      %v2003 = vpop.f32.mrb[0].mxu0
      %v2004 = vpop.f32.mrb[0].mxu0
      %v2005 = vpop.f32.mrb[0].mxu0
      %2006 = vdwg.mxu0
      %v2007 = vadd.f32 %v1558, %v2002
      %v2009 = vlaneseq
      %v2010 = vshrl.u32 %v2009, 7
      %v2011 = vsub.s32 0, %v2010
      %v2012 = vrot.slane %v1584, %v2011
      %v2014 = vadd.f32 %v2007, %v2012
      %v2015 = vsel %vm774, %v2014, 0.0
      %2016 = vadd.xlane.f32.xlu0 %v2015
      %v2017 = vpop.xlane.xlu0 %2016
      %v2018 = vmul.f32 %v2017, %v893
      %v2019 = vsub.f32 %v2014, %v2018
      %v2020 = vmul.f32 %v2019, %v2019
      %v2021 = vsel %vm774, %v2020, 0.0
      %2022 = vadd.xlane.f32.xlu0 %v2021
      %v2023 = vpop.xlane.xlu0 %2022
      %v2024 = vmul.f32 %v2023, %v893
      %v2025 = vadd.f32 %v2024, 1e-06
      %v2026 = vrsqrt.pop %v2025
      %v2027 = vmul.f32 %v2019, %v2026
      %v2029 = vlaneseq
      %v2030 = vshrl.u32 %v2029, 7
      %v2031 = vsub.s32 0, %v2030
      %v2032 = vrot.slane %v1586, %v2031
      %v2034 = vmul.f32 %v2027, %v2032
      %v2036 = vlaneseq
      %v2037 = vshrl.u32 %v2036, 7
      %v2038 = vsub.s32 0, %v2037
      %v2039 = vrot.slane %v1588, %v2038
      %v2041 = vadd.f32 %v2034, %v2039
      %v2042 = vpack.c.bf16 %v2041, %v2041
      %v2044 = vlaneseq
      %v2045 = vshrl.u32 %v2044, 7
      %v2046 = vsub.s32 0, %v2045
      %v2047 = vrot.slane %v1599, %v2046
      %v2048 = vlaneseq
      %v2049 = vshrl.u32 %v2048, 7
      %v2050 = vsub.s32 1, %v2049
      %v2051 = vrot.slane %v1599, %v2050
      %v2062 = vunpack.c.l.b16 %v1590
      %v2063 = vunpack.c.h.b16 %v1590
      %v2064 = vunpack.c.l.b16 %v1591
      %v2065 = vunpack.c.h.b16 %v1591
      %v2066 = vunpack.c.l.b16 %v1592
      %v2067 = vunpack.c.h.b16 %v1592
      %v2068 = vunpack.c.l.b16 %v1593
      %v2069 = vunpack.c.h.b16 %v1593
      %v2070 = vunpack.c.l.b16 %v1594
      %v2071 = vunpack.c.h.b16 %v1594
      %v2072 = vunpack.c.l.b16 %v1595
      %v2073 = vunpack.c.h.b16 %v1595
      %v2074 = vunpack.c.l.b16 %v1596
      %v2075 = vunpack.c.h.b16 %v1596
      %v2076 = vunpack.c.l.b16 %v1597
      %v2077 = vunpack.c.h.b16 %v1597
      %v2078 = vpack.c.b16 %v2064, %v2062
      %v2079 = vpack.c.b16 %v2065, %v2063
      %v2080 = vpack.c.b16 %v2068, %v2066
      %v2081 = vpack.c.b16 %v2069, %v2067
      %v2082 = vpack.c.b16 %v2072, %v2070
      %v2083 = vpack.c.b16 %v2073, %v2071
      %v2084 = vpack.c.b16 %v2076, %v2074
      %v2085 = vpack.c.b16 %v2077, %v2075
      %v2095 = vsel %vm774, %v2042, 0
      %2097 = vmatprep.subr.bf16.mxu0 %v2079
      %2098 = vmatpush1.bf16.msra.mxu0 %v2078
      %2099 = vmatprep.subr.bf16.mxu0 %v2081
      %2100 = vmatpush1.bf16.msra.mxu0 %v2080
      %2101 = vmatprep.subr.bf16.mxu0 %v2083
      %2102 = vmatpush1.bf16.msra.mxu0 %v2082
      %2103 = vmatprep.subr.bf16.mxu0 %v2085
      %2104 = vmatpush1.bf16.msra.mxu0 %v2084
      %2105 = vmatprep.subr.bf16.mxu0 0
      %2106 = vmatpush1.bf16.msra.mxu0 0
      %2107 = vmatprep.subr.bf16.mxu0 0
      %2108 = vmatpush1.bf16.msra.mxu0 0
      %2109 = vmatprep.subr.bf16.mxu0 0
      %2110 = vmatpush1.bf16.msra.mxu0 0
      %2111 = vmatprep.subr.bf16.mxu0 0
      %2112 = vmatpush1.bf16.msra.mxu0 0
      %2113 = vmatprep.subr.bf16.mxu0 0
      %2114 = vmatpush1.bf16.msra.mxu0 0
      %2115 = vmatprep.subr.bf16.mxu0 0
      %2116 = vmatpush1.bf16.msra.mxu0 0
      %2117 = vmatprep.subr.bf16.mxu0 0
      %2118 = vmatpush1.bf16.msra.mxu0 0
      %2119 = vmatprep.subr.bf16.mxu0 0
      %2120 = vmatpush1.bf16.msra.mxu0 0
      %2121 = vmatprep.subr.bf16.mxu0 0
      %2122 = vmatpush1.bf16.msra.mxu0 0
      %2123 = vmatprep.subr.bf16.mxu0 0
      %2124 = vmatpush1.bf16.msra.mxu0 0
      %2125 = vmatprep.subr.bf16.mxu0 0
      %2126 = vmatpush1.bf16.msra.mxu0 0
      %2127 = vmatprep.subr.bf16.mxu0 0
      %2128 = vmatpush1.bf16.msra.mxu0 0
      %2129 = vmatprep.mubr.bf16.mxu0 0
      %2130 = vmatmul.mubr.bf16.gmra.mrb[0].mxu0 %v2095
      %v2131 = vpop.f32.mrb[0].mxu0
      %v2132 = vadd.f32 %v2047, %v2131
      %v2133 = vpop.f32.mrb[0].mxu0
      %v2134 = vadd.f32 %v2051, %v2133
      %v2135 = vpop.f32.mrb[0].mxu0
      %v2136 = vpop.f32.mrb[0].mxu0
      %2137 = vdwg.mxu0
      %v2138 = vmul.f32 %v2132, 0.5
      %v2139 = vmul.f32 %v2134, 0.5
      %v2140 = vmul.f32 %v2132, 0.044715
      %v2141 = vmul.f32 %v2134, 0.044715
      %v2142 = vmul.f32 %v2140, %v2132
      %v2143 = vmul.f32 %v2141, %v2134
      %v2144 = vmul.f32 %v2142, %v2132
      %v2145 = vmul.f32 %v2143, %v2134
      %v2146 = vadd.f32 %v2132, %v2144
      %v2147 = vadd.f32 %v2134, %v2145
      %v2148 = vmul.f32 %v2146, 0.7978846
      %v2149 = vmul.f32 %v2147, 0.7978846
      %v2150 = vtanh.pop %v2148
      %v2151 = vtanh.pop %v2149
      %v2152 = vadd.f32 %v2150, 1.0
      %v2153 = vadd.f32 %v2151, 1.0
      %v2154 = vmul.f32 %v2138, %v2152
      %v2155 = vmul.f32 %v2139, %v2153
      %v2156 = vpack.c.bf16 %v2154, %v2154
      %v2157 = vpack.c.bf16 %v2155, %v2155
      %v2159 = vlaneseq
      %v2160 = vshrl.u32 %v2159, 7
      %v2161 = vsub.s32 0, %v2160
      %v2162 = vrot.slane %v1634, %v2161
      %v2196 = vunpack.c.l.b16 %v1601
      %v2197 = vunpack.c.l.b16 %v1602
      %v2198 = vunpack.c.l.b16 %v1603
      %v2199 = vunpack.c.l.b16 %v1604
      %v2200 = vunpack.c.l.b16 %v1605
      %v2201 = vunpack.c.l.b16 %v1606
      %v2202 = vunpack.c.l.b16 %v1607
      %v2203 = vunpack.c.l.b16 %v1608
      %v2204 = vunpack.c.l.b16 %v1609
      %v2205 = vunpack.c.l.b16 %v1610
      %v2206 = vunpack.c.l.b16 %v1611
      %v2207 = vunpack.c.l.b16 %v1612
      %v2208 = vunpack.c.l.b16 %v1613
      %v2209 = vunpack.c.l.b16 %v1614
      %v2210 = vunpack.c.l.b16 %v1615
      %v2211 = vunpack.c.l.b16 %v1616
      %v2212 = vunpack.c.l.b16 %v1617
      %v2213 = vunpack.c.l.b16 %v1618
      %v2214 = vunpack.c.l.b16 %v1619
      %v2215 = vunpack.c.l.b16 %v1620
      %v2216 = vunpack.c.l.b16 %v1621
      %v2217 = vunpack.c.l.b16 %v1622
      %v2218 = vunpack.c.l.b16 %v1623
      %v2219 = vunpack.c.l.b16 %v1624
      %v2220 = vunpack.c.l.b16 %v1625
      %v2221 = vunpack.c.l.b16 %v1626
      %v2222 = vunpack.c.l.b16 %v1627
      %v2223 = vunpack.c.l.b16 %v1628
      %v2224 = vunpack.c.l.b16 %v1629
      %v2225 = vunpack.c.l.b16 %v1630
      %v2226 = vunpack.c.l.b16 %v1631
      %v2227 = vunpack.c.l.b16 %v1632
      %v2228 = vpack.c.b16 %v2197, %v2196
      %v2229 = vpack.c.b16 %v2199, %v2198
      %v2230 = vpack.c.b16 %v2201, %v2200
      %v2231 = vpack.c.b16 %v2203, %v2202
      %v2232 = vpack.c.b16 %v2205, %v2204
      %v2233 = vpack.c.b16 %v2207, %v2206
      %v2234 = vpack.c.b16 %v2209, %v2208
      %v2235 = vpack.c.b16 %v2211, %v2210
      %v2236 = vpack.c.b16 %v2213, %v2212
      %v2237 = vpack.c.b16 %v2215, %v2214
      %v2238 = vpack.c.b16 %v2217, %v2216
      %v2239 = vpack.c.b16 %v2219, %v2218
      %v2240 = vpack.c.b16 %v2221, %v2220
      %v2241 = vpack.c.b16 %v2223, %v2222
      %v2242 = vpack.c.b16 %v2225, %v2224
      %v2243 = vpack.c.b16 %v2227, %v2226
      %2260 = vmatprep.subr.bf16.mxu0 0
      %2261 = vmatpush1.bf16.msra.mxu0 %v2228
      %2262 = vmatprep.subr.bf16.mxu0 0
      %2263 = vmatpush1.bf16.msra.mxu0 %v2229
      %2264 = vmatprep.subr.bf16.mxu0 0
      %2265 = vmatpush1.bf16.msra.mxu0 %v2230
      %2266 = vmatprep.subr.bf16.mxu0 0
      %2267 = vmatpush1.bf16.msra.mxu0 %v2231
      %2268 = vmatprep.subr.bf16.mxu0 0
      %2269 = vmatpush1.bf16.msra.mxu0 %v2232
      %2270 = vmatprep.subr.bf16.mxu0 0
      %2271 = vmatpush1.bf16.msra.mxu0 %v2233
      %2272 = vmatprep.subr.bf16.mxu0 0
      %2273 = vmatpush1.bf16.msra.mxu0 %v2234
      %2274 = vmatprep.subr.bf16.mxu0 0
      %2275 = vmatpush1.bf16.msra.mxu0 %v2235
      %2276 = vmatprep.subr.bf16.mxu0 0
      %2277 = vmatpush1.bf16.msra.mxu0 %v2236
      %2278 = vmatprep.subr.bf16.mxu0 0
      %2279 = vmatpush1.bf16.msra.mxu0 %v2237
      %2280 = vmatprep.subr.bf16.mxu0 0
      %2281 = vmatpush1.bf16.msra.mxu0 %v2238
      %2282 = vmatprep.subr.bf16.mxu0 0
      %2283 = vmatpush1.bf16.msra.mxu0 %v2239
      %2284 = vmatprep.subr.bf16.mxu0 0
      %2285 = vmatpush1.bf16.msra.mxu0 %v2240
      %2286 = vmatprep.subr.bf16.mxu0 0
      %2287 = vmatpush1.bf16.msra.mxu0 %v2241
      %2288 = vmatprep.subr.bf16.mxu0 0
      %2289 = vmatpush1.bf16.msra.mxu0 %v2242
      %2290 = vmatprep.subr.bf16.mxu0 0
      %2291 = vmatpush1.bf16.msra.mxu0 %v2243
      %2292 = vmatprep.mubr.bf16.mxu0 %v2157
      %2293 = vmatmul.mubr.bf16.gmra.mrb[0].mxu0 %v2156
      %v2294 = vpop.f32.mrb[0].mxu0
      %v2295 = vadd.f32 %v2162, %v2294
      %v2296 = vpop.f32.mrb[0].mxu0
      %v2297 = vpop.f32.mrb[0].mxu0
      %v2298 = vpop.f32.mrb[0].mxu0
      %2299 = vdwg.mxu0
      %v2300 = vadd.f32 %v2014, %v2295
      %v2301 = vld [vmem:[%s17] sm:$0x1]
      %v2302 = vld [vmem:[%s18] sm:$0x1]
      %v2303 = vsel %vm774, %v2300, 0.0
      %2304 = vadd.xlane.f32.xlu0 %v2303
      %v2305 = vpop.xlane.xlu0 %2304
      %v2306 = vmul.f32 %v2305, %v893
      %v2307 = vsub.f32 %v2300, %v2306
      %v2308 = vmul.f32 %v2307, %v2307
      %v2309 = vsel %vm774, %v2308, 0.0
      %2310 = vadd.xlane.f32.xlu0 %v2309
      %v2311 = vpop.xlane.xlu0 %2310
      %v2312 = vmul.f32 %v2311, %v893
      %v2313 = vadd.f32 %v2312, 1e-06
      %v2314 = vrsqrt.pop %v2313
      %v2315 = vmul.f32 %v2307, %v2314
      %v2317 = vlaneseq
      %v2318 = vshrl.u32 %v2317, 7
      %v2319 = vsub.s32 0, %v2318
      %v2320 = vrot.slane %v2301, %v2319
      %v2322 = vmul.f32 %v2315, %v2320
      %v2324 = vlaneseq
      %v2325 = vshrl.u32 %v2324, 7
      %v2326 = vsub.s32 0, %v2325
      %v2327 = vrot.slane %v2302, %v2326
      %v2329 = vadd.f32 %v2322, %v2327
      %v2330 = vpack.c.bf16 %v2329, %v2329
      %v2331 = vld [vmem:[%s19] sm:$0xf]
      %v2332 = vld [vmem:[%s19 + $0x4] sm:$0xf]
      %v2333 = vld [vmem:[%s19 + $0x8] sm:$0xf]
      %v2334 = vld [vmem:[%s19 + $0xc] sm:$0xf]
      %v2335 = vld [vmem:[%s19 + $0x10] sm:$0xf]
      %v2336 = vld [vmem:[%s19 + $0x14] sm:$0xf]
      %v2337 = vld [vmem:[%s19 + $0x18] sm:$0xf]
      %v2338 = vld [vmem:[%s19 + $0x1c] sm:$0xf]
      %v2339 = vld [vmem:[%s20] sm:$0x1]
      %v2341 = vlaneseq
      %v2342 = vshrl.u32 %v2341, 7
      %v2343 = vsub.s32 0, %v2342
      %v2344 = vrot.slane %v2339, %v2343
      %v2354 = vunpack.c.l.b16 %v2331
      %v2355 = vunpack.c.l.b16 %v2332
      %v2356 = vunpack.c.l.b16 %v2333
      %v2357 = vunpack.c.l.b16 %v2334
      %v2358 = vunpack.c.l.b16 %v2335
      %v2359 = vunpack.c.l.b16 %v2336
      %v2360 = vunpack.c.l.b16 %v2337
      %v2361 = vunpack.c.l.b16 %v2338
      %v2362 = vpack.c.b16 %v2355, %v2354
      %v2363 = vpack.c.b16 %v2357, %v2356
      %v2364 = vpack.c.b16 %v2359, %v2358
      %v2365 = vpack.c.b16 %v2361, %v2360
      %v2371 = vsel %vm774, %v2330, 0
      %2373 = vmatprep.subr.bf16.mxu0 0
      %2374 = vmatpush1.bf16.msra.mxu0 %v2362
      %2375 = vmatprep.subr.bf16.mxu0 0
      %2376 = vmatpush1.bf16.msra.mxu0 %v2363
      %2377 = vmatprep.subr.bf16.mxu0 0
      %2378 = vmatpush1.bf16.msra.mxu0 %v2364
      %2379 = vmatprep.subr.bf16.mxu0 0
      %2380 = vmatpush1.bf16.msra.mxu0 %v2365
      %2381 = vmatprep.subr.bf16.mxu0 0
      %2382 = vmatpush1.bf16.msra.mxu0 0
      %2383 = vmatprep.subr.bf16.mxu0 0
      %2384 = vmatpush1.bf16.msra.mxu0 0
      %2385 = vmatprep.subr.bf16.mxu0 0
      %2386 = vmatpush1.bf16.msra.mxu0 0
      %2387 = vmatprep.subr.bf16.mxu0 0
      %2388 = vmatpush1.bf16.msra.mxu0 0
      %2389 = vmatprep.subr.bf16.mxu0 0
      %2390 = vmatpush1.bf16.msra.mxu0 0
      %2391 = vmatprep.subr.bf16.mxu0 0
      %2392 = vmatpush1.bf16.msra.mxu0 0
      %2393 = vmatprep.subr.bf16.mxu0 0
      %2394 = vmatpush1.bf16.msra.mxu0 0
      %2395 = vmatprep.subr.bf16.mxu0 0
      %2396 = vmatpush1.bf16.msra.mxu0 0
      %2397 = vmatprep.subr.bf16.mxu0 0
      %2398 = vmatpush1.bf16.msra.mxu0 0
      %2399 = vmatprep.subr.bf16.mxu0 0
      %2400 = vmatpush1.bf16.msra.mxu0 0
      %2401 = vmatprep.subr.bf16.mxu0 0
      %2402 = vmatpush1.bf16.msra.mxu0 0
      %2403 = vmatprep.subr.bf16.mxu0 0
      %2404 = vmatpush1.bf16.msra.mxu0 0
      %2405 = vmatprep.mubr.bf16.mxu0 0
      %2406 = vmatmul.mubr.bf16.gmra.mrb[0].mxu0 %v2371
      %v2407 = vpop.f32.mrb[0].mxu0
      %v2408 = vadd.f32 %v2344, %v2407
      %v2409 = vpop.f32.mrb[0].mxu0
      %v2410 = vpop.f32.mrb[0].mxu0
      %v2411 = vpop.f32.mrb[0].mxu0
      %2412 = vdwg.mxu0
      %2413 = vst [vmem:[%s671] sm:$0xff] %v2408
      %p2414 = scmp.lt.s32.totalorder %s32, 1
      %s2415 = scalar_select %p2414, %s32, 1
      %s2416 = smul.addr %s2415, 8
      %s2417 = scalar_lea.vmem %s21, %s2416
      // Predicated region
      $region105: #{mae_forward.2} parent=103 // pred_check
        %p2418 = pneg %p501
      $region106: #{mae_forward.2} parent=103 // pred_check_branch
        %2420 = sbr.rel (%p2418) target = $region108
      $region107: #{mae_forward.2} parent=103 // pred_region
        _
      $region108: #{mae_forward.2} parent=103 // pred_fallthru
        _
    $region104: #{mae_forward.2} parent=5 // pred_fallthru
      _
    %p2421 = scmp.le.s32.totalorder 2, %s27
    // Predicated region
    $region109: #{mae_forward.2} parent=5 // pred_check
      %p2422 = pneg %p2421
    $region110: #{mae_forward.2} parent=5 // pred_check_branch
      %2424 = sbr.rel (%p2422) target = $region112
    $region111: #{mae_forward.2} parent=5 // pred_region
      %s2425 = ssub.s32 %s27, 2
      // Predicated region
      $region113: #{mae_forward.2} parent=111 // pred_check
        %p2426 = pneg %p507
      $region114: #{mae_forward.2} parent=111 // pred_check_branch
        %2428 = sbr.rel (%p2426) target = $region116
      $region115: #{mae_forward.2} parent=111 // pred_region
        %p2429 = scmp.lt.s32.totalorder %s33, 1
        %s2430 = scalar_select %p2429, %s33, 1
        %s2431 = smul.addr %s2430, 8
        %s2432 = scalar_lea.vmem %s21, %s2431
      $region116: #{mae_forward.2} parent=111 // pred_fallthru
        _
    $region112: #{mae_forward.2} parent=5 // pred_fallthru
      _
  $region6: #{mae_forward.2} parent=0 // loop_footer
    %s31 = sadd.s32 1, %s27
  $region7: #{mae_forward.2} parent=0 // loop_footer_branch
    %26 = sbr.rel target = $region3
  $region8: #{mae_forward.2} parent=0 // loop_exit
    _

</llo_original>
